<compile_context>
chip_gen: v7x
topology: tpu7x:2x2x1
jax: 0.10.0
libtpu: 0.0.40
codegen_flags: <defaults>
</compile_context>

<pallas_src>
import functools

import jax
import jax.numpy as jnp
from jax.experimental import pallas as pl
from jax.experimental.pallas import tpu as pltpu


def _round_up(x, m):
    return ((x + m - 1) // m) * m


_VMEM_LIMIT = 32 * 1024 * 1024  # safe on v5e/v6e (128 MiB) and v7x (64 MiB physical)


# --------------------------------------------------------------------------------------
# Pallas kernels
# --------------------------------------------------------------------------------------

def _matmul_bias_act_kernel(a_ref, w_ref, b_ref, o_ref, acc_ref, *, act_slope):
    """Tiled (tm,tk)@(tk,tn) matmul, f32 accumulator, bias+LeakyReLU on K-finalize."""
    k = pl.program_id(2)

    @pl.when(k == 0)
    def _():
        acc_ref[...] = jnp.zeros_like(acc_ref)

    acc_ref[...] += jnp.dot(a_ref[...], w_ref[...],
                            preferred_element_type=jnp.float32)

    @pl.when(k == pl.num_programs(2) - 1)
    def _():
        out = acc_ref[...] + b_ref[...]                  # (1, tn) f32 broadcast, once
        if act_slope is not None:                        # LeakyReLU in f32 (v5e-safe)
            out = jnp.where(out >= 0.0, out, act_slope * out)
        o_ref[...] = out.astype(o_ref.dtype)


def _bn_stats_kernel(x_ref, sum_ref, sq_ref):
    """Accumulate per-channel sum and sum-of-squares over M tiles (f32)."""
    @pl.when(pl.program_id(0) == 0)
    def _():
        sum_ref[...] = jnp.zeros_like(sum_ref)
        sq_ref[...] = jnp.zeros_like(sq_ref)

    x = x_ref[...].astype(jnp.float32)
    sum_ref[...] += jnp.sum(x, axis=0, keepdims=True)
    sq_ref[...] += jnp.sum(x * x, axis=0, keepdims=True)


def _scale_shift_lrelu_kernel(x_ref, sc_ref, sh_ref, o_ref, *, slope):
    """y = x*scale + shift, then LeakyReLU; all epilogue math in f32."""
    y = x_ref[...].astype(jnp.float32) * sc_ref[...] + sh_ref[...]
    y = jnp.where(y >= 0.0, y, slope * y)
    o_ref[...] = y.astype(o_ref.dtype)


# --------------------------------------------------------------------------------------
# Matmul wrapper (padding + tiling)
# --------------------------------------------------------------------------------------

def _matmul_pallas(a, w, bias, *, act_slope, out_dtype):
    """a:(M,K) @ w:(K,Cout) + bias, optional LeakyReLU. Returns padded (Mp, Np)."""
    m, k = a.shape
    _, cout = w.shape

    tk = min(512, _round_up(k, 128))
    tn = min(256, _round_up(cout, 128))
    tm = min(512, _round_up(m, 8))
    kp, np_, mp = _round_up(k, tk), _round_up(cout, tn), _round_up(m, tm)

    a_p = jnp.pad(a.astype(jnp.bfloat16), ((0, mp - m), (0, kp - k)))
    w_p = jnp.pad(w.astype(jnp.bfloat16), ((0, kp - k), (0, np_ - cout)))
    b_p = jnp.pad(bias.astype(jnp.float32), (0, np_ - cout)).reshape(1, np_)

    grid = (mp // tm, np_ // tn, kp // tk)
    out_itemsize = jnp.dtype(out_dtype).itemsize
    cost = pl.CostEstimate(
        flops=2 * mp * kp * np_,
        transcendentals=0,
        bytes_accessed=a_p.size * 2 + w_p.size * 2 + b_p.size * 4 + mp * np_ * out_itemsize,
    )

    out = pl.pallas_call(
        functools.partial(_matmul_bias_act_kernel, act_slope=act_slope),
        out_shape=jax.ShapeDtypeStruct((mp, np_), out_dtype),
        grid=grid,
        in_specs=[
            pl.BlockSpec((tm, tk), lambda i, j, kk: (i, kk)),
            pl.BlockSpec((tk, tn), lambda i, j, kk: (kk, j)),
            pl.BlockSpec((1, tn), lambda i, j, kk: (0, j)),
        ],
        out_specs=pl.BlockSpec((tm, tn), lambda i, j, kk: (i, j)),
        scratch_shapes=[pltpu.VMEM((tm, tn), jnp.float32)],
        compiler_params=pltpu.CompilerParams(
            dimension_semantics=("parallel", "parallel", "arbitrary"),
            vmem_limit_bytes=_VMEM_LIMIT,
        ),
        cost_estimate=cost,
    )(a_p, w_p, b_p)
    return out  # (Mp, Np) padded; padded rows/cols are exact zeros when bias/act absent


# --------------------------------------------------------------------------------------
# Conv2d = im2col (XLA glue, NHWC) + Pallas matmul
# --------------------------------------------------------------------------------------

def _im2col_nhwc(x_nhwc, kh, kw, stride, pad):
    x = jnp.pad(x_nhwc, ((0, 0), (pad, pad), (pad, pad), (0, 0)))
    n, h, w, c = x.shape
    ho = (h - kh) // stride + 1
    wo = (w - kw) // stride + 1
    if ho <= 0 or wo <= 0:
        raise ValueError(
            f"conv output is empty (ho={ho}, wo={wo}); input spatial size too small "
            f"for kernel={kh}x{kw}, stride={stride}, pad={pad}.")
    cols = []
    for i in range(kh):
        for j in range(kw):
            cols.append(
                x[:, i: i + (ho - 1) * stride + 1: stride,
                     j: j + (wo - 1) * stride + 1: stride, :])
    patches = jnp.concatenate(cols, axis=-1)            # (N, Ho, Wo, kh*kw*C)
    return patches.reshape(n * ho * wo, kh * kw * c), (n, ho, wo)


def conv2d_nhwc(x_nhwc, w_oihw, bias, *, stride, pad, act_slope, out_dtype):
    """Conv2d with PyTorch-layout weights (Cout,Cin,KH,KW) on an NHWC input.

    Returns the channel/row padded (Mp, Np) slab plus true (n, ho, wo, cout)."""
    cout, cin, kh, kw = w_oihw.shape
    a, (n, ho, wo) = _im2col_nhwc(x_nhwc, kh, kw, stride, pad)
    wm = jnp.transpose(w_oihw, (2, 3, 1, 0)).reshape(kh * kw * cin, cout)
    if bias is None:
        bias = jnp.zeros((cout,), jnp.float32)
    out_p = _matmul_pallas(a, wm, bias, act_slope=act_slope, out_dtype=out_dtype)
    return out_p, (n, ho, wo, cout)


# --------------------------------------------------------------------------------------
# BatchNorm2d (batch statistics, biased variance) + LeakyReLU on padded (Mp, Cp) slab
# --------------------------------------------------------------------------------------

def batchnorm_lrelu_padded(y_p, true_m, true_c, gamma, beta, *, eps=1e-5, slope=0.2):
    """Two-pass tiled BN. Padded rows/channels of y_p must be exact zeros (they are,
    since the mid convs have no bias and no activation), so they do not perturb the
    sums; we divide by the true element count."""
    mp, cp = y_p.shape
    tm = min(512, mp)            # mp is either < 512 or a multiple of 512 by construction
    grid = (mp // tm,)

    s, sq = pl.pallas_call(
        _bn_stats_kernel,
        out_shape=(jax.ShapeDtypeStruct((1, cp), jnp.float32),
                   jax.ShapeDtypeStruct((1, cp), jnp.float32)),
        grid=grid,
        in_specs=[pl.BlockSpec((tm, cp), lambda i: (i, 0))],
        out_specs=(pl.BlockSpec((1, cp), lambda i: (0, 0)),
                   pl.BlockSpec((1, cp), lambda i: (0, 0))),
        compiler_params=pltpu.CompilerParams(
            dimension_semantics=("arbitrary",),
            vmem_limit_bytes=_VMEM_LIMIT,
        ),
    )(y_p)

    inv_m = 1.0 / float(true_m)
    mean = s * inv_m
    var = jnp.maximum(sq * inv_m - mean * mean, 0.0)      # biased variance (PyTorch BN)
    g = jnp.pad(gamma.astype(jnp.float32), (0, cp - true_c),
                constant_values=1.0).reshape(1, cp)
    b = jnp.pad(beta.astype(jnp.float32), (0, cp - true_c)).reshape(1, cp)
    scale = g * jax.lax.rsqrt(var + eps)
    shift = b - mean * scale

    out = pl.pallas_call(
        functools.partial(_scale_shift_lrelu_kernel, slope=slope),
        out_shape=jax.ShapeDtypeStruct((mp, cp), y_p.dtype),
        grid=grid,
        in_specs=[pl.BlockSpec((tm, cp), lambda i: (i, 0)),
                  pl.BlockSpec((1, cp), lambda i: (0, 0)),
                  pl.BlockSpec((1, cp), lambda i: (0, 0))],
        out_specs=pl.BlockSpec((tm, cp), lambda i: (i, 0)),
        compiler_params=pltpu.CompilerParams(
            dimension_semantics=("parallel",),
            vmem_limit_bytes=_VMEM_LIMIT,
        ),
    )(y_p, scale, shift)
    return out


# --------------------------------------------------------------------------------------
# NLayerDiscriminator: parameter construction + forward
# --------------------------------------------------------------------------------------

def init_nlayer_discriminator_params(key, input_nc, ndf=64, n_layers=3):
    """Synthetic init (conv W ~ N(0, 0.02), bias 0, BN gamma=1, beta=0).
    norm_layer = BatchNorm2d => use_bias=False for the intermediate convs."""
    kw = 4
    params = []
    keys = jax.random.split(key, n_layers + 2)
    ki = 0

    def conv_w(k, cin, cout):
        return 0.02 * jax.random.normal(k, (cout, cin, kw, kw), jnp.float32)

    # first conv: bias=True, stride 2, LeakyReLU
    params.append(dict(kind="first", stride=2,
                       w=conv_w(keys[ki], input_nc, ndf),
                       b=jnp.zeros((ndf,), jnp.float32)))
    ki += 1

    nf_mult = 1
    for n in range(1, n_layers):
        nf_mult_prev, nf_mult = nf_mult, min(2 ** n, 8)
        cin, cout = ndf * nf_mult_prev, ndf * nf_mult
        params.append(dict(kind="mid", stride=2,
                           w=conv_w(keys[ki], cin, cout),
                           gamma=jnp.ones((cout,), jnp.float32),
                           beta=jnp.zeros((cout,), jnp.float32)))
        ki += 1

    nf_mult_prev, nf_mult = nf_mult, min(2 ** n_layers, 8)
    cin, cout = ndf * nf_mult_prev, ndf * nf_mult
    params.append(dict(kind="mid", stride=1,
                       w=conv_w(keys[ki], cin, cout),
                       gamma=jnp.ones((cout,), jnp.float32),
                       beta=jnp.zeros((cout,), jnp.float32)))
    ki += 1

    # last conv: -> 1 channel, bias=True, stride 1, no activation (use_sigmoid=False)
    params.append(dict(kind="last", stride=1,
                       w=conv_w(keys[ki], cout, 1),
                       b=jnp.zeros((1,), jnp.float32)))
    return params


def nlayer_discriminator_forward(params, x_nchw):
    # single NCHW->NHWC transpose at entry; everything stays channel-last after that
    x = jnp.transpose(x_nchw, (0, 2, 3, 1)).astype(jnp.float32)

    for idx, p in enumerate(params):
        is_last = idx == len(params) - 1
        if p["kind"] == "first":
            out_p, (n, ho, wo, c) = conv2d_nhwc(
                x, p["w"], p["b"], stride=p["stride"], pad=1,
                act_slope=0.2, out_dtype=jnp.bfloat16)
        elif p["kind"] == "mid":
            out_p, (n, ho, wo, c) = conv2d_nhwc(
                x, p["w"], None, stride=p["stride"], pad=1,
                act_slope=None, out_dtype=jnp.bfloat16)
            out_p = batchnorm_lrelu_padded(out_p, n * ho * wo, c,
                                           p["gamma"], p["beta"])
        else:  # "last"
            out_p, (n, ho, wo, c) = conv2d_nhwc(
                x, p["w"], p["b"], stride=p["stride"], pad=1,
                act_slope=None, out_dtype=jnp.float32)
        # strip M/C padding and restore NHWC for the next layer (or the final output)
        x = out_p[: n * ho * wo, :c].reshape(n, ho, wo, c)

    return jnp.transpose(x, (0, 3, 1, 2))  # NCHW out


# --------------------------------------------------------------------------------------
# Demo
# --------------------------------------------------------------------------------------

if __name__ == "__main__":
    key = jax.random.PRNGKey(0)
    k_in, k_par = jax.random.split(key)

    # Smallest valid config for the default 3-layer PatchGAN: 32x32 spatial.
    # (16x16 would shrink to a 0-sized map at the final 4x4/stride-1 conv.)
    input_nc, ndf, n_layers = 4, 8, 3
    x = jax.random.normal(k_in, (2, input_nc, 32, 32), jnp.float32)   # NCHW

    params = init_nlayer_discriminator_params(k_par, input_nc, ndf=ndf, n_layers=n_layers)

    fwd = jax.jit(functools.partial(nlayer_discriminator_forward, params))
    out = jax.block_until_ready(fwd(x))

    # 32 -s2-> 16 -s2-> 8 -s2-> 4 -s1-> 3 -s1-> 2  => (2, 1, 2, 2)
    assert out.shape == (2, 1, 2, 2), out.shape
    assert bool(jnp.all(jnp.isfinite(out)))
    print("KERNEL_OK")
</pallas_src>

<mosaic_0001>
module attributes {stable_mosaic.version = 11 : i64} {
  func.func @_matmul_bias_act_kernel(%arg0: i32, %arg1: i32, %arg2: i32, %arg3: memref<512x128xbf16, #tpu.memory_space<vmem>>, %arg4: memref<128x128xbf16, #tpu.memory_space<vmem>>, %arg5: memref<1x128xf32, #tpu.memory_space<vmem>>, %arg6: memref<512x128xbf16, #tpu.memory_space<vmem>>, %arg7: memref<512x128xf32, #tpu.memory_space<vmem>>) attributes {dimension_semantics = [#tpu.dimension_semantics<parallel>, #tpu.dimension_semantics<parallel>, #tpu.dimension_semantics<arbitrary>], iteration_bounds = array<i64: 1, 1, 1>, scalar_prefetch = 0 : i64, scratch_operands = 1 : i64, tpu.core_type = #tpu.core_type<tc>, window_params = [{transform_indices = @transform_0, window_bounds = array<i64: 512, 128>}, {transform_indices = @transform_1, window_bounds = array<i64: 128, 128>}, {transform_indices = @transform_2, window_bounds = array<i64: 1, 128>}, {transform_indices = @transform_3, window_bounds = array<i64: 512, 128>}]} {
    %c0_i32 = arith.constant 0 : i32
    %0 = arith.cmpi eq, %arg2, %c0_i32 : i32
    %1 = arith.extui %0 : i1 to i32
    %c0_i32_0 = arith.constant 0 : i32
    %2 = arith.cmpi ne, %1, %c0_i32_0 : i32
    scf.if %2 {
      %cst_10 = arith.constant 0.000000e+00 : f32
      %12 = vector.broadcast %cst_10 : f32 to vector<512x128xf32>
      %c0_11 = arith.constant 0 : index
      %c0_12 = arith.constant 0 : index
      %13 = vector.load %arg7[%c0_11, %c0_12] : memref<512x128xf32, #tpu.memory_space<vmem>>, vector<512x128xf32>
      tpu.vector_store %arg7[%c0_11, %c0_12], %12 {strides = array<i32>} : memref<512x128xf32, #tpu.memory_space<vmem>>, vector<512x128xf32>,
    } else {
    }
    %c0 = arith.constant 0 : index
    %c0_1 = arith.constant 0 : index
    %3 = vector.load %arg7[%c0, %c0_1] : memref<512x128xf32, #tpu.memory_space<vmem>>, vector<512x128xf32>
    %c0_2 = arith.constant 0 : index
    %c0_3 = arith.constant 0 : index
    %4 = vector.load %arg3[%c0_2, %c0_3] : memref<512x128xbf16, #tpu.memory_space<vmem>>, vector<512x128xbf16>
    %c0_4 = arith.constant 0 : index
    %c0_5 = arith.constant 0 : index
    %5 = vector.load %arg4[%c0_4, %c0_5] : memref<128x128xbf16, #tpu.memory_space<vmem>>, vector<128x128xbf16>
    %cst = arith.constant dense<0.000000e+00> : vector<512x128xf32>
    %6 = tpu.matmul %4, %5, %cst {dimension_numbers = #tpu.dot_dimension_numbers<[1], [0], [0], [1], [0, 0, 1, 1], [], []>} : vector<512x128xbf16>, vector<128x128xbf16>, vector<512x128xf32> -> vector<512x128xf32>
    %7 = arith.addf %3, %6 : vector<512x128xf32>
    %c0_6 = arith.constant 0 : index
    %c0_7 = arith.constant 0 : index
    %8 = vector.load %arg7[%c0_6, %c0_7] : memref<512x128xf32, #tpu.memory_space<vmem>>, vector<512x128xf32>
    tpu.vector_store %arg7[%c0_6, %c0_7], %7 {strides = array<i32>} : memref<512x128xf32, #tpu.memory_space<vmem>>, vector<512x128xf32>,
    %c0_i32_8 = arith.constant 0 : i32
    %9 = arith.cmpi eq, %arg2, %c0_i32_8 : i32
    %10 = arith.extui %9 : i1 to i32
    %c0_i32_9 = arith.constant 0 : i32
    %11 = arith.cmpi ne, %10, %c0_i32_9 : i32
    scf.if %11 {
      %c0_10 = arith.constant 0 : index
      %c0_11 = arith.constant 0 : index
      %12 = vector.load %arg7[%c0_10, %c0_11] : memref<512x128xf32, #tpu.memory_space<vmem>>, vector<512x128xf32>
      %c0_12 = arith.constant 0 : index
      %c0_13 = arith.constant 0 : index
      %13 = vector.load %arg5[%c0_12, %c0_13] : memref<1x128xf32, #tpu.memory_space<vmem>>, vector<1x128xf32>
      %14 = vector.broadcast %13 : vector<1x128xf32> to vector<512x128xf32>
      %15 = arith.addf %12, %14 : vector<512x128xf32>
      %cst_14 = arith.constant 0.000000e+00 : f32
      %16 = vector.broadcast %cst_14 : f32 to vector<512x128xf32>
      %17 = arith.cmpf oge, %15, %16 : vector<512x128xf32>
      %cst_15 = arith.constant 2.000000e-01 : f32
      %18 = vector.broadcast %cst_15 : f32 to vector<512x128xf32>
      %19 = arith.mulf %18, %15 : vector<512x128xf32>
      %20 = arith.select %17, %15, %19 : vector<512x128xi1>, vector<512x128xf32>
      %21 = arith.truncf %20 : vector<512x128xf32> to vector<512x128xbf16>
      %c0_16 = arith.constant 0 : index
      %c0_17 = arith.constant 0 : index
      %22 = vector.load %arg6[%c0_16, %c0_17] : memref<512x128xbf16, #tpu.memory_space<vmem>>, vector<512x128xbf16>
      tpu.vector_store %arg6[%c0_16, %c0_17], %21 {strides = array<i32>} : memref<512x128xbf16, #tpu.memory_space<vmem>>, vector<512x128xbf16>,
    } else {
    }
    return
  }
  func.func @transform_0(%arg0: i32, %arg1: i32, %arg2: i32) -> (i32, i32) {
    %c0_i32 = arith.constant 0 : i32
    return %arg0, %arg2 : i32, i32
  }
  func.func @transform_1(%arg0: i32, %arg1: i32, %arg2: i32) -> (i32, i32) {
    %c0_i32 = arith.constant 0 : i32
    return %arg2, %arg1 : i32, i32
  }
  func.func @transform_2(%arg0: i32, %arg1: i32, %arg2: i32) -> (i32, i32) {
    %c0_i32 = arith.constant 0 : i32
    %c0_i32_0 = arith.constant 0 : i32
    return %c0_i32, %arg1 : i32, i32
  }
  func.func @transform_3(%arg0: i32, %arg1: i32, %arg2: i32) -> (i32, i32) {
    %c0_i32 = arith.constant 0 : i32
    return %arg0, %arg1 : i32, i32
  }
}

module attributes {stable_mosaic.version = 11 : i64} {
  func.func @_matmul_bias_act_kernel(%arg0: i32, %arg1: i32, %arg2: i32, %arg3: memref<128x128xbf16, #tpu.memory_space<vmem>>, %arg4: memref<128x128xbf16, #tpu.memory_space<vmem>>, %arg5: memref<1x128xf32, #tpu.memory_space<vmem>>, %arg6: memref<128x128xbf16, #tpu.memory_space<vmem>>, %arg7: memref<128x128xf32, #tpu.memory_space<vmem>>) attributes {dimension_semantics = [#tpu.dimension_semantics<parallel>, #tpu.dimension_semantics<parallel>, #tpu.dimension_semantics<arbitrary>], iteration_bounds = array<i64: 1, 1, 1>, scalar_prefetch = 0 : i64, scratch_operands = 1 : i64, tpu.core_type = #tpu.core_type<tc>, window_params = [{transform_indices = @transform_0, window_bounds = array<i64: 128, 128>}, {transform_indices = @transform_1, window_bounds = array<i64: 128, 128>}, {transform_indices = @transform_2, window_bounds = array<i64: 1, 128>}, {transform_indices = @transform_3, window_bounds = array<i64: 128, 128>}]} {
    %c0_i32 = arith.constant 0 : i32
    %0 = arith.cmpi eq, %arg2, %c0_i32 : i32
    %1 = arith.extui %0 : i1 to i32
    %c0_i32_0 = arith.constant 0 : i32
    %2 = arith.cmpi ne, %1, %c0_i32_0 : i32
    scf.if %2 {
      %cst_10 = arith.constant 0.000000e+00 : f32
      %12 = vector.broadcast %cst_10 : f32 to vector<128x128xf32>
      %c0_11 = arith.constant 0 : index
      %c0_12 = arith.constant 0 : index
      %13 = vector.load %arg7[%c0_11, %c0_12] : memref<128x128xf32, #tpu.memory_space<vmem>>, vector<128x128xf32>
      tpu.vector_store %arg7[%c0_11, %c0_12], %12 {strides = array<i32>} : memref<128x128xf32, #tpu.memory_space<vmem>>, vector<128x128xf32>,
    } else {
    }
    %c0 = arith.constant 0 : index
    %c0_1 = arith.constant 0 : index
    %3 = vector.load %arg7[%c0, %c0_1] : memref<128x128xf32, #tpu.memory_space<vmem>>, vector<128x128xf32>
    %c0_2 = arith.constant 0 : index
    %c0_3 = arith.constant 0 : index
    %4 = vector.load %arg3[%c0_2, %c0_3] : memref<128x128xbf16, #tpu.memory_space<vmem>>, vector<128x128xbf16>
    %c0_4 = arith.constant 0 : index
    %c0_5 = arith.constant 0 : index
    %5 = vector.load %arg4[%c0_4, %c0_5] : memref<128x128xbf16, #tpu.memory_space<vmem>>, vector<128x128xbf16>
    %cst = arith.constant dense<0.000000e+00> : vector<128x128xf32>
    %6 = tpu.matmul %4, %5, %cst {dimension_numbers = #tpu.dot_dimension_numbers<[1], [0], [0], [1], [0, 0, 1, 1], [], []>} : vector<128x128xbf16>, vector<128x128xbf16>, vector<128x128xf32> -> vector<128x128xf32>
    %7 = arith.addf %3, %6 : vector<128x128xf32>
    %c0_6 = arith.constant 0 : index
    %c0_7 = arith.constant 0 : index
    %8 = vector.load %arg7[%c0_6, %c0_7] : memref<128x128xf32, #tpu.memory_space<vmem>>, vector<128x128xf32>
    tpu.vector_store %arg7[%c0_6, %c0_7], %7 {strides = array<i32>} : memref<128x128xf32, #tpu.memory_space<vmem>>, vector<128x128xf32>,
    %c0_i32_8 = arith.constant 0 : i32
    %9 = arith.cmpi eq, %arg2, %c0_i32_8 : i32
    %10 = arith.extui %9 : i1 to i32
    %c0_i32_9 = arith.constant 0 : i32
    %11 = arith.cmpi ne, %10, %c0_i32_9 : i32
    scf.if %11 {
      %c0_10 = arith.constant 0 : index
      %c0_11 = arith.constant 0 : index
      %12 = vector.load %arg7[%c0_10, %c0_11] : memref<128x128xf32, #tpu.memory_space<vmem>>, vector<128x128xf32>
      %c0_12 = arith.constant 0 : index
      %c0_13 = arith.constant 0 : index
      %13 = vector.load %arg5[%c0_12, %c0_13] : memref<1x128xf32, #tpu.memory_space<vmem>>, vector<1x128xf32>
      %14 = vector.broadcast %13 : vector<1x128xf32> to vector<128x128xf32>
      %15 = arith.addf %12, %14 : vector<128x128xf32>
      %16 = arith.truncf %15 : vector<128x128xf32> to vector<128x128xbf16>
      %c0_14 = arith.constant 0 : index
      %c0_15 = arith.constant 0 : index
      %17 = vector.load %arg6[%c0_14, %c0_15] : memref<128x128xbf16, #tpu.memory_space<vmem>>, vector<128x128xbf16>
      tpu.vector_store %arg6[%c0_14, %c0_15], %16 {strides = array<i32>} : memref<128x128xbf16, #tpu.memory_space<vmem>>, vector<128x128xbf16>,
    } else {
    }
    return
  }
  func.func @transform_0(%arg0: i32, %arg1: i32, %arg2: i32) -> (i32, i32) {
    %c0_i32 = arith.constant 0 : i32
    return %arg0, %arg2 : i32, i32
  }
  func.func @transform_1(%arg0: i32, %arg1: i32, %arg2: i32) -> (i32, i32) {
    %c0_i32 = arith.constant 0 : i32
    return %arg2, %arg1 : i32, i32
  }
  func.func @transform_2(%arg0: i32, %arg1: i32, %arg2: i32) -> (i32, i32) {
    %c0_i32 = arith.constant 0 : i32
    %c0_i32_0 = arith.constant 0 : i32
    return %c0_i32, %arg1 : i32, i32
  }
  func.func @transform_3(%arg0: i32, %arg1: i32, %arg2: i32) -> (i32, i32) {
    %c0_i32 = arith.constant 0 : i32
    return %arg0, %arg1 : i32, i32
  }
}

module attributes {stable_mosaic.version = 11 : i64} {
  func.func @_bn_stats_kernel(%arg0: i32, %arg1: memref<128x128xbf16, #tpu.memory_space<vmem>>, %arg2: memref<1x128xf32, #tpu.memory_space<vmem>>, %arg3: memref<1x128xf32, #tpu.memory_space<vmem>>) attributes {dimension_semantics = [#tpu.dimension_semantics<arbitrary>], iteration_bounds = array<i64: 1>, scalar_prefetch = 0 : i64, scratch_operands = 0 : i64, tpu.core_type = #tpu.core_type<tc>, window_params = [{transform_indices = @transform_0, window_bounds = array<i64: 128, 128>}, {pipeline_mode = #tpu.pipeline_mode<synchronous>, transform_indices = @transform_1, window_bounds = array<i64: 1, 128>}, {pipeline_mode = #tpu.pipeline_mode<synchronous>, transform_indices = @transform_2, window_bounds = array<i64: 1, 128>}]} {
    %c0_i32 = arith.constant 0 : i32
    %0 = arith.cmpi eq, %arg0, %c0_i32 : i32
    %1 = arith.extui %0 : i1 to i32
    %c0_i32_0 = arith.constant 0 : i32
    %2 = arith.cmpi ne, %1, %c0_i32_0 : i32
    scf.if %2 {
      %cst_11 = arith.constant 0.000000e+00 : f32
      %16 = vector.broadcast %cst_11 : f32 to vector<1x128xf32>
      %c0_12 = arith.constant 0 : index
      %c0_13 = arith.constant 0 : index
      %17 = vector.load %arg2[%c0_12, %c0_13] : memref<1x128xf32, #tpu.memory_space<vmem>>, vector<1x128xf32>
      tpu.vector_store %arg2[%c0_12, %c0_13], %16 {strides = array<i32>} : memref<1x128xf32, #tpu.memory_space<vmem>>, vector<1x128xf32>,
      %cst_14 = arith.constant 0.000000e+00 : f32
      %18 = vector.broadcast %cst_14 : f32 to vector<1x128xf32>
      %c0_15 = arith.constant 0 : index
      %c0_16 = arith.constant 0 : index
      %19 = vector.load %arg3[%c0_15, %c0_16] : memref<1x128xf32, #tpu.memory_space<vmem>>, vector<1x128xf32>
      tpu.vector_store %arg3[%c0_15, %c0_16], %18 {strides = array<i32>} : memref<1x128xf32, #tpu.memory_space<vmem>>, vector<1x128xf32>,
    } else {
    }
    %c0 = arith.constant 0 : index
    %c0_1 = arith.constant 0 : index
    %3 = vector.load %arg1[%c0, %c0_1] : memref<128x128xbf16, #tpu.memory_space<vmem>>, vector<128x128xbf16>
    %4 = arith.extf %3 : vector<128x128xbf16> to vector<128x128xf32>
    %c0_2 = arith.constant 0 : index
    %c0_3 = arith.constant 0 : index
    %5 = vector.load %arg2[%c0_2, %c0_3] : memref<1x128xf32, #tpu.memory_space<vmem>>, vector<1x128xf32>
    %cst = arith.constant dense<0.000000e+00> : vector<128xf32>
    %6 = vector.multi_reduction <add>, %4, %cst [0] : vector<128x128xf32> to vector<128xf32>
    %7 = vector.shape_cast %6 : vector<128xf32> to vector<1x128xf32>
    %8 = arith.addf %5, %7 : vector<1x128xf32>
    %c0_4 = arith.constant 0 : index
    %c0_5 = arith.constant 0 : index
    %9 = vector.load %arg2[%c0_4, %c0_5] : memref<1x128xf32, #tpu.memory_space<vmem>>, vector<1x128xf32>
    tpu.vector_store %arg2[%c0_4, %c0_5], %8 {strides = array<i32>} : memref<1x128xf32, #tpu.memory_space<vmem>>, vector<1x128xf32>,
    %c0_6 = arith.constant 0 : index
    %c0_7 = arith.constant 0 : index
    %10 = vector.load %arg3[%c0_6, %c0_7] : memref<1x128xf32, #tpu.memory_space<vmem>>, vector<1x128xf32>
    %11 = arith.mulf %4, %4 : vector<128x128xf32>
    %cst_8 = arith.constant dense<0.000000e+00> : vector<128xf32>
    %12 = vector.multi_reduction <add>, %11, %cst_8 [0] : vector<128x128xf32> to vector<128xf32>
    %13 = vector.shape_cast %12 : vector<128xf32> to vector<1x128xf32>
    %14 = arith.addf %10, %13 : vector<1x128xf32>
    %c0_9 = arith.constant 0 : index
    %c0_10 = arith.constant 0 : index
    %15 = vector.load %arg3[%c0_9, %c0_10] : memref<1x128xf32, #tpu.memory_space<vmem>>, vector<1x128xf32>
    tpu.vector_store %arg3[%c0_9, %c0_10], %14 {strides = array<i32>} : memref<1x128xf32, #tpu.memory_space<vmem>>, vector<1x128xf32>,
    return
  }
  func.func @transform_0(%arg0: i32) -> (i32, i32) {
    %c0_i32 = arith.constant 0 : i32
    %c0_i32_0 = arith.constant 0 : i32
    return %arg0, %c0_i32 : i32, i32
  }
  func.func @transform_1(%arg0: i32) -> (i32, i32) {
    %c0_i32 = arith.constant 0 : i32
    %c0_i32_0 = arith.constant 0 : i32
    %c0_i32_1 = arith.constant 0 : i32
    return %c0_i32, %c0_i32_0 : i32, i32
  }
  func.func @transform_2(%arg0: i32) -> (i32, i32) {
    %c0_i32 = arith.constant 0 : i32
    %c0_i32_0 = arith.constant 0 : i32
    %c0_i32_1 = arith.constant 0 : i32
    return %c0_i32, %c0_i32_0 : i32, i32
  }
}

module attributes {stable_mosaic.version = 11 : i64} {
  func.func @_scale_shift_lrelu_kernel(%arg0: i32, %arg1: memref<128x128xbf16, #tpu.memory_space<vmem>>, %arg2: memref<1x128xf32, #tpu.memory_space<vmem>>, %arg3: memref<1x128xf32, #tpu.memory_space<vmem>>, %arg4: memref<128x128xbf16, #tpu.memory_space<vmem>>) attributes {dimension_semantics = [#tpu.dimension_semantics<parallel>], iteration_bounds = array<i64: 1>, scalar_prefetch = 0 : i64, scratch_operands = 0 : i64, tpu.core_type = #tpu.core_type<tc>, window_params = [{transform_indices = @transform_0, window_bounds = array<i64: 128, 128>}, {pipeline_mode = #tpu.pipeline_mode<synchronous>, transform_indices = @transform_1, window_bounds = array<i64: 1, 128>}, {pipeline_mode = #tpu.pipeline_mode<synchronous>, transform_indices = @transform_2, window_bounds = array<i64: 1, 128>}, {transform_indices = @transform_3, window_bounds = array<i64: 128, 128>}]} {
    %c0 = arith.constant 0 : index
    %c0_0 = arith.constant 0 : index
    %0 = vector.load %arg1[%c0, %c0_0] : memref<128x128xbf16, #tpu.memory_space<vmem>>, vector<128x128xbf16>
    %1 = arith.extf %0 : vector<128x128xbf16> to vector<128x128xf32>
    %c0_1 = arith.constant 0 : index
    %c0_2 = arith.constant 0 : index
    %2 = vector.load %arg2[%c0_1, %c0_2] : memref<1x128xf32, #tpu.memory_space<vmem>>, vector<1x128xf32>
    %3 = vector.broadcast %2 : vector<1x128xf32> to vector<128x128xf32>
    %4 = arith.mulf %1, %3 : vector<128x128xf32>
    %c0_3 = arith.constant 0 : index
    %c0_4 = arith.constant 0 : index
    %5 = vector.load %arg3[%c0_3, %c0_4] : memref<1x128xf32, #tpu.memory_space<vmem>>, vector<1x128xf32>
    %6 = vector.broadcast %5 : vector<1x128xf32> to vector<128x128xf32>
    %7 = arith.addf %4, %6 : vector<128x128xf32>
    %cst = arith.constant 0.000000e+00 : f32
    %8 = vector.broadcast %cst : f32 to vector<128x128xf32>
    %9 = arith.cmpf oge, %7, %8 : vector<128x128xf32>
    %cst_5 = arith.constant 2.000000e-01 : f32
    %10 = vector.broadcast %cst_5 : f32 to vector<128x128xf32>
    %11 = arith.mulf %10, %7 : vector<128x128xf32>
    %12 = arith.select %9, %7, %11 : vector<128x128xi1>, vector<128x128xf32>
    %13 = arith.truncf %12 : vector<128x128xf32> to vector<128x128xbf16>
    %c0_6 = arith.constant 0 : index
    %c0_7 = arith.constant 0 : index
    %14 = vector.load %arg4[%c0_6, %c0_7] : memref<128x128xbf16, #tpu.memory_space<vmem>>, vector<128x128xbf16>
    tpu.vector_store %arg4[%c0_6, %c0_7], %13 {strides = array<i32>} : memref<128x128xbf16, #tpu.memory_space<vmem>>, vector<128x128xbf16>,
    return
  }
  func.func @transform_0(%arg0: i32) -> (i32, i32) {
    %c0_i32 = arith.constant 0 : i32
    %c0_i32_0 = arith.constant 0 : i32
    return %arg0, %c0_i32 : i32, i32
  }
  func.func @transform_1(%arg0: i32) -> (i32, i32) {
    %c0_i32 = arith.constant 0 : i32
    %c0_i32_0 = arith.constant 0 : i32
    %c0_i32_1 = arith.constant 0 : i32
    return %c0_i32, %c0_i32_0 : i32, i32
  }
  func.func @transform_2(%arg0: i32) -> (i32, i32) {
    %c0_i32 = arith.constant 0 : i32
    %c0_i32_0 = arith.constant 0 : i32
    %c0_i32_1 = arith.constant 0 : i32
    return %c0_i32, %c0_i32_0 : i32, i32
  }
  func.func @transform_3(%arg0: i32) -> (i32, i32) {
    %c0_i32 = arith.constant 0 : i32
    %c0_i32_0 = arith.constant 0 : i32
    return %arg0, %c0_i32 : i32, i32
  }
}

module attributes {stable_mosaic.version = 11 : i64} {
  func.func @_matmul_bias_act_kernel(%arg0: i32, %arg1: i32, %arg2: i32, %arg3: memref<32x256xbf16, #tpu.memory_space<vmem>>, %arg4: memref<256x128xbf16, #tpu.memory_space<vmem>>, %arg5: memref<1x128xf32, #tpu.memory_space<vmem>>, %arg6: memref<32x128xbf16, #tpu.memory_space<vmem>>, %arg7: memref<32x128xf32, #tpu.memory_space<vmem>>) attributes {dimension_semantics = [#tpu.dimension_semantics<parallel>, #tpu.dimension_semantics<parallel>, #tpu.dimension_semantics<arbitrary>], iteration_bounds = array<i64: 1, 1, 1>, scalar_prefetch = 0 : i64, scratch_operands = 1 : i64, tpu.core_type = #tpu.core_type<tc>, window_params = [{transform_indices = @transform_0, window_bounds = array<i64: 32, 256>}, {transform_indices = @transform_1, window_bounds = array<i64: 256, 128>}, {transform_indices = @transform_2, window_bounds = array<i64: 1, 128>}, {transform_indices = @transform_3, window_bounds = array<i64: 32, 128>}]} {
    %c0_i32 = arith.constant 0 : i32
    %0 = arith.cmpi eq, %arg2, %c0_i32 : i32
    %1 = arith.extui %0 : i1 to i32
    %c0_i32_0 = arith.constant 0 : i32
    %2 = arith.cmpi ne, %1, %c0_i32_0 : i32
    scf.if %2 {
      %cst_10 = arith.constant 0.000000e+00 : f32
      %12 = vector.broadcast %cst_10 : f32 to vector<32x128xf32>
      %c0_11 = arith.constant 0 : index
      %c0_12 = arith.constant 0 : index
      %13 = vector.load %arg7[%c0_11, %c0_12] : memref<32x128xf32, #tpu.memory_space<vmem>>, vector<32x128xf32>
      tpu.vector_store %arg7[%c0_11, %c0_12], %12 {strides = array<i32>} : memref<32x128xf32, #tpu.memory_space<vmem>>, vector<32x128xf32>,
    } else {
    }
    %c0 = arith.constant 0 : index
    %c0_1 = arith.constant 0 : index
    %3 = vector.load %arg7[%c0, %c0_1] : memref<32x128xf32, #tpu.memory_space<vmem>>, vector<32x128xf32>
    %c0_2 = arith.constant 0 : index
    %c0_3 = arith.constant 0 : index
    %4 = vector.load %arg3[%c0_2, %c0_3] : memref<32x256xbf16, #tpu.memory_space<vmem>>, vector<32x256xbf16>
    %c0_4 = arith.constant 0 : index
    %c0_5 = arith.constant 0 : index
    %5 = vector.load %arg4[%c0_4, %c0_5] : memref<256x128xbf16, #tpu.memory_space<vmem>>, vector<256x128xbf16>
    %cst = arith.constant dense<0.000000e+00> : vector<32x128xf32>
    %6 = tpu.matmul %4, %5, %cst {dimension_numbers = #tpu.dot_dimension_numbers<[1], [0], [0], [1], [0, 0, 1, 1], [], []>} : vector<32x256xbf16>, vector<256x128xbf16>, vector<32x128xf32> -> vector<32x128xf32>
    %7 = arith.addf %3, %6 : vector<32x128xf32>
    %c0_6 = arith.constant 0 : index
    %c0_7 = arith.constant 0 : index
    %8 = vector.load %arg7[%c0_6, %c0_7] : memref<32x128xf32, #tpu.memory_space<vmem>>, vector<32x128xf32>
    tpu.vector_store %arg7[%c0_6, %c0_7], %7 {strides = array<i32>} : memref<32x128xf32, #tpu.memory_space<vmem>>, vector<32x128xf32>,
    %c0_i32_8 = arith.constant 0 : i32
    %9 = arith.cmpi eq, %arg2, %c0_i32_8 : i32
    %10 = arith.extui %9 : i1 to i32
    %c0_i32_9 = arith.constant 0 : i32
    %11 = arith.cmpi ne, %10, %c0_i32_9 : i32
    scf.if %11 {
      %c0_10 = arith.constant 0 : index
      %c0_11 = arith.constant 0 : index
      %12 = vector.load %arg7[%c0_10, %c0_11] : memref<32x128xf32, #tpu.memory_space<vmem>>, vector<32x128xf32>
      %c0_12 = arith.constant 0 : index
      %c0_13 = arith.constant 0 : index
      %13 = vector.load %arg5[%c0_12, %c0_13] : memref<1x128xf32, #tpu.memory_space<vmem>>, vector<1x128xf32>
      %14 = vector.broadcast %13 : vector<1x128xf32> to vector<32x128xf32>
      %15 = arith.addf %12, %14 : vector<32x128xf32>
      %16 = arith.truncf %15 : vector<32x128xf32> to vector<32x128xbf16>
      %c0_14 = arith.constant 0 : index
      %c0_15 = arith.constant 0 : index
      %17 = vector.load %arg6[%c0_14, %c0_15] : memref<32x128xbf16, #tpu.memory_space<vmem>>, vector<32x128xbf16>
      tpu.vector_store %arg6[%c0_14, %c0_15], %16 {strides = array<i32>} : memref<32x128xbf16, #tpu.memory_space<vmem>>, vector<32x128xbf16>,
    } else {
    }
    return
  }
  func.func @transform_0(%arg0: i32, %arg1: i32, %arg2: i32) -> (i32, i32) {
    %c0_i32 = arith.constant 0 : i32
    return %arg0, %arg2 : i32, i32
  }
  func.func @transform_1(%arg0: i32, %arg1: i32, %arg2: i32) -> (i32, i32) {
    %c0_i32 = arith.constant 0 : i32
    return %arg2, %arg1 : i32, i32
  }
  func.func @transform_2(%arg0: i32, %arg1: i32, %arg2: i32) -> (i32, i32) {
    %c0_i32 = arith.constant 0 : i32
    %c0_i32_0 = arith.constant 0 : i32
    return %c0_i32, %arg1 : i32, i32
  }
  func.func @transform_3(%arg0: i32, %arg1: i32, %arg2: i32) -> (i32, i32) {
    %c0_i32 = arith.constant 0 : i32
    return %arg0, %arg1 : i32, i32
  }
}

module attributes {stable_mosaic.version = 11 : i64} {
  func.func @_scale_shift_lrelu_kernel(%arg0: i32, %arg1: memref<32x128xbf16, #tpu.memory_space<vmem>>, %arg2: memref<1x128xf32, #tpu.memory_space<vmem>>, %arg3: memref<1x128xf32, #tpu.memory_space<vmem>>, %arg4: memref<32x128xbf16, #tpu.memory_space<vmem>>) attributes {dimension_semantics = [#tpu.dimension_semantics<parallel>], iteration_bounds = array<i64: 1>, scalar_prefetch = 0 : i64, scratch_operands = 0 : i64, tpu.core_type = #tpu.core_type<tc>, window_params = [{transform_indices = @transform_0, window_bounds = array<i64: 32, 128>}, {pipeline_mode = #tpu.pipeline_mode<synchronous>, transform_indices = @transform_1, window_bounds = array<i64: 1, 128>}, {pipeline_mode = #tpu.pipeline_mode<synchronous>, transform_indices = @transform_2, window_bounds = array<i64: 1, 128>}, {transform_indices = @transform_3, window_bounds = array<i64: 32, 128>}]} {
    %c0 = arith.constant 0 : index
    %c0_0 = arith.constant 0 : index
    %0 = vector.load %arg1[%c0, %c0_0] : memref<32x128xbf16, #tpu.memory_space<vmem>>, vector<32x128xbf16>
    %1 = arith.extf %0 : vector<32x128xbf16> to vector<32x128xf32>
    %c0_1 = arith.constant 0 : index
    %c0_2 = arith.constant 0 : index
    %2 = vector.load %arg2[%c0_1, %c0_2] : memref<1x128xf32, #tpu.memory_space<vmem>>, vector<1x128xf32>
    %3 = vector.broadcast %2 : vector<1x128xf32> to vector<32x128xf32>
    %4 = arith.mulf %1, %3 : vector<32x128xf32>
    %c0_3 = arith.constant 0 : index
    %c0_4 = arith.constant 0 : index
    %5 = vector.load %arg3[%c0_3, %c0_4] : memref<1x128xf32, #tpu.memory_space<vmem>>, vector<1x128xf32>
    %6 = vector.broadcast %5 : vector<1x128xf32> to vector<32x128xf32>
    %7 = arith.addf %4, %6 : vector<32x128xf32>
    %cst = arith.constant 0.000000e+00 : f32
    %8 = vector.broadcast %cst : f32 to vector<32x128xf32>
    %9 = arith.cmpf oge, %7, %8 : vector<32x128xf32>
    %cst_5 = arith.constant 2.000000e-01 : f32
    %10 = vector.broadcast %cst_5 : f32 to vector<32x128xf32>
    %11 = arith.mulf %10, %7 : vector<32x128xf32>
    %12 = arith.select %9, %7, %11 : vector<32x128xi1>, vector<32x128xf32>
    %13 = arith.truncf %12 : vector<32x128xf32> to vector<32x128xbf16>
    %c0_6 = arith.constant 0 : index
    %c0_7 = arith.constant 0 : index
    %14 = vector.load %arg4[%c0_6, %c0_7] : memref<32x128xbf16, #tpu.memory_space<vmem>>, vector<32x128xbf16>
    tpu.vector_store %arg4[%c0_6, %c0_7], %13 {strides = array<i32>} : memref<32x128xbf16, #tpu.memory_space<vmem>>, vector<32x128xbf16>,
    return
  }
  func.func @transform_0(%arg0: i32) -> (i32, i32) {
    %c0_i32 = arith.constant 0 : i32
    %c0_i32_0 = arith.constant 0 : i32
    return %arg0, %c0_i32 : i32, i32
  }
  func.func @transform_1(%arg0: i32) -> (i32, i32) {
    %c0_i32 = arith.constant 0 : i32
    %c0_i32_0 = arith.constant 0 : i32
    %c0_i32_1 = arith.constant 0 : i32
    return %c0_i32, %c0_i32_0 : i32, i32
  }
  func.func @transform_2(%arg0: i32) -> (i32, i32) {
    %c0_i32 = arith.constant 0 : i32
    %c0_i32_0 = arith.constant 0 : i32
    %c0_i32_1 = arith.constant 0 : i32
    return %c0_i32, %c0_i32_0 : i32, i32
  }
  func.func @transform_3(%arg0: i32) -> (i32, i32) {
    %c0_i32 = arith.constant 0 : i32
    %c0_i32_0 = arith.constant 0 : i32
    return %arg0, %c0_i32 : i32, i32
  }
}

module attributes {stable_mosaic.version = 11 : i64} {
  func.func @_bn_stats_kernel(%arg0: i32, %arg1: memref<32x128xbf16, #tpu.memory_space<vmem>>, %arg2: memref<1x128xf32, #tpu.memory_space<vmem>>, %arg3: memref<1x128xf32, #tpu.memory_space<vmem>>) attributes {dimension_semantics = [#tpu.dimension_semantics<arbitrary>], iteration_bounds = array<i64: 1>, scalar_prefetch = 0 : i64, scratch_operands = 0 : i64, tpu.core_type = #tpu.core_type<tc>, window_params = [{transform_indices = @transform_0, window_bounds = array<i64: 32, 128>}, {pipeline_mode = #tpu.pipeline_mode<synchronous>, transform_indices = @transform_1, window_bounds = array<i64: 1, 128>}, {pipeline_mode = #tpu.pipeline_mode<synchronous>, transform_indices = @transform_2, window_bounds = array<i64: 1, 128>}]} {
    %c0_i32 = arith.constant 0 : i32
    %0 = arith.cmpi eq, %arg0, %c0_i32 : i32
    %1 = arith.extui %0 : i1 to i32
    %c0_i32_0 = arith.constant 0 : i32
    %2 = arith.cmpi ne, %1, %c0_i32_0 : i32
    scf.if %2 {
      %cst_11 = arith.constant 0.000000e+00 : f32
      %16 = vector.broadcast %cst_11 : f32 to vector<1x128xf32>
      %c0_12 = arith.constant 0 : index
      %c0_13 = arith.constant 0 : index
      %17 = vector.load %arg2[%c0_12, %c0_13] : memref<1x128xf32, #tpu.memory_space<vmem>>, vector<1x128xf32>
      tpu.vector_store %arg2[%c0_12, %c0_13], %16 {strides = array<i32>} : memref<1x128xf32, #tpu.memory_space<vmem>>, vector<1x128xf32>,
      %cst_14 = arith.constant 0.000000e+00 : f32
      %18 = vector.broadcast %cst_14 : f32 to vector<1x128xf32>
      %c0_15 = arith.constant 0 : index
      %c0_16 = arith.constant 0 : index
      %19 = vector.load %arg3[%c0_15, %c0_16] : memref<1x128xf32, #tpu.memory_space<vmem>>, vector<1x128xf32>
      tpu.vector_store %arg3[%c0_15, %c0_16], %18 {strides = array<i32>} : memref<1x128xf32, #tpu.memory_space<vmem>>, vector<1x128xf32>,
    } else {
    }
    %c0 = arith.constant 0 : index
    %c0_1 = arith.constant 0 : index
    %3 = vector.load %arg1[%c0, %c0_1] : memref<32x128xbf16, #tpu.memory_space<vmem>>, vector<32x128xbf16>
    %4 = arith.extf %3 : vector<32x128xbf16> to vector<32x128xf32>
    %c0_2 = arith.constant 0 : index
    %c0_3 = arith.constant 0 : index
    %5 = vector.load %arg2[%c0_2, %c0_3] : memref<1x128xf32, #tpu.memory_space<vmem>>, vector<1x128xf32>
    %cst = arith.constant dense<0.000000e+00> : vector<128xf32>
    %6 = vector.multi_reduction <add>, %4, %cst [0] : vector<32x128xf32> to vector<128xf32>
    %7 = vector.shape_cast %6 : vector<128xf32> to vector<1x128xf32>
    %8 = arith.addf %5, %7 : vector<1x128xf32>
    %c0_4 = arith.constant 0 : index
    %c0_5 = arith.constant 0 : index
    %9 = vector.load %arg2[%c0_4, %c0_5] : memref<1x128xf32, #tpu.memory_space<vmem>>, vector<1x128xf32>
    tpu.vector_store %arg2[%c0_4, %c0_5], %8 {strides = array<i32>} : memref<1x128xf32, #tpu.memory_space<vmem>>, vector<1x128xf32>,
    %c0_6 = arith.constant 0 : index
    %c0_7 = arith.constant 0 : index
    %10 = vector.load %arg3[%c0_6, %c0_7] : memref<1x128xf32, #tpu.memory_space<vmem>>, vector<1x128xf32>
    %11 = arith.mulf %4, %4 : vector<32x128xf32>
    %cst_8 = arith.constant dense<0.000000e+00> : vector<128xf32>
    %12 = vector.multi_reduction <add>, %11, %cst_8 [0] : vector<32x128xf32> to vector<128xf32>
    %13 = vector.shape_cast %12 : vector<128xf32> to vector<1x128xf32>
    %14 = arith.addf %10, %13 : vector<1x128xf32>
    %c0_9 = arith.constant 0 : index
    %c0_10 = arith.constant 0 : index
    %15 = vector.load %arg3[%c0_9, %c0_10] : memref<1x128xf32, #tpu.memory_space<vmem>>, vector<1x128xf32>
    tpu.vector_store %arg3[%c0_9, %c0_10], %14 {strides = array<i32>} : memref<1x128xf32, #tpu.memory_space<vmem>>, vector<1x128xf32>,
    return
  }
  func.func @transform_0(%arg0: i32) -> (i32, i32) {
    %c0_i32 = arith.constant 0 : i32
    %c0_i32_0 = arith.constant 0 : i32
    return %arg0, %c0_i32 : i32, i32
  }
  func.func @transform_1(%arg0: i32) -> (i32, i32) {
    %c0_i32 = arith.constant 0 : i32
    %c0_i32_0 = arith.constant 0 : i32
    %c0_i32_1 = arith.constant 0 : i32
    return %c0_i32, %c0_i32_0 : i32, i32
  }
  func.func @transform_2(%arg0: i32) -> (i32, i32) {
    %c0_i32 = arith.constant 0 : i32
    %c0_i32_0 = arith.constant 0 : i32
    %c0_i32_1 = arith.constant 0 : i32
    return %c0_i32, %c0_i32_0 : i32, i32
  }
}

module attributes {stable_mosaic.version = 11 : i64} {
  func.func @_matmul_bias_act_kernel(%arg0: i32, %arg1: i32, %arg2: i32, %arg3: memref<24x512xbf16, #tpu.memory_space<vmem>>, %arg4: memref<512x128xbf16, #tpu.memory_space<vmem>>, %arg5: memref<1x128xf32, #tpu.memory_space<vmem>>, %arg6: memref<24x128xbf16, #tpu.memory_space<vmem>>, %arg7: memref<24x128xf32, #tpu.memory_space<vmem>>) attributes {dimension_semantics = [#tpu.dimension_semantics<parallel>, #tpu.dimension_semantics<parallel>, #tpu.dimension_semantics<arbitrary>], iteration_bounds = array<i64: 1, 1, 1>, scalar_prefetch = 0 : i64, scratch_operands = 1 : i64, tpu.core_type = #tpu.core_type<tc>, window_params = [{transform_indices = @transform_0, window_bounds = array<i64: 24, 512>}, {transform_indices = @transform_1, window_bounds = array<i64: 512, 128>}, {transform_indices = @transform_2, window_bounds = array<i64: 1, 128>}, {transform_indices = @transform_3, window_bounds = array<i64: 24, 128>}]} {
    %c0_i32 = arith.constant 0 : i32
    %0 = arith.cmpi eq, %arg2, %c0_i32 : i32
    %1 = arith.extui %0 : i1 to i32
    %c0_i32_0 = arith.constant 0 : i32
    %2 = arith.cmpi ne, %1, %c0_i32_0 : i32
    scf.if %2 {
      %cst_10 = arith.constant 0.000000e+00 : f32
      %12 = vector.broadcast %cst_10 : f32 to vector<24x128xf32>
      %c0_11 = arith.constant 0 : index
      %c0_12 = arith.constant 0 : index
      %13 = vector.load %arg7[%c0_11, %c0_12] : memref<24x128xf32, #tpu.memory_space<vmem>>, vector<24x128xf32>
      tpu.vector_store %arg7[%c0_11, %c0_12], %12 {strides = array<i32>} : memref<24x128xf32, #tpu.memory_space<vmem>>, vector<24x128xf32>,
    } else {
    }
    %c0 = arith.constant 0 : index
    %c0_1 = arith.constant 0 : index
    %3 = vector.load %arg7[%c0, %c0_1] : memref<24x128xf32, #tpu.memory_space<vmem>>, vector<24x128xf32>
    %c0_2 = arith.constant 0 : index
    %c0_3 = arith.constant 0 : index
    %4 = vector.load %arg3[%c0_2, %c0_3] : memref<24x512xbf16, #tpu.memory_space<vmem>>, vector<24x512xbf16>
    %c0_4 = arith.constant 0 : index
    %c0_5 = arith.constant 0 : index
    %5 = vector.load %arg4[%c0_4, %c0_5] : memref<512x128xbf16, #tpu.memory_space<vmem>>, vector<512x128xbf16>
    %cst = arith.constant dense<0.000000e+00> : vector<24x128xf32>
    %6 = tpu.matmul %4, %5, %cst {dimension_numbers = #tpu.dot_dimension_numbers<[1], [0], [0], [1], [0, 0, 1, 1], [], []>} : vector<24x512xbf16>, vector<512x128xbf16>, vector<24x128xf32> -> vector<24x128xf32>
    %7 = arith.addf %3, %6 : vector<24x128xf32>
    %c0_6 = arith.constant 0 : index
    %c0_7 = arith.constant 0 : index
    %8 = vector.load %arg7[%c0_6, %c0_7] : memref<24x128xf32, #tpu.memory_space<vmem>>, vector<24x128xf32>
    tpu.vector_store %arg7[%c0_6, %c0_7], %7 {strides = array<i32>} : memref<24x128xf32, #tpu.memory_space<vmem>>, vector<24x128xf32>,
    %c0_i32_8 = arith.constant 0 : i32
    %9 = arith.cmpi eq, %arg2, %c0_i32_8 : i32
    %10 = arith.extui %9 : i1 to i32
    %c0_i32_9 = arith.constant 0 : i32
    %11 = arith.cmpi ne, %10, %c0_i32_9 : i32
    scf.if %11 {
      %c0_10 = arith.constant 0 : index
      %c0_11 = arith.constant 0 : index
      %12 = vector.load %arg7[%c0_10, %c0_11] : memref<24x128xf32, #tpu.memory_space<vmem>>, vector<24x128xf32>
      %c0_12 = arith.constant 0 : index
      %c0_13 = arith.constant 0 : index
      %13 = vector.load %arg5[%c0_12, %c0_13] : memref<1x128xf32, #tpu.memory_space<vmem>>, vector<1x128xf32>
      %14 = vector.broadcast %13 : vector<1x128xf32> to vector<24x128xf32>
      %15 = arith.addf %12, %14 : vector<24x128xf32>
      %16 = arith.truncf %15 : vector<24x128xf32> to vector<24x128xbf16>
      %c0_14 = arith.constant 0 : index
      %c0_15 = arith.constant 0 : index
      %17 = vector.load %arg6[%c0_14, %c0_15] : memref<24x128xbf16, #tpu.memory_space<vmem>>, vector<24x128xbf16>
      tpu.vector_store %arg6[%c0_14, %c0_15], %16 {strides = array<i32>} : memref<24x128xbf16, #tpu.memory_space<vmem>>, vector<24x128xbf16>,
    } else {
    }
    return
  }
  func.func @transform_0(%arg0: i32, %arg1: i32, %arg2: i32) -> (i32, i32) {
    %c0_i32 = arith.constant 0 : i32
    return %arg0, %arg2 : i32, i32
  }
  func.func @transform_1(%arg0: i32, %arg1: i32, %arg2: i32) -> (i32, i32) {
    %c0_i32 = arith.constant 0 : i32
    return %arg2, %arg1 : i32, i32
  }
  func.func @transform_2(%arg0: i32, %arg1: i32, %arg2: i32) -> (i32, i32) {
    %c0_i32 = arith.constant 0 : i32
    %c0_i32_0 = arith.constant 0 : i32
    return %c0_i32, %arg1 : i32, i32
  }
  func.func @transform_3(%arg0: i32, %arg1: i32, %arg2: i32) -> (i32, i32) {
    %c0_i32 = arith.constant 0 : i32
    return %arg0, %arg1 : i32, i32
  }
}

module attributes {stable_mosaic.version = 11 : i64} {
  func.func @_bn_stats_kernel(%arg0: i32, %arg1: memref<24x128xbf16, #tpu.memory_space<vmem>>, %arg2: memref<1x128xf32, #tpu.memory_space<vmem>>, %arg3: memref<1x128xf32, #tpu.memory_space<vmem>>) attributes {dimension_semantics = [#tpu.dimension_semantics<arbitrary>], iteration_bounds = array<i64: 1>, scalar_prefetch = 0 : i64, scratch_operands = 0 : i64, tpu.core_type = #tpu.core_type<tc>, window_params = [{transform_indices = @transform_0, window_bounds = array<i64: 24, 128>}, {pipeline_mode = #tpu.pipeline_mode<synchronous>, transform_indices = @transform_1, window_bounds = array<i64: 1, 128>}, {pipeline_mode = #tpu.pipeline_mode<synchronous>, transform_indices = @transform_2, window_bounds = array<i64: 1, 128>}]} {
    %c0_i32 = arith.constant 0 : i32
    %0 = arith.cmpi eq, %arg0, %c0_i32 : i32
    %1 = arith.extui %0 : i1 to i32
    %c0_i32_0 = arith.constant 0 : i32
    %2 = arith.cmpi ne, %1, %c0_i32_0 : i32
    scf.if %2 {
      %cst_11 = arith.constant 0.000000e+00 : f32
      %16 = vector.broadcast %cst_11 : f32 to vector<1x128xf32>
      %c0_12 = arith.constant 0 : index
      %c0_13 = arith.constant 0 : index
      %17 = vector.load %arg2[%c0_12, %c0_13] : memref<1x128xf32, #tpu.memory_space<vmem>>, vector<1x128xf32>
      tpu.vector_store %arg2[%c0_12, %c0_13], %16 {strides = array<i32>} : memref<1x128xf32, #tpu.memory_space<vmem>>, vector<1x128xf32>,
      %cst_14 = arith.constant 0.000000e+00 : f32
      %18 = vector.broadcast %cst_14 : f32 to vector<1x128xf32>
      %c0_15 = arith.constant 0 : index
      %c0_16 = arith.constant 0 : index
      %19 = vector.load %arg3[%c0_15, %c0_16] : memref<1x128xf32, #tpu.memory_space<vmem>>, vector<1x128xf32>
      tpu.vector_store %arg3[%c0_15, %c0_16], %18 {strides = array<i32>} : memref<1x128xf32, #tpu.memory_space<vmem>>, vector<1x128xf32>,
    } else {
    }
    %c0 = arith.constant 0 : index
    %c0_1 = arith.constant 0 : index
    %3 = vector.load %arg1[%c0, %c0_1] : memref<24x128xbf16, #tpu.memory_space<vmem>>, vector<24x128xbf16>
    %4 = arith.extf %3 : vector<24x128xbf16> to vector<24x128xf32>
    %c0_2 = arith.constant 0 : index
    %c0_3 = arith.constant 0 : index
    %5 = vector.load %arg2[%c0_2, %c0_3] : memref<1x128xf32, #tpu.memory_space<vmem>>, vector<1x128xf32>
    %cst = arith.constant dense<0.000000e+00> : vector<128xf32>
    %6 = vector.multi_reduction <add>, %4, %cst [0] : vector<24x128xf32> to vector<128xf32>
    %7 = vector.shape_cast %6 : vector<128xf32> to vector<1x128xf32>
    %8 = arith.addf %5, %7 : vector<1x128xf32>
    %c0_4 = arith.constant 0 : index
    %c0_5 = arith.constant 0 : index
    %9 = vector.load %arg2[%c0_4, %c0_5] : memref<1x128xf32, #tpu.memory_space<vmem>>, vector<1x128xf32>
    tpu.vector_store %arg2[%c0_4, %c0_5], %8 {strides = array<i32>} : memref<1x128xf32, #tpu.memory_space<vmem>>, vector<1x128xf32>,
    %c0_6 = arith.constant 0 : index
    %c0_7 = arith.constant 0 : index
    %10 = vector.load %arg3[%c0_6, %c0_7] : memref<1x128xf32, #tpu.memory_space<vmem>>, vector<1x128xf32>
    %11 = arith.mulf %4, %4 : vector<24x128xf32>
    %cst_8 = arith.constant dense<0.000000e+00> : vector<128xf32>
    %12 = vector.multi_reduction <add>, %11, %cst_8 [0] : vector<24x128xf32> to vector<128xf32>
    %13 = vector.shape_cast %12 : vector<128xf32> to vector<1x128xf32>
    %14 = arith.addf %10, %13 : vector<1x128xf32>
    %c0_9 = arith.constant 0 : index
    %c0_10 = arith.constant 0 : index
    %15 = vector.load %arg3[%c0_9, %c0_10] : memref<1x128xf32, #tpu.memory_space<vmem>>, vector<1x128xf32>
    tpu.vector_store %arg3[%c0_9, %c0_10], %14 {strides = array<i32>} : memref<1x128xf32, #tpu.memory_space<vmem>>, vector<1x128xf32>,
    return
  }
  func.func @transform_0(%arg0: i32) -> (i32, i32) {
    %c0_i32 = arith.constant 0 : i32
    %c0_i32_0 = arith.constant 0 : i32
    return %arg0, %c0_i32 : i32, i32
  }
  func.func @transform_1(%arg0: i32) -> (i32, i32) {
    %c0_i32 = arith.constant 0 : i32
    %c0_i32_0 = arith.constant 0 : i32
    %c0_i32_1 = arith.constant 0 : i32
    return %c0_i32, %c0_i32_0 : i32, i32
  }
  func.func @transform_2(%arg0: i32) -> (i32, i32) {
    %c0_i32 = arith.constant 0 : i32
    %c0_i32_0 = arith.constant 0 : i32
    %c0_i32_1 = arith.constant 0 : i32
    return %c0_i32, %c0_i32_0 : i32, i32
  }
}

module attributes {stable_mosaic.version = 11 : i64} {
  func.func @_scale_shift_lrelu_kernel(%arg0: i32, %arg1: memref<24x128xbf16, #tpu.memory_space<vmem>>, %arg2: memref<1x128xf32, #tpu.memory_space<vmem>>, %arg3: memref<1x128xf32, #tpu.memory_space<vmem>>, %arg4: memref<24x128xbf16, #tpu.memory_space<vmem>>) attributes {dimension_semantics = [#tpu.dimension_semantics<parallel>], iteration_bounds = array<i64: 1>, scalar_prefetch = 0 : i64, scratch_operands = 0 : i64, tpu.core_type = #tpu.core_type<tc>, window_params = [{transform_indices = @transform_0, window_bounds = array<i64: 24, 128>}, {pipeline_mode = #tpu.pipeline_mode<synchronous>, transform_indices = @transform_1, window_bounds = array<i64: 1, 128>}, {pipeline_mode = #tpu.pipeline_mode<synchronous>, transform_indices = @transform_2, window_bounds = array<i64: 1, 128>}, {transform_indices = @transform_3, window_bounds = array<i64: 24, 128>}]} {
    %c0 = arith.constant 0 : index
    %c0_0 = arith.constant 0 : index
    %0 = vector.load %arg1[%c0, %c0_0] : memref<24x128xbf16, #tpu.memory_space<vmem>>, vector<24x128xbf16>
    %1 = arith.extf %0 : vector<24x128xbf16> to vector<24x128xf32>
    %c0_1 = arith.constant 0 : index
    %c0_2 = arith.constant 0 : index
    %2 = vector.load %arg2[%c0_1, %c0_2] : memref<1x128xf32, #tpu.memory_space<vmem>>, vector<1x128xf32>
    %3 = vector.broadcast %2 : vector<1x128xf32> to vector<24x128xf32>
    %4 = arith.mulf %1, %3 : vector<24x128xf32>
    %c0_3 = arith.constant 0 : index
    %c0_4 = arith.constant 0 : index
    %5 = vector.load %arg3[%c0_3, %c0_4] : memref<1x128xf32, #tpu.memory_space<vmem>>, vector<1x128xf32>
    %6 = vector.broadcast %5 : vector<1x128xf32> to vector<24x128xf32>
    %7 = arith.addf %4, %6 : vector<24x128xf32>
    %cst = arith.constant 0.000000e+00 : f32
    %8 = vector.broadcast %cst : f32 to vector<24x128xf32>
    %9 = arith.cmpf oge, %7, %8 : vector<24x128xf32>
    %cst_5 = arith.constant 2.000000e-01 : f32
    %10 = vector.broadcast %cst_5 : f32 to vector<24x128xf32>
    %11 = arith.mulf %10, %7 : vector<24x128xf32>
    %12 = arith.select %9, %7, %11 : vector<24x128xi1>, vector<24x128xf32>
    %13 = arith.truncf %12 : vector<24x128xf32> to vector<24x128xbf16>
    %c0_6 = arith.constant 0 : index
    %c0_7 = arith.constant 0 : index
    %14 = vector.load %arg4[%c0_6, %c0_7] : memref<24x128xbf16, #tpu.memory_space<vmem>>, vector<24x128xbf16>
    tpu.vector_store %arg4[%c0_6, %c0_7], %13 {strides = array<i32>} : memref<24x128xbf16, #tpu.memory_space<vmem>>, vector<24x128xbf16>,
    return
  }
  func.func @transform_0(%arg0: i32) -> (i32, i32) {
    %c0_i32 = arith.constant 0 : i32
    %c0_i32_0 = arith.constant 0 : i32
    return %arg0, %c0_i32 : i32, i32
  }
  func.func @transform_1(%arg0: i32) -> (i32, i32) {
    %c0_i32 = arith.constant 0 : i32
    %c0_i32_0 = arith.constant 0 : i32
    %c0_i32_1 = arith.constant 0 : i32
    return %c0_i32, %c0_i32_0 : i32, i32
  }
  func.func @transform_2(%arg0: i32) -> (i32, i32) {
    %c0_i32 = arith.constant 0 : i32
    %c0_i32_0 = arith.constant 0 : i32
    %c0_i32_1 = arith.constant 0 : i32
    return %c0_i32, %c0_i32_0 : i32, i32
  }
  func.func @transform_3(%arg0: i32) -> (i32, i32) {
    %c0_i32 = arith.constant 0 : i32
    %c0_i32_0 = arith.constant 0 : i32
    return %arg0, %c0_i32 : i32, i32
  }
}

module attributes {stable_mosaic.version = 11 : i64} {
  func.func @_matmul_bias_act_kernel(%arg0: i32, %arg1: i32, %arg2: i32, %arg3: memref<8x512xbf16, #tpu.memory_space<vmem>>, %arg4: memref<512x128xbf16, #tpu.memory_space<vmem>>, %arg5: memref<1x128xf32, #tpu.memory_space<vmem>>, %arg6: memref<8x128xf32, #tpu.memory_space<vmem>>, %arg7: memref<8x128xf32, #tpu.memory_space<vmem>>) attributes {dimension_semantics = [#tpu.dimension_semantics<parallel>, #tpu.dimension_semantics<parallel>, #tpu.dimension_semantics<arbitrary>], iteration_bounds = array<i64: 1, 1, 2>, scalar_prefetch = 0 : i64, scratch_operands = 1 : i64, tpu.core_type = #tpu.core_type<tc>, window_params = [{transform_indices = @transform_0, window_bounds = array<i64: 8, 512>}, {transform_indices = @transform_1, window_bounds = array<i64: 512, 128>}, {transform_indices = @transform_2, window_bounds = array<i64: 1, 128>}, {transform_indices = @transform_3, window_bounds = array<i64: 8, 128>}]} {
    %c0_i32 = arith.constant 0 : i32
    %0 = arith.cmpi eq, %arg2, %c0_i32 : i32
    %1 = arith.extui %0 : i1 to i32
    %c0_i32_0 = arith.constant 0 : i32
    %2 = arith.cmpi ne, %1, %c0_i32_0 : i32
    scf.if %2 {
      %cst_9 = arith.constant 0.000000e+00 : f32
      %12 = vector.broadcast %cst_9 : f32 to vector<8x128xf32>
      %c0_10 = arith.constant 0 : index
      %c0_11 = arith.constant 0 : index
      %13 = vector.load %arg7[%c0_10, %c0_11] : memref<8x128xf32, #tpu.memory_space<vmem>>, vector<8x128xf32>
      tpu.vector_store %arg7[%c0_10, %c0_11], %12 {strides = array<i32>} : memref<8x128xf32, #tpu.memory_space<vmem>>, vector<8x128xf32>,
    } else {
    }
    %c0 = arith.constant 0 : index
    %c0_1 = arith.constant 0 : index
    %3 = vector.load %arg7[%c0, %c0_1] : memref<8x128xf32, #tpu.memory_space<vmem>>, vector<8x128xf32>
    %c0_2 = arith.constant 0 : index
    %c0_3 = arith.constant 0 : index
    %4 = vector.load %arg3[%c0_2, %c0_3] : memref<8x512xbf16, #tpu.memory_space<vmem>>, vector<8x512xbf16>
    %c0_4 = arith.constant 0 : index
    %c0_5 = arith.constant 0 : index
    %5 = vector.load %arg4[%c0_4, %c0_5] : memref<512x128xbf16, #tpu.memory_space<vmem>>, vector<512x128xbf16>
    %cst = arith.constant dense<0.000000e+00> : vector<8x128xf32>
    %6 = tpu.matmul %4, %5, %cst {dimension_numbers = #tpu.dot_dimension_numbers<[1], [0], [0], [1], [0, 0, 1, 1], [], []>} : vector<8x512xbf16>, vector<512x128xbf16>, vector<8x128xf32> -> vector<8x128xf32>
    %7 = arith.addf %3, %6 : vector<8x128xf32>
    %c0_6 = arith.constant 0 : index
    %c0_7 = arith.constant 0 : index
    %8 = vector.load %arg7[%c0_6, %c0_7] : memref<8x128xf32, #tpu.memory_space<vmem>>, vector<8x128xf32>
    tpu.vector_store %arg7[%c0_6, %c0_7], %7 {strides = array<i32>} : memref<8x128xf32, #tpu.memory_space<vmem>>, vector<8x128xf32>,
    %c1_i32 = arith.constant 1 : i32
    %9 = arith.cmpi eq, %arg2, %c1_i32 : i32
    %10 = arith.extui %9 : i1 to i32
    %c0_i32_8 = arith.constant 0 : i32
    %11 = arith.cmpi ne, %10, %c0_i32_8 : i32
    scf.if %11 {
      %c0_9 = arith.constant 0 : index
      %c0_10 = arith.constant 0 : index
      %12 = vector.load %arg7[%c0_9, %c0_10] : memref<8x128xf32, #tpu.memory_space<vmem>>, vector<8x128xf32>
      %c0_11 = arith.constant 0 : index
      %c0_12 = arith.constant 0 : index
      %13 = vector.load %arg5[%c0_11, %c0_12] : memref<1x128xf32, #tpu.memory_space<vmem>>, vector<1x128xf32>
      %14 = vector.broadcast %13 : vector<1x128xf32> to vector<8x128xf32>
      %15 = arith.addf %12, %14 : vector<8x128xf32>
      %c0_13 = arith.constant 0 : index
      %c0_14 = arith.constant 0 : index
      %16 = vector.load %arg6[%c0_13, %c0_14] : memref<8x128xf32, #tpu.memory_space<vmem>>, vector<8x128xf32>
      tpu.vector_store %arg6[%c0_13, %c0_14], %15 {strides = array<i32>} : memref<8x128xf32, #tpu.memory_space<vmem>>, vector<8x128xf32>,
    } else {
    }
    return
  }
  func.func @transform_0(%arg0: i32, %arg1: i32, %arg2: i32) -> (i32, i32) {
    %c0_i32 = arith.constant 0 : i32
    return %arg0, %arg2 : i32, i32
  }
  func.func @transform_1(%arg0: i32, %arg1: i32, %arg2: i32) -> (i32, i32) {
    %c0_i32 = arith.constant 0 : i32
    return %arg2, %arg1 : i32, i32
  }
  func.func @transform_2(%arg0: i32, %arg1: i32, %arg2: i32) -> (i32, i32) {
    %c0_i32 = arith.constant 0 : i32
    %c0_i32_0 = arith.constant 0 : i32
    return %c0_i32, %arg1 : i32, i32
  }
  func.func @transform_3(%arg0: i32, %arg1: i32, %arg2: i32) -> (i32, i32) {
    %c0_i32 = arith.constant 0 : i32
    return %arg0, %arg1 : i32, i32
  }
}

</mosaic_0001>

<llo_original>
// kernel: nlayer_discriminator_forward.11
$region0: #{nlayer_discriminator_forward.11}
  #allocation0 [shape = 'u32[]', space=smem, size = 0x4, offset = 0x4, fixed_abs, tag = 'smem constant byte address 0x4 - core index']
  #allocation1 [shape = 'u32[144,128]{1,0:T(1,128)}', space=vmem, size = 0x12000, scoped, tag = 'internal scratch']
  #allocation2 [shape = 'f32[512,128]{1,0:T(8,128)}', space=vmem, size = 0x40000, scoped, tag = 'scratch operand']
  %s0 = inlined_call_operand.vmem [shape: bf16[512,128], index: 0, kind: input, shape index: {}]
  %s1 = inlined_call_operand.vmem [shape: bf16[128,128], index: 1, kind: input, shape index: {}]
  %s2 = inlined_call_operand.vmem [shape: f32[1,128], index: 2, kind: input, shape index: {}]
  %s3 = inlined_call_operand.vmem [shape: bf16[512,128], index: 3, kind: output, shape index: {}]
  %s4 = sld [smem:[#allocation0]]
  $region30: #{nlayer_discriminator_forward.11} parent=0
    _
  %s6 = ssub.s32 1, %s4
  %s7 = scalar_select 0, %s6, %s4
  // Predicated region
  $region2: #{nlayer_discriminator_forward.11} parent=0 // pred_check
    _
  $region3: #{nlayer_discriminator_forward.11} parent=0 // pred_check_branch
    %9 = sbr.rel (0) target = $region5
  $region4: #{nlayer_discriminator_forward.11} parent=0 // pred_region
    _
  $region5: #{nlayer_discriminator_forward.11} parent=0 // pred_fallthru
    _
  // Predicated region
  $region6: #{nlayer_discriminator_forward.11} parent=0 // pred_check
    _
  $region7: #{nlayer_discriminator_forward.11} parent=0 // pred_check_branch
    %11 = sbr.rel (0) target = $region9
  $region8: #{nlayer_discriminator_forward.11} parent=0 // pred_region
    _
  $region9: #{nlayer_discriminator_forward.11} parent=0 // pred_fallthru
    _
  // Predicated region
  $region10: #{nlayer_discriminator_forward.11} parent=0 // pred_check
    _
  $region11: #{nlayer_discriminator_forward.11} parent=0 // pred_check_branch
    %13 = sbr.rel (0) target = $region13
  $region12: #{nlayer_discriminator_forward.11} parent=0 // pred_region
    _
  $region13: #{nlayer_discriminator_forward.11} parent=0 // pred_fallthru
    _
  %p15 = scmp.eq.s32.totalorder 0, 0
  // Predicated region
  $region14: #{nlayer_discriminator_forward.11} parent=0 // pred_check
    %p16 = pneg %p15
  $region15: #{nlayer_discriminator_forward.11} parent=0 // pred_check_branch
    %18 = sbr.rel (%p16) target = $region17
  $region16: #{nlayer_discriminator_forward.11} parent=0 // pred_region
    %19 = vst [vmem:[#allocation2] sm:$0xff] 0.0
    %20 = vst [vmem:[#allocation2 + $0x8] sm:$0xff] 0.0
    %21 = vst [vmem:[#allocation2 + $0x10] sm:$0xff] 0.0
    %22 = vst [vmem:[#allocation2 + $0x18] sm:$0xff] 0.0
    %23 = vst [vmem:[#allocation2 + $0x20] sm:$0xff] 0.0
    %24 = vst [vmem:[#allocation2 + $0x28] sm:$0xff] 0.0
    %25 = vst [vmem:[#allocation2 + $0x30] sm:$0xff] 0.0
    %26 = vst [vmem:[#allocation2 + $0x38] sm:$0xff] 0.0
    %27 = vst [vmem:[#allocation2 + $0x40] sm:$0xff] 0.0
    %28 = vst [vmem:[#allocation2 + $0x48] sm:$0xff] 0.0
    %29 = vst [vmem:[#allocation2 + $0x50] sm:$0xff] 0.0
    %30 = vst [vmem:[#allocation2 + $0x58] sm:$0xff] 0.0
    %31 = vst [vmem:[#allocation2 + $0x60] sm:$0xff] 0.0
    %32 = vst [vmem:[#allocation2 + $0x68] sm:$0xff] 0.0
    %33 = vst [vmem:[#allocation2 + $0x70] sm:$0xff] 0.0
    %34 = vst [vmem:[#allocation2 + $0x78] sm:$0xff] 0.0
    %35 = vst [vmem:[#allocation2 + $0x80] sm:$0xff] 0.0
    %36 = vst [vmem:[#allocation2 + $0x88] sm:$0xff] 0.0
    %37 = vst [vmem:[#allocation2 + $0x90] sm:$0xff] 0.0
    %38 = vst [vmem:[#allocation2 + $0x98] sm:$0xff] 0.0
    %39 = vst [vmem:[#allocation2 + $0xa0] sm:$0xff] 0.0
    %40 = vst [vmem:[#allocation2 + $0xa8] sm:$0xff] 0.0
    %41 = vst [vmem:[#allocation2 + $0xb0] sm:$0xff] 0.0
    %42 = vst [vmem:[#allocation2 + $0xb8] sm:$0xff] 0.0
    %43 = vst [vmem:[#allocation2 + $0xc0] sm:$0xff] 0.0
    %44 = vst [vmem:[#allocation2 + $0xc8] sm:$0xff] 0.0
    %45 = vst [vmem:[#allocation2 + $0xd0] sm:$0xff] 0.0
    %46 = vst [vmem:[#allocation2 + $0xd8] sm:$0xff] 0.0
    %47 = vst [vmem:[#allocation2 + $0xe0] sm:$0xff] 0.0
    %48 = vst [vmem:[#allocation2 + $0xe8] sm:$0xff] 0.0
    %49 = vst [vmem:[#allocation2 + $0xf0] sm:$0xff] 0.0
    %50 = vst [vmem:[#allocation2 + $0xf8] sm:$0xff] 0.0
    %51 = vst [vmem:[#allocation2 + $0x100] sm:$0xff] 0.0
    %52 = vst [vmem:[#allocation2 + $0x108] sm:$0xff] 0.0
    %53 = vst [vmem:[#allocation2 + $0x110] sm:$0xff] 0.0
    %54 = vst [vmem:[#allocation2 + $0x118] sm:$0xff] 0.0
    %55 = vst [vmem:[#allocation2 + $0x120] sm:$0xff] 0.0
    %56 = vst [vmem:[#allocation2 + $0x128] sm:$0xff] 0.0
    %57 = vst [vmem:[#allocation2 + $0x130] sm:$0xff] 0.0
    %58 = vst [vmem:[#allocation2 + $0x138] sm:$0xff] 0.0
    %59 = vst [vmem:[#allocation2 + $0x140] sm:$0xff] 0.0
    %60 = vst [vmem:[#allocation2 + $0x148] sm:$0xff] 0.0
    %61 = vst [vmem:[#allocation2 + $0x150] sm:$0xff] 0.0
    %62 = vst [vmem:[#allocation2 + $0x158] sm:$0xff] 0.0
    %63 = vst [vmem:[#allocation2 + $0x160] sm:$0xff] 0.0
    %64 = vst [vmem:[#allocation2 + $0x168] sm:$0xff] 0.0
    %65 = vst [vmem:[#allocation2 + $0x170] sm:$0xff] 0.0
    %66 = vst [vmem:[#allocation2 + $0x178] sm:$0xff] 0.0
    %67 = vst [vmem:[#allocation2 + $0x180] sm:$0xff] 0.0
    %68 = vst [vmem:[#allocation2 + $0x188] sm:$0xff] 0.0
    %69 = vst [vmem:[#allocation2 + $0x190] sm:$0xff] 0.0
    %70 = vst [vmem:[#allocation2 + $0x198] sm:$0xff] 0.0
    %71 = vst [vmem:[#allocation2 + $0x1a0] sm:$0xff] 0.0
    %72 = vst [vmem:[#allocation2 + $0x1a8] sm:$0xff] 0.0
    %73 = vst [vmem:[#allocation2 + $0x1b0] sm:$0xff] 0.0
    %74 = vst [vmem:[#allocation2 + $0x1b8] sm:$0xff] 0.0
    %75 = vst [vmem:[#allocation2 + $0x1c0] sm:$0xff] 0.0
    %76 = vst [vmem:[#allocation2 + $0x1c8] sm:$0xff] 0.0
    %77 = vst [vmem:[#allocation2 + $0x1d0] sm:$0xff] 0.0
    %78 = vst [vmem:[#allocation2 + $0x1d8] sm:$0xff] 0.0
    %79 = vst [vmem:[#allocation2 + $0x1e0] sm:$0xff] 0.0
    %80 = vst [vmem:[#allocation2 + $0x1e8] sm:$0xff] 0.0
    %81 = vst [vmem:[#allocation2 + $0x1f0] sm:$0xff] 0.0
    %82 = vst [vmem:[#allocation2 + $0x1f8] sm:$0xff] 0.0
  $region17: #{nlayer_discriminator_forward.11} parent=0 // pred_fallthru
    _
  %v83 = vld [vmem:[#allocation2] sm:$0xff]
  %v84 = vld [vmem:[#allocation2 + $0x8] sm:$0xff]
  %v85 = vld [vmem:[#allocation2 + $0x10] sm:$0xff]
  %v86 = vld [vmem:[#allocation2 + $0x18] sm:$0xff]
  %v87 = vld [vmem:[#allocation2 + $0x20] sm:$0xff]
  %v88 = vld [vmem:[#allocation2 + $0x28] sm:$0xff]
  %v89 = vld [vmem:[#allocation2 + $0x30] sm:$0xff]
  %v90 = vld [vmem:[#allocation2 + $0x38] sm:$0xff]
  %v91 = vld [vmem:[#allocation2 + $0x40] sm:$0xff]
  %v92 = vld [vmem:[#allocation2 + $0x48] sm:$0xff]
  %v93 = vld [vmem:[#allocation2 + $0x50] sm:$0xff]
  %v94 = vld [vmem:[#allocation2 + $0x58] sm:$0xff]
  %v95 = vld [vmem:[#allocation2 + $0x60] sm:$0xff]
  %v96 = vld [vmem:[#allocation2 + $0x68] sm:$0xff]
  %v97 = vld [vmem:[#allocation2 + $0x70] sm:$0xff]
  %v98 = vld [vmem:[#allocation2 + $0x78] sm:$0xff]
  %v99 = vld [vmem:[#allocation2 + $0x80] sm:$0xff]
  %v100 = vld [vmem:[#allocation2 + $0x88] sm:$0xff]
  %v101 = vld [vmem:[#allocation2 + $0x90] sm:$0xff]
  %v102 = vld [vmem:[#allocation2 + $0x98] sm:$0xff]
  %v103 = vld [vmem:[#allocation2 + $0xa0] sm:$0xff]
  %v104 = vld [vmem:[#allocation2 + $0xa8] sm:$0xff]
  %v105 = vld [vmem:[#allocation2 + $0xb0] sm:$0xff]
  %v106 = vld [vmem:[#allocation2 + $0xb8] sm:$0xff]
  %v107 = vld [vmem:[#allocation2 + $0xc0] sm:$0xff]
  %v108 = vld [vmem:[#allocation2 + $0xc8] sm:$0xff]
  %v109 = vld [vmem:[#allocation2 + $0xd0] sm:$0xff]
  %v110 = vld [vmem:[#allocation2 + $0xd8] sm:$0xff]
  %v111 = vld [vmem:[#allocation2 + $0xe0] sm:$0xff]
  %v112 = vld [vmem:[#allocation2 + $0xe8] sm:$0xff]
  %v113 = vld [vmem:[#allocation2 + $0xf0] sm:$0xff]
  %v114 = vld [vmem:[#allocation2 + $0xf8] sm:$0xff]
  %v115 = vld [vmem:[#allocation2 + $0x100] sm:$0xff]
  %v116 = vld [vmem:[#allocation2 + $0x108] sm:$0xff]
  %v117 = vld [vmem:[#allocation2 + $0x110] sm:$0xff]
  %v118 = vld [vmem:[#allocation2 + $0x118] sm:$0xff]
  %v119 = vld [vmem:[#allocation2 + $0x120] sm:$0xff]
  %v120 = vld [vmem:[#allocation2 + $0x128] sm:$0xff]
  %v121 = vld [vmem:[#allocation2 + $0x130] sm:$0xff]
  %v122 = vld [vmem:[#allocation2 + $0x138] sm:$0xff]
  %v123 = vld [vmem:[#allocation2 + $0x140] sm:$0xff]
  %v124 = vld [vmem:[#allocation2 + $0x148] sm:$0xff]
  %v125 = vld [vmem:[#allocation2 + $0x150] sm:$0xff]
  %v126 = vld [vmem:[#allocation2 + $0x158] sm:$0xff]
  %v127 = vld [vmem:[#allocation2 + $0x160] sm:$0xff]
  %v128 = vld [vmem:[#allocation2 + $0x168] sm:$0xff]
  %v129 = vld [vmem:[#allocation2 + $0x170] sm:$0xff]
  %v130 = vld [vmem:[#allocation2 + $0x178] sm:$0xff]
  %v131 = vld [vmem:[#allocation2 + $0x180] sm:$0xff]
  %v132 = vld [vmem:[#allocation2 + $0x188] sm:$0xff]
  %v133 = vld [vmem:[#allocation2 + $0x190] sm:$0xff]
  %v134 = vld [vmem:[#allocation2 + $0x198] sm:$0xff]
  %v135 = vld [vmem:[#allocation2 + $0x1a0] sm:$0xff]
  %v136 = vld [vmem:[#allocation2 + $0x1a8] sm:$0xff]
  %v137 = vld [vmem:[#allocation2 + $0x1b0] sm:$0xff]
  %v138 = vld [vmem:[#allocation2 + $0x1b8] sm:$0xff]
  %v139 = vld [vmem:[#allocation2 + $0x1c0] sm:$0xff]
  %v140 = vld [vmem:[#allocation2 + $0x1c8] sm:$0xff]
  %v141 = vld [vmem:[#allocation2 + $0x1d0] sm:$0xff]
  %v142 = vld [vmem:[#allocation2 + $0x1d8] sm:$0xff]
  %v143 = vld [vmem:[#allocation2 + $0x1e0] sm:$0xff]
  %v144 = vld [vmem:[#allocation2 + $0x1e8] sm:$0xff]
  %v145 = vld [vmem:[#allocation2 + $0x1f0] sm:$0xff]
  %v146 = vld [vmem:[#allocation2 + $0x1f8] sm:$0xff]
  %v147 = vld [vmem:[%s0] sm:$0xf]
  %v148 = vld [vmem:[%s0 + $0x4] sm:$0xf]
  %v149 = vld [vmem:[%s0 + $0x8] sm:$0xf]
  %v150 = vld [vmem:[%s0 + $0xc] sm:$0xf]
  %v151 = vld [vmem:[%s0 + $0x10] sm:$0xf]
  %v152 = vld [vmem:[%s0 + $0x14] sm:$0xf]
  %v153 = vld [vmem:[%s0 + $0x18] sm:$0xf]
  %v154 = vld [vmem:[%s0 + $0x1c] sm:$0xf]
  %v155 = vld [vmem:[%s0 + $0x20] sm:$0xf]
  %v156 = vld [vmem:[%s0 + $0x24] sm:$0xf]
  %v157 = vld [vmem:[%s0 + $0x28] sm:$0xf]
  %v158 = vld [vmem:[%s0 + $0x2c] sm:$0xf]
  %v159 = vld [vmem:[%s0 + $0x30] sm:$0xf]
  %v160 = vld [vmem:[%s0 + $0x34] sm:$0xf]
  %v161 = vld [vmem:[%s0 + $0x38] sm:$0xf]
  %v162 = vld [vmem:[%s0 + $0x3c] sm:$0xf]
  %v163 = vld [vmem:[%s0 + $0x40] sm:$0xf]
  %v164 = vld [vmem:[%s0 + $0x44] sm:$0xf]
  %v165 = vld [vmem:[%s0 + $0x48] sm:$0xf]
  %v166 = vld [vmem:[%s0 + $0x4c] sm:$0xf]
  %v167 = vld [vmem:[%s0 + $0x50] sm:$0xf]
  %v168 = vld [vmem:[%s0 + $0x54] sm:$0xf]
  %v169 = vld [vmem:[%s0 + $0x58] sm:$0xf]
  %v170 = vld [vmem:[%s0 + $0x5c] sm:$0xf]
  %v171 = vld [vmem:[%s0 + $0x60] sm:$0xf]
  %v172 = vld [vmem:[%s0 + $0x64] sm:$0xf]
  %v173 = vld [vmem:[%s0 + $0x68] sm:$0xf]
  %v174 = vld [vmem:[%s0 + $0x6c] sm:$0xf]
  %v175 = vld [vmem:[%s0 + $0x70] sm:$0xf]
  %v176 = vld [vmem:[%s0 + $0x74] sm:$0xf]
  %v177 = vld [vmem:[%s0 + $0x78] sm:$0xf]
  %v178 = vld [vmem:[%s0 + $0x7c] sm:$0xf]
  %v179 = vld [vmem:[%s0 + $0x80] sm:$0xf]
  %v180 = vld [vmem:[%s0 + $0x84] sm:$0xf]
  %v181 = vld [vmem:[%s0 + $0x88] sm:$0xf]
  %v182 = vld [vmem:[%s0 + $0x8c] sm:$0xf]
  %v183 = vld [vmem:[%s0 + $0x90] sm:$0xf]
  %v184 = vld [vmem:[%s0 + $0x94] sm:$0xf]
  %v185 = vld [vmem:[%s0 + $0x98] sm:$0xf]
  %v186 = vld [vmem:[%s0 + $0x9c] sm:$0xf]
  %v187 = vld [vmem:[%s0 + $0xa0] sm:$0xf]
  %v188 = vld [vmem:[%s0 + $0xa4] sm:$0xf]
  %v189 = vld [vmem:[%s0 + $0xa8] sm:$0xf]
  %v190 = vld [vmem:[%s0 + $0xac] sm:$0xf]
  %v191 = vld [vmem:[%s0 + $0xb0] sm:$0xf]
  %v192 = vld [vmem:[%s0 + $0xb4] sm:$0xf]
  %v193 = vld [vmem:[%s0 + $0xb8] sm:$0xf]
  %v194 = vld [vmem:[%s0 + $0xbc] sm:$0xf]
  %v195 = vld [vmem:[%s0 + $0xc0] sm:$0xf]
  %v196 = vld [vmem:[%s0 + $0xc4] sm:$0xf]
  %v197 = vld [vmem:[%s0 + $0xc8] sm:$0xf]
  %v198 = vld [vmem:[%s0 + $0xcc] sm:$0xf]
  %v199 = vld [vmem:[%s0 + $0xd0] sm:$0xf]
  %v200 = vld [vmem:[%s0 + $0xd4] sm:$0xf]
  %v201 = vld [vmem:[%s0 + $0xd8] sm:$0xf]
  %v202 = vld [vmem:[%s0 + $0xdc] sm:$0xf]
  %v203 = vld [vmem:[%s0 + $0xe0] sm:$0xf]
  %v204 = vld [vmem:[%s0 + $0xe4] sm:$0xf]
  %v205 = vld [vmem:[%s0 + $0xe8] sm:$0xf]
  %v206 = vld [vmem:[%s0 + $0xec] sm:$0xf]
  %v207 = vld [vmem:[%s0 + $0xf0] sm:$0xf]
  %v208 = vld [vmem:[%s0 + $0xf4] sm:$0xf]
  %v209 = vld [vmem:[%s0 + $0xf8] sm:$0xf]
  %v210 = vld [vmem:[%s0 + $0xfc] sm:$0xf]
  %v211 = vld [vmem:[%s1] sm:$0xf]
  %v212 = vld [vmem:[%s1 + $0x4] sm:$0xf]
  %v213 = vld [vmem:[%s1 + $0x8] sm:$0xf]
  %v214 = vld [vmem:[%s1 + $0xc] sm:$0xf]
  %v215 = vld [vmem:[%s1 + $0x10] sm:$0xf]
  %v216 = vld [vmem:[%s1 + $0x14] sm:$0xf]
  %v217 = vld [vmem:[%s1 + $0x18] sm:$0xf]
  %v218 = vld [vmem:[%s1 + $0x1c] sm:$0xf]
  %v219 = vld [vmem:[%s1 + $0x20] sm:$0xf]
  %v220 = vld [vmem:[%s1 + $0x24] sm:$0xf]
  %v221 = vld [vmem:[%s1 + $0x28] sm:$0xf]
  %v222 = vld [vmem:[%s1 + $0x2c] sm:$0xf]
  %v223 = vld [vmem:[%s1 + $0x30] sm:$0xf]
  %v224 = vld [vmem:[%s1 + $0x34] sm:$0xf]
  %v225 = vld [vmem:[%s1 + $0x38] sm:$0xf]
  %v226 = vld [vmem:[%s1 + $0x3c] sm:$0xf]
  %v291 = vunpack.c.l.b16 %v147
  %v292 = vunpack.c.l.b16 %v148
  %v293 = vunpack.c.l.b16 %v149
  %v294 = vunpack.c.l.b16 %v150
  %v295 = vunpack.c.l.b16 %v151
  %v296 = vunpack.c.l.b16 %v152
  %v297 = vunpack.c.l.b16 %v153
  %v298 = vunpack.c.l.b16 %v154
  %v299 = vunpack.c.l.b16 %v155
  %v300 = vunpack.c.l.b16 %v156
  %v301 = vunpack.c.l.b16 %v157
  %v302 = vunpack.c.l.b16 %v158
  %v303 = vunpack.c.l.b16 %v159
  %v304 = vunpack.c.l.b16 %v160
  %v305 = vunpack.c.l.b16 %v161
  %v306 = vunpack.c.l.b16 %v162
  %v307 = vunpack.c.l.b16 %v163
  %v308 = vunpack.c.l.b16 %v164
  %v309 = vunpack.c.l.b16 %v165
  %v310 = vunpack.c.l.b16 %v166
  %v311 = vunpack.c.l.b16 %v167
  %v312 = vunpack.c.l.b16 %v168
  %v313 = vunpack.c.l.b16 %v169
  %v314 = vunpack.c.l.b16 %v170
  %v315 = vunpack.c.l.b16 %v171
  %v316 = vunpack.c.l.b16 %v172
  %v317 = vunpack.c.l.b16 %v173
  %v318 = vunpack.c.l.b16 %v174
  %v319 = vunpack.c.l.b16 %v175
  %v320 = vunpack.c.l.b16 %v176
  %v321 = vunpack.c.l.b16 %v177
  %v322 = vunpack.c.l.b16 %v178
  %v323 = vunpack.c.l.b16 %v179
  %v324 = vunpack.c.l.b16 %v180
  %v325 = vunpack.c.l.b16 %v181
  %v326 = vunpack.c.l.b16 %v182
  %v327 = vunpack.c.l.b16 %v183
  %v328 = vunpack.c.l.b16 %v184
  %v329 = vunpack.c.l.b16 %v185
  %v330 = vunpack.c.l.b16 %v186
  %v331 = vunpack.c.l.b16 %v187
  %v332 = vunpack.c.l.b16 %v188
  %v333 = vunpack.c.l.b16 %v189
  %v334 = vunpack.c.l.b16 %v190
  %v335 = vunpack.c.l.b16 %v191
  %v336 = vunpack.c.l.b16 %v192
  %v337 = vunpack.c.l.b16 %v193
  %v338 = vunpack.c.l.b16 %v194
  %v339 = vunpack.c.l.b16 %v195
  %v340 = vunpack.c.l.b16 %v196
  %v341 = vunpack.c.l.b16 %v197
  %v342 = vunpack.c.l.b16 %v198
  %v343 = vunpack.c.l.b16 %v199
  %v344 = vunpack.c.l.b16 %v200
  %v345 = vunpack.c.l.b16 %v201
  %v346 = vunpack.c.l.b16 %v202
  %v347 = vunpack.c.l.b16 %v203
  %v348 = vunpack.c.l.b16 %v204
  %v349 = vunpack.c.l.b16 %v205
  %v350 = vunpack.c.l.b16 %v206
  %v351 = vunpack.c.l.b16 %v207
  %v352 = vunpack.c.l.b16 %v208
  %v353 = vunpack.c.l.b16 %v209
  %v354 = vunpack.c.l.b16 %v210
  %v355 = vpack.c.b16 %v292, %v291
  %v356 = vpack.c.b16 %v294, %v293
  %v357 = vpack.c.b16 %v296, %v295
  %v358 = vpack.c.b16 %v298, %v297
  %v359 = vpack.c.b16 %v300, %v299
  %v360 = vpack.c.b16 %v302, %v301
  %v361 = vpack.c.b16 %v304, %v303
  %v362 = vpack.c.b16 %v306, %v305
  %v363 = vpack.c.b16 %v308, %v307
  %v364 = vpack.c.b16 %v310, %v309
  %v365 = vpack.c.b16 %v312, %v311
  %v366 = vpack.c.b16 %v314, %v313
  %v367 = vpack.c.b16 %v316, %v315
  %v368 = vpack.c.b16 %v318, %v317
  %v369 = vpack.c.b16 %v320, %v319
  %v370 = vpack.c.b16 %v322, %v321
  %v371 = vpack.c.b16 %v324, %v323
  %v372 = vpack.c.b16 %v326, %v325
  %v373 = vpack.c.b16 %v328, %v327
  %v374 = vpack.c.b16 %v330, %v329
  %v375 = vpack.c.b16 %v332, %v331
  %v376 = vpack.c.b16 %v334, %v333
  %v377 = vpack.c.b16 %v336, %v335
  %v378 = vpack.c.b16 %v338, %v337
  %v379 = vpack.c.b16 %v340, %v339
  %v380 = vpack.c.b16 %v342, %v341
  %v381 = vpack.c.b16 %v344, %v343
  %v382 = vpack.c.b16 %v346, %v345
  %v383 = vpack.c.b16 %v348, %v347
  %v384 = vpack.c.b16 %v350, %v349
  %v385 = vpack.c.b16 %v352, %v351
  %v386 = vpack.c.b16 %v354, %v353
  %v435 = vunpack.c.l.b16 %v211
  %v436 = vunpack.c.l.b16 %v212
  %v437 = vunpack.c.l.b16 %v213
  %v438 = vunpack.c.l.b16 %v214
  %v439 = vunpack.c.l.b16 %v215
  %v440 = vunpack.c.l.b16 %v216
  %v441 = vunpack.c.l.b16 %v217
  %v442 = vunpack.c.l.b16 %v218
  %v443 = vunpack.c.l.b16 %v219
  %v444 = vunpack.c.l.b16 %v220
  %v445 = vunpack.c.l.b16 %v221
  %v446 = vunpack.c.l.b16 %v222
  %v447 = vunpack.c.l.b16 %v223
  %v448 = vunpack.c.l.b16 %v224
  %v449 = vunpack.c.l.b16 %v225
  %v450 = vunpack.c.l.b16 %v226
  %v451 = vpack.c.b16 %v436, %v435
  %v452 = vpack.c.b16 %v438, %v437
  %v453 = vpack.c.b16 %v440, %v439
  %v454 = vpack.c.b16 %v442, %v441
  %v455 = vpack.c.b16 %v444, %v443
  %v456 = vpack.c.b16 %v446, %v445
  %v457 = vpack.c.b16 %v448, %v447
  %v458 = vpack.c.b16 %v450, %v449
  %467 = vmatprep.subr.bf16.mxu0 0
  %468 = vmatpush1.bf16.msra.mxu0 %v451
  %469 = vmatprep.subr.bf16.mxu0 0
  %470 = vmatpush1.bf16.msra.mxu0 %v452
  %471 = vmatprep.subr.bf16.mxu0 0
  %472 = vmatpush1.bf16.msra.mxu0 %v453
  %473 = vmatprep.subr.bf16.mxu0 0
  %474 = vmatpush1.bf16.msra.mxu0 %v454
  %475 = vmatprep.subr.bf16.mxu0 0
  %476 = vmatpush1.bf16.msra.mxu0 %v455
  %477 = vmatprep.subr.bf16.mxu0 0
  %478 = vmatpush1.bf16.msra.mxu0 %v456
  %479 = vmatprep.subr.bf16.mxu0 0
  %480 = vmatpush1.bf16.msra.mxu0 %v457
  %481 = vmatprep.subr.bf16.mxu0 0
  %482 = vmatpush1.bf16.msra.mxu0 %v458
  %483 = vmatprep.subr.bf16.mxu0 0
  %484 = vmatpush1.bf16.msra.mxu0 0
  %485 = vmatprep.subr.bf16.mxu0 0
  %486 = vmatpush1.bf16.msra.mxu0 0
  %487 = vmatprep.subr.bf16.mxu0 0
  %488 = vmatpush1.bf16.msra.mxu0 0
  %489 = vmatprep.subr.bf16.mxu0 0
  %490 = vmatpush1.bf16.msra.mxu0 0
  %491 = vmatprep.subr.bf16.mxu0 0
  %492 = vmatpush1.bf16.msra.mxu0 0
  %493 = vmatprep.subr.bf16.mxu0 0
  %494 = vmatpush1.bf16.msra.mxu0 0
  %495 = vmatprep.subr.bf16.mxu0 0
  %496 = vmatpush1.bf16.msra.mxu0 0
  %497 = vmatprep.subr.bf16.mxu0 0
  %498 = vmatpush1.bf16.msra.mxu0 0
  %499 = vmatprep.mubr.bf16.mxu0 0
  %500 = vmatmul.mubr.bf16.gmra.mrb[0].mxu0 %v355
  %v501 = vpop.f32.mrb[0].mxu0
  %v502 = vadd.f32 0.0, %v501
  %v503 = vpop.f32.mrb[0].mxu0
  %v504 = vpop.f32.mrb[0].mxu0
  %v505 = vadd.f32 0.0, %v504
  %v506 = vpop.f32.mrb[0].mxu0
  %507 = vmatprep.mubr.bf16.mxu0 0
  %508 = vmatmul.mubr.bf16.gmra.mrb[0].mxu0 %v356
  %v509 = vpop.f32.mrb[0].mxu0
  %v510 = vadd.f32 0.0, %v509
  %v511 = vpop.f32.mrb[0].mxu0
  %v512 = vpop.f32.mrb[0].mxu0
  %v513 = vadd.f32 0.0, %v512
  %v514 = vpop.f32.mrb[0].mxu0
  %515 = vmatprep.mubr.bf16.mxu0 0
  %516 = vmatmul.mubr.bf16.gmra.mrb[0].mxu0 %v357
  %v517 = vpop.f32.mrb[0].mxu0
  %v518 = vadd.f32 0.0, %v517
  %v519 = vpop.f32.mrb[0].mxu0
  %v520 = vpop.f32.mrb[0].mxu0
  %v521 = vadd.f32 0.0, %v520
  %v522 = vpop.f32.mrb[0].mxu0
  %523 = vmatprep.mubr.bf16.mxu0 0
  %524 = vmatmul.mubr.bf16.gmra.mrb[0].mxu0 %v358
  %v525 = vpop.f32.mrb[0].mxu0
  %v526 = vadd.f32 0.0, %v525
  %v527 = vpop.f32.mrb[0].mxu0
  %v528 = vpop.f32.mrb[0].mxu0
  %v529 = vadd.f32 0.0, %v528
  %v530 = vpop.f32.mrb[0].mxu0
  %531 = vmatprep.mubr.bf16.mxu0 0
  %532 = vmatmul.mubr.bf16.gmra.mrb[0].mxu0 %v359
  %v533 = vpop.f32.mrb[0].mxu0
  %v534 = vadd.f32 0.0, %v533
  %v535 = vpop.f32.mrb[0].mxu0
  %v536 = vpop.f32.mrb[0].mxu0
  %v537 = vadd.f32 0.0, %v536
  %v538 = vpop.f32.mrb[0].mxu0
  %539 = vmatprep.mubr.bf16.mxu0 0
  %540 = vmatmul.mubr.bf16.gmra.mrb[0].mxu0 %v360
  %v541 = vpop.f32.mrb[0].mxu0
  %v542 = vadd.f32 0.0, %v541
  %v543 = vpop.f32.mrb[0].mxu0
  %v544 = vpop.f32.mrb[0].mxu0
  %v545 = vadd.f32 0.0, %v544
  %v546 = vpop.f32.mrb[0].mxu0
  %547 = vmatprep.mubr.bf16.mxu0 0
  %548 = vmatmul.mubr.bf16.gmra.mrb[0].mxu0 %v361
  %v549 = vpop.f32.mrb[0].mxu0
  %v550 = vadd.f32 0.0, %v549
  %v551 = vpop.f32.mrb[0].mxu0
  %v552 = vpop.f32.mrb[0].mxu0
  %v553 = vadd.f32 0.0, %v552
  %v554 = vpop.f32.mrb[0].mxu0
  %555 = vmatprep.mubr.bf16.mxu0 0
  %556 = vmatmul.mubr.bf16.gmra.mrb[0].mxu0 %v362
  %v557 = vpop.f32.mrb[0].mxu0
  %v558 = vadd.f32 0.0, %v557
  %v559 = vpop.f32.mrb[0].mxu0
  %v560 = vpop.f32.mrb[0].mxu0
  %v561 = vadd.f32 0.0, %v560
  %v562 = vpop.f32.mrb[0].mxu0
  %563 = vmatprep.mubr.bf16.mxu0 0
  %564 = vmatmul.mubr.bf16.gmra.mrb[0].mxu0 %v363
  %v565 = vpop.f32.mrb[0].mxu0
  %v566 = vadd.f32 0.0, %v565
  %v567 = vpop.f32.mrb[0].mxu0
  %v568 = vpop.f32.mrb[0].mxu0
  %v569 = vadd.f32 0.0, %v568
  %v570 = vpop.f32.mrb[0].mxu0
  %571 = vmatprep.mubr.bf16.mxu0 0
  %572 = vmatmul.mubr.bf16.gmra.mrb[0].mxu0 %v364
  %v573 = vpop.f32.mrb[0].mxu0
  %v574 = vadd.f32 0.0, %v573
  %v575 = vpop.f32.mrb[0].mxu0
  %v576 = vpop.f32.mrb[0].mxu0
  %v577 = vadd.f32 0.0, %v576
  %v578 = vpop.f32.mrb[0].mxu0
  %579 = vmatprep.mubr.bf16.mxu0 0
  %580 = vmatmul.mubr.bf16.gmra.mrb[0].mxu0 %v365
  %v581 = vpop.f32.mrb[0].mxu0
  %v582 = vadd.f32 0.0, %v581
  %v583 = vpop.f32.mrb[0].mxu0
  %v584 = vpop.f32.mrb[0].mxu0
  %v585 = vadd.f32 0.0, %v584
  %v586 = vpop.f32.mrb[0].mxu0
  %587 = vmatprep.mubr.bf16.mxu0 0
  %588 = vmatmul.mubr.bf16.gmra.mrb[0].mxu0 %v366
  %v589 = vpop.f32.mrb[0].mxu0
  %v590 = vadd.f32 0.0, %v589
  %v591 = vpop.f32.mrb[0].mxu0
  %v592 = vpop.f32.mrb[0].mxu0
  %v593 = vadd.f32 0.0, %v592
  %v594 = vpop.f32.mrb[0].mxu0
  %595 = vmatprep.mubr.bf16.mxu0 0
  %596 = vmatmul.mubr.bf16.gmra.mrb[0].mxu0 %v367
  %v597 = vpop.f32.mrb[0].mxu0
  %v598 = vadd.f32 0.0, %v597
  %v599 = vpop.f32.mrb[0].mxu0
  %v600 = vpop.f32.mrb[0].mxu0
  %v601 = vadd.f32 0.0, %v600
  %v602 = vpop.f32.mrb[0].mxu0
  %603 = vmatprep.mubr.bf16.mxu0 0
  %604 = vmatmul.mubr.bf16.gmra.mrb[0].mxu0 %v368
  %v605 = vpop.f32.mrb[0].mxu0
  %v606 = vadd.f32 0.0, %v605
  %v607 = vpop.f32.mrb[0].mxu0
  %v608 = vpop.f32.mrb[0].mxu0
  %v609 = vadd.f32 0.0, %v608
  %v610 = vpop.f32.mrb[0].mxu0
  %611 = vmatprep.mubr.bf16.mxu0 0
  %612 = vmatmul.mubr.bf16.gmra.mrb[0].mxu0 %v369
  %v613 = vpop.f32.mrb[0].mxu0
  %v614 = vadd.f32 0.0, %v613
  %v615 = vpop.f32.mrb[0].mxu0
  %v616 = vpop.f32.mrb[0].mxu0
  %v617 = vadd.f32 0.0, %v616
  %v618 = vpop.f32.mrb[0].mxu0
  %619 = vmatprep.mubr.bf16.mxu0 0
  %620 = vmatmul.mubr.bf16.gmra.mrb[0].mxu0 %v370
  %v621 = vpop.f32.mrb[0].mxu0
  %v622 = vadd.f32 0.0, %v621
  %v623 = vpop.f32.mrb[0].mxu0
  %v624 = vpop.f32.mrb[0].mxu0
  %v625 = vadd.f32 0.0, %v624
  %v626 = vpop.f32.mrb[0].mxu0
  %627 = vmatprep.mubr.bf16.mxu0 0
  %628 = vmatmul.mubr.bf16.gmra.mrb[0].mxu0 %v371
  %v629 = vpop.f32.mrb[0].mxu0
  %v630 = vadd.f32 0.0, %v629
  %v631 = vpop.f32.mrb[0].mxu0
  %v632 = vpop.f32.mrb[0].mxu0
  %v633 = vadd.f32 0.0, %v632
  %v634 = vpop.f32.mrb[0].mxu0
  %635 = vmatprep.mubr.bf16.mxu0 0
  %636 = vmatmul.mubr.bf16.gmra.mrb[0].mxu0 %v372
  %v637 = vpop.f32.mrb[0].mxu0
  %v638 = vadd.f32 0.0, %v637
  %v639 = vpop.f32.mrb[0].mxu0
  %v640 = vpop.f32.mrb[0].mxu0
  %v641 = vadd.f32 0.0, %v640
  %v642 = vpop.f32.mrb[0].mxu0
  %643 = vmatprep.mubr.bf16.mxu0 0
  %644 = vmatmul.mubr.bf16.gmra.mrb[0].mxu0 %v373
  %v645 = vpop.f32.mrb[0].mxu0
  %v646 = vadd.f32 0.0, %v645
  %v647 = vpop.f32.mrb[0].mxu0
  %v648 = vpop.f32.mrb[0].mxu0
  %v649 = vadd.f32 0.0, %v648
  %v650 = vpop.f32.mrb[0].mxu0
  %651 = vmatprep.mubr.bf16.mxu0 0
  %652 = vmatmul.mubr.bf16.gmra.mrb[0].mxu0 %v374
  %v653 = vpop.f32.mrb[0].mxu0
  %v654 = vadd.f32 0.0, %v653
  %v655 = vpop.f32.mrb[0].mxu0
  %v656 = vpop.f32.mrb[0].mxu0
  %v657 = vadd.f32 0.0, %v656
  %v658 = vpop.f32.mrb[0].mxu0
  %659 = vmatprep.mubr.bf16.mxu0 0
  %660 = vmatmul.mubr.bf16.gmra.mrb[0].mxu0 %v375
  %v661 = vpop.f32.mrb[0].mxu0
  %v662 = vadd.f32 0.0, %v661
  %v663 = vpop.f32.mrb[0].mxu0
  %v664 = vpop.f32.mrb[0].mxu0
  %v665 = vadd.f32 0.0, %v664
  %v666 = vpop.f32.mrb[0].mxu0
  %667 = vmatprep.mubr.bf16.mxu0 0
  %668 = vmatmul.mubr.bf16.gmra.mrb[0].mxu0 %v376
  %v669 = vpop.f32.mrb[0].mxu0
  %v670 = vadd.f32 0.0, %v669
  %v671 = vpop.f32.mrb[0].mxu0
  %v672 = vpop.f32.mrb[0].mxu0
  %v673 = vadd.f32 0.0, %v672
  %v674 = vpop.f32.mrb[0].mxu0
  %675 = vmatprep.mubr.bf16.mxu0 0
  %676 = vmatmul.mubr.bf16.gmra.mrb[0].mxu0 %v377
  %v677 = vpop.f32.mrb[0].mxu0
  %v678 = vadd.f32 0.0, %v677
  %v679 = vpop.f32.mrb[0].mxu0
  %v680 = vpop.f32.mrb[0].mxu0
  %v681 = vadd.f32 0.0, %v680
  %v682 = vpop.f32.mrb[0].mxu0
  %683 = vmatprep.mubr.bf16.mxu0 0
  %684 = vmatmul.mubr.bf16.gmra.mrb[0].mxu0 %v378
  %v685 = vpop.f32.mrb[0].mxu0
  %v686 = vadd.f32 0.0, %v685
  %v687 = vpop.f32.mrb[0].mxu0
  %v688 = vpop.f32.mrb[0].mxu0
  %v689 = vadd.f32 0.0, %v688
  %v690 = vpop.f32.mrb[0].mxu0
  %691 = vmatprep.mubr.bf16.mxu0 0
  %692 = vmatmul.mubr.bf16.gmra.mrb[0].mxu0 %v379
  %v693 = vpop.f32.mrb[0].mxu0
  %v694 = vadd.f32 0.0, %v693
  %v695 = vpop.f32.mrb[0].mxu0
  %v696 = vpop.f32.mrb[0].mxu0
  %v697 = vadd.f32 0.0, %v696
  %v698 = vpop.f32.mrb[0].mxu0
  %699 = vmatprep.mubr.bf16.mxu0 0
  %700 = vmatmul.mubr.bf16.gmra.mrb[0].mxu0 %v380
  %v701 = vpop.f32.mrb[0].mxu0
  %v702 = vadd.f32 0.0, %v701
  %v703 = vpop.f32.mrb[0].mxu0
  %v704 = vpop.f32.mrb[0].mxu0
  %v705 = vadd.f32 0.0, %v704
  %v706 = vpop.f32.mrb[0].mxu0
  %707 = vmatprep.mubr.bf16.mxu0 0
  %708 = vmatmul.mubr.bf16.gmra.mrb[0].mxu0 %v381
  %v709 = vpop.f32.mrb[0].mxu0
  %v710 = vadd.f32 0.0, %v709
  %v711 = vpop.f32.mrb[0].mxu0
  %v712 = vpop.f32.mrb[0].mxu0
  %v713 = vadd.f32 0.0, %v712
  %v714 = vpop.f32.mrb[0].mxu0
  %715 = vmatprep.mubr.bf16.mxu0 0
  %716 = vmatmul.mubr.bf16.gmra.mrb[0].mxu0 %v382
  %v717 = vpop.f32.mrb[0].mxu0
  %v718 = vadd.f32 0.0, %v717
  %v719 = vpop.f32.mrb[0].mxu0
  %v720 = vpop.f32.mrb[0].mxu0
  %v721 = vadd.f32 0.0, %v720
  %v722 = vpop.f32.mrb[0].mxu0
  %723 = vmatprep.mubr.bf16.mxu0 0
  %724 = vmatmul.mubr.bf16.gmra.mrb[0].mxu0 %v383
  %v725 = vpop.f32.mrb[0].mxu0
  %v726 = vadd.f32 0.0, %v725
  %v727 = vpop.f32.mrb[0].mxu0
  %v728 = vpop.f32.mrb[0].mxu0
  %v729 = vadd.f32 0.0, %v728
  %v730 = vpop.f32.mrb[0].mxu0
  %731 = vmatprep.mubr.bf16.mxu0 0
  %732 = vmatmul.mubr.bf16.gmra.mrb[0].mxu0 %v384
  %v733 = vpop.f32.mrb[0].mxu0
  %v734 = vadd.f32 0.0, %v733
  %v735 = vpop.f32.mrb[0].mxu0
  %v736 = vpop.f32.mrb[0].mxu0
  %v737 = vadd.f32 0.0, %v736
  %v738 = vpop.f32.mrb[0].mxu0
  %739 = vmatprep.mubr.bf16.mxu0 0
  %740 = vmatmul.mubr.bf16.gmra.mrb[0].mxu0 %v385
  %v741 = vpop.f32.mrb[0].mxu0
  %v742 = vadd.f32 0.0, %v741
  %v743 = vpop.f32.mrb[0].mxu0
  %v744 = vpop.f32.mrb[0].mxu0
  %v745 = vadd.f32 0.0, %v744
  %v746 = vpop.f32.mrb[0].mxu0
  %747 = vmatprep.mubr.bf16.mxu0 0
  %748 = vmatmul.mubr.bf16.gmra.mrb[0].mxu0 %v386
  %v749 = vpop.f32.mrb[0].mxu0
  %v750 = vadd.f32 0.0, %v749
  %v751 = vpop.f32.mrb[0].mxu0
  %v752 = vpop.f32.mrb[0].mxu0
  %v753 = vadd.f32 0.0, %v752
  %v754 = vpop.f32.mrb[0].mxu0
  %755 = vdwg.mxu0
  %v756 = vadd.f32 %v83, %v502
  %v757 = vadd.f32 %v84, %v505
  %v758 = vadd.f32 %v85, %v510
  %v759 = vadd.f32 %v86, %v513
  %v760 = vadd.f32 %v87, %v518
  %v761 = vadd.f32 %v88, %v521
  %v762 = vadd.f32 %v89, %v526
  %v763 = vadd.f32 %v90, %v529
  %v764 = vadd.f32 %v91, %v534
  %v765 = vadd.f32 %v92, %v537
  %v766 = vadd.f32 %v93, %v542
  %v767 = vadd.f32 %v94, %v545
  %v768 = vadd.f32 %v95, %v550
  %v769 = vadd.f32 %v96, %v553
  %v770 = vadd.f32 %v97, %v558
  %v771 = vadd.f32 %v98, %v561
  %v772 = vadd.f32 %v99, %v566
  %v773 = vadd.f32 %v100, %v569
  %v774 = vadd.f32 %v101, %v574
  %v775 = vadd.f32 %v102, %v577
  %v776 = vadd.f32 %v103, %v582
  %v777 = vadd.f32 %v104, %v585
  %v778 = vadd.f32 %v105, %v590
  %v779 = vadd.f32 %v106, %v593
  %v780 = vadd.f32 %v107, %v598
  %v781 = vadd.f32 %v108, %v601
  %v782 = vadd.f32 %v109, %v606
  %v783 = vadd.f32 %v110, %v609
  %v784 = vadd.f32 %v111, %v614
  %v785 = vadd.f32 %v112, %v617
  %v786 = vadd.f32 %v113, %v622
  %v787 = vadd.f32 %v114, %v625
  %v788 = vadd.f32 %v115, %v630
  %v789 = vadd.f32 %v116, %v633
  %v790 = vadd.f32 %v117, %v638
  %v791 = vadd.f32 %v118, %v641
  %v792 = vadd.f32 %v119, %v646
  %v793 = vadd.f32 %v120, %v649
  %v794 = vadd.f32 %v121, %v654
  %v795 = vadd.f32 %v122, %v657
  %v796 = vadd.f32 %v123, %v662
  %v797 = vadd.f32 %v124, %v665
  %v798 = vadd.f32 %v125, %v670
  %v799 = vadd.f32 %v126, %v673
  %v800 = vadd.f32 %v127, %v678
  %v801 = vadd.f32 %v128, %v681
  %v802 = vadd.f32 %v129, %v686
  %v803 = vadd.f32 %v130, %v689
  %v804 = vadd.f32 %v131, %v694
  %v805 = vadd.f32 %v132, %v697
  %v806 = vadd.f32 %v133, %v702
  %v807 = vadd.f32 %v134, %v705
  %v808 = vadd.f32 %v135, %v710
  %v809 = vadd.f32 %v136, %v713
  %v810 = vadd.f32 %v137, %v718
  %v811 = vadd.f32 %v138, %v721
  %v812 = vadd.f32 %v139, %v726
  %v813 = vadd.f32 %v140, %v729
  %v814 = vadd.f32 %v141, %v734
  %v815 = vadd.f32 %v142, %v737
  %v816 = vadd.f32 %v143, %v742
  %v817 = vadd.f32 %v144, %v745
  %v818 = vadd.f32 %v145, %v750
  %v819 = vadd.f32 %v146, %v753
  %820 = vst [vmem:[#allocation2] sm:$0xff] %v756
  %821 = vst [vmem:[#allocation2 + $0x8] sm:$0xff] %v757
  %822 = vst [vmem:[#allocation2 + $0x10] sm:$0xff] %v758
  %823 = vst [vmem:[#allocation2 + $0x18] sm:$0xff] %v759
  %824 = vst [vmem:[#allocation2 + $0x20] sm:$0xff] %v760
  %825 = vst [vmem:[#allocation2 + $0x28] sm:$0xff] %v761
  %826 = vst [vmem:[#allocation2 + $0x30] sm:$0xff] %v762
  %827 = vst [vmem:[#allocation2 + $0x38] sm:$0xff] %v763
  %828 = vst [vmem:[#allocation2 + $0x40] sm:$0xff] %v764
  %829 = vst [vmem:[#allocation2 + $0x48] sm:$0xff] %v765
  %830 = vst [vmem:[#allocation2 + $0x50] sm:$0xff] %v766
  %831 = vst [vmem:[#allocation2 + $0x58] sm:$0xff] %v767
  %832 = vst [vmem:[#allocation2 + $0x60] sm:$0xff] %v768
  %833 = vst [vmem:[#allocation2 + $0x68] sm:$0xff] %v769
  %834 = vst [vmem:[#allocation2 + $0x70] sm:$0xff] %v770
  %835 = vst [vmem:[#allocation2 + $0x78] sm:$0xff] %v771
  %836 = vst [vmem:[#allocation2 + $0x80] sm:$0xff] %v772
  %837 = vst [vmem:[#allocation2 + $0x88] sm:$0xff] %v773
  %838 = vst [vmem:[#allocation2 + $0x90] sm:$0xff] %v774
  %839 = vst [vmem:[#allocation2 + $0x98] sm:$0xff] %v775
  %840 = vst [vmem:[#allocation2 + $0xa0] sm:$0xff] %v776
  %841 = vst [vmem:[#allocation2 + $0xa8] sm:$0xff] %v777
  %842 = vst [vmem:[#allocation2 + $0xb0] sm:$0xff] %v778
  %843 = vst [vmem:[#allocation2 + $0xb8] sm:$0xff] %v779
  %844 = vst [vmem:[#allocation2 + $0xc0] sm:$0xff] %v780
  %845 = vst [vmem:[#allocation2 + $0xc8] sm:$0xff] %v781
  %846 = vst [vmem:[#allocation2 + $0xd0] sm:$0xff] %v782
  %847 = vst [vmem:[#allocation2 + $0xd8] sm:$0xff] %v783
  %848 = vst [vmem:[#allocation2 + $0xe0] sm:$0xff] %v784
  %849 = vst [vmem:[#allocation2 + $0xe8] sm:$0xff] %v785
  %850 = vst [vmem:[#allocation2 + $0xf0] sm:$0xff] %v786
  %851 = vst [vmem:[#allocation2 + $0xf8] sm:$0xff] %v787
  %852 = vst [vmem:[#allocation2 + $0x100] sm:$0xff] %v788
  %853 = vst [vmem:[#allocation2 + $0x108] sm:$0xff] %v789
  %854 = vst [vmem:[#allocation2 + $0x110] sm:$0xff] %v790
  %855 = vst [vmem:[#allocation2 + $0x118] sm:$0xff] %v791
  %856 = vst [vmem:[#allocation2 + $0x120] sm:$0xff] %v792
  %857 = vst [vmem:[#allocation2 + $0x128] sm:$0xff] %v793
  %858 = vst [vmem:[#allocation2 + $0x130] sm:$0xff] %v794
  %859 = vst [vmem:[#allocation2 + $0x138] sm:$0xff] %v795
  %860 = vst [vmem:[#allocation2 + $0x140] sm:$0xff] %v796
  %861 = vst [vmem:[#allocation2 + $0x148] sm:$0xff] %v797
  %862 = vst [vmem:[#allocation2 + $0x150] sm:$0xff] %v798
  %863 = vst [vmem:[#allocation2 + $0x158] sm:$0xff] %v799
  %864 = vst [vmem:[#allocation2 + $0x160] sm:$0xff] %v800
  %865 = vst [vmem:[#allocation2 + $0x168] sm:$0xff] %v801
  %866 = vst [vmem:[#allocation2 + $0x170] sm:$0xff] %v802
  %867 = vst [vmem:[#allocation2 + $0x178] sm:$0xff] %v803
  %868 = vst [vmem:[#allocation2 + $0x180] sm:$0xff] %v804
  %869 = vst [vmem:[#allocation2 + $0x188] sm:$0xff] %v805
  %870 = vst [vmem:[#allocation2 + $0x190] sm:$0xff] %v806
  %871 = vst [vmem:[#allocation2 + $0x198] sm:$0xff] %v807
  %872 = vst [vmem:[#allocation2 + $0x1a0] sm:$0xff] %v808
  %873 = vst [vmem:[#allocation2 + $0x1a8] sm:$0xff] %v809
  %874 = vst [vmem:[#allocation2 + $0x1b0] sm:$0xff] %v810
  %875 = vst [vmem:[#allocation2 + $0x1b8] sm:$0xff] %v811
  %876 = vst [vmem:[#allocation2 + $0x1c0] sm:$0xff] %v812
  %877 = vst [vmem:[#allocation2 + $0x1c8] sm:$0xff] %v813
  %878 = vst [vmem:[#allocation2 + $0x1d0] sm:$0xff] %v814
  %879 = vst [vmem:[#allocation2 + $0x1d8] sm:$0xff] %v815
  %880 = vst [vmem:[#allocation2 + $0x1e0] sm:$0xff] %v816
  %881 = vst [vmem:[#allocation2 + $0x1e8] sm:$0xff] %v817
  %882 = vst [vmem:[#allocation2 + $0x1f0] sm:$0xff] %v818
  %883 = vst [vmem:[#allocation2 + $0x1f8] sm:$0xff] %v819
  // Predicated region
  $region18: #{nlayer_discriminator_forward.11} parent=0 // pred_check
    %p884 = pneg %p15
  $region19: #{nlayer_discriminator_forward.11} parent=0 // pred_check_branch
    %886 = sbr.rel (%p884) target = $region21
  $region20: #{nlayer_discriminator_forward.11} parent=0 // pred_region
    %v887 = vld [vmem:[#allocation2] sm:$0xff]
    %v888 = vld [vmem:[#allocation2 + $0x8] sm:$0xff]
    %v889 = vld [vmem:[#allocation2 + $0x10] sm:$0xff]
    %v890 = vld [vmem:[#allocation2 + $0x18] sm:$0xff]
    %v891 = vld [vmem:[#allocation2 + $0x20] sm:$0xff]
    %v892 = vld [vmem:[#allocation2 + $0x28] sm:$0xff]
    %v893 = vld [vmem:[#allocation2 + $0x30] sm:$0xff]
    %v894 = vld [vmem:[#allocation2 + $0x38] sm:$0xff]
    %v895 = vld [vmem:[#allocation2 + $0x40] sm:$0xff]
    %v896 = vld [vmem:[#allocation2 + $0x48] sm:$0xff]
    %v897 = vld [vmem:[#allocation2 + $0x50] sm:$0xff]
    %v898 = vld [vmem:[#allocation2 + $0x58] sm:$0xff]
    %v899 = vld [vmem:[#allocation2 + $0x60] sm:$0xff]
    %v900 = vld [vmem:[#allocation2 + $0x68] sm:$0xff]
    %v901 = vld [vmem:[#allocation2 + $0x70] sm:$0xff]
    %v902 = vld [vmem:[#allocation2 + $0x78] sm:$0xff]
    %v903 = vld [vmem:[#allocation2 + $0x80] sm:$0xff]
    %v904 = vld [vmem:[#allocation2 + $0x88] sm:$0xff]
    %v905 = vld [vmem:[#allocation2 + $0x90] sm:$0xff]
    %v906 = vld [vmem:[#allocation2 + $0x98] sm:$0xff]
    %v907 = vld [vmem:[#allocation2 + $0xa0] sm:$0xff]
    %v908 = vld [vmem:[#allocation2 + $0xa8] sm:$0xff]
    %v909 = vld [vmem:[#allocation2 + $0xb0] sm:$0xff]
    %v910 = vld [vmem:[#allocation2 + $0xb8] sm:$0xff]
    %v911 = vld [vmem:[#allocation2 + $0xc0] sm:$0xff]
    %v912 = vld [vmem:[#allocation2 + $0xc8] sm:$0xff]
    %v913 = vld [vmem:[#allocation2 + $0xd0] sm:$0xff]
    %v914 = vld [vmem:[#allocation2 + $0xd8] sm:$0xff]
    %v915 = vld [vmem:[#allocation2 + $0xe0] sm:$0xff]
    %v916 = vld [vmem:[#allocation2 + $0xe8] sm:$0xff]
    %v917 = vld [vmem:[#allocation2 + $0xf0] sm:$0xff]
    %v918 = vld [vmem:[#allocation2 + $0xf8] sm:$0xff]
    %v919 = vld [vmem:[#allocation2 + $0x100] sm:$0xff]
    %v920 = vld [vmem:[#allocation2 + $0x108] sm:$0xff]
    %v921 = vld [vmem:[#allocation2 + $0x110] sm:$0xff]
    %v922 = vld [vmem:[#allocation2 + $0x118] sm:$0xff]
    %v923 = vld [vmem:[#allocation2 + $0x120] sm:$0xff]
    %v924 = vld [vmem:[#allocation2 + $0x128] sm:$0xff]
    %v925 = vld [vmem:[#allocation2 + $0x130] sm:$0xff]
    %v926 = vld [vmem:[#allocation2 + $0x138] sm:$0xff]
    %v927 = vld [vmem:[#allocation2 + $0x140] sm:$0xff]
    %v928 = vld [vmem:[#allocation2 + $0x148] sm:$0xff]
    %v929 = vld [vmem:[#allocation2 + $0x150] sm:$0xff]
    %v930 = vld [vmem:[#allocation2 + $0x158] sm:$0xff]
    %v931 = vld [vmem:[#allocation2 + $0x160] sm:$0xff]
    %v932 = vld [vmem:[#allocation2 + $0x168] sm:$0xff]
    %v933 = vld [vmem:[#allocation2 + $0x170] sm:$0xff]
    %v934 = vld [vmem:[#allocation2 + $0x178] sm:$0xff]
    %v935 = vld [vmem:[#allocation2 + $0x180] sm:$0xff]
    %v936 = vld [vmem:[#allocation2 + $0x188] sm:$0xff]
    %v937 = vld [vmem:[#allocation2 + $0x190] sm:$0xff]
    %v938 = vld [vmem:[#allocation2 + $0x198] sm:$0xff]
    %v939 = vld [vmem:[#allocation2 + $0x1a0] sm:$0xff]
    %v940 = vld [vmem:[#allocation2 + $0x1a8] sm:$0xff]
    %v941 = vld [vmem:[#allocation2 + $0x1b0] sm:$0xff]
    %v942 = vld [vmem:[#allocation2 + $0x1b8] sm:$0xff]
    %v943 = vld [vmem:[#allocation2 + $0x1c0] sm:$0xff]
    %v944 = vld [vmem:[#allocation2 + $0x1c8] sm:$0xff]
    %v945 = vld [vmem:[#allocation2 + $0x1d0] sm:$0xff]
    %v946 = vld [vmem:[#allocation2 + $0x1d8] sm:$0xff]
    %v947 = vld [vmem:[#allocation2 + $0x1e0] sm:$0xff]
    %v948 = vld [vmem:[#allocation2 + $0x1e8] sm:$0xff]
    %v949 = vld [vmem:[#allocation2 + $0x1f0] sm:$0xff]
    %v950 = vld [vmem:[#allocation2 + $0x1f8] sm:$0xff]
    %v951 = vld [vmem:[%s2] sm:$0x1]
    %v953 = vlaneseq
    %v954 = vshrl.u32 %v953, 7
    %v955 = vsub.s32 0, %v954
    %v956 = vrot.slane %v951, %v955
    %v958 = vadd.f32 %v887, %v956
    %v959 = vadd.f32 %v888, %v956
    %v960 = vadd.f32 %v889, %v956
    %v961 = vadd.f32 %v890, %v956
    %v962 = vadd.f32 %v891, %v956
    %v963 = vadd.f32 %v892, %v956
    %v964 = vadd.f32 %v893, %v956
    %v965 = vadd.f32 %v894, %v956
    %v966 = vadd.f32 %v895, %v956
    %v967 = vadd.f32 %v896, %v956
    %v968 = vadd.f32 %v897, %v956
    %v969 = vadd.f32 %v898, %v956
    %v970 = vadd.f32 %v899, %v956
    %v971 = vadd.f32 %v900, %v956
    %v972 = vadd.f32 %v901, %v956
    %v973 = vadd.f32 %v902, %v956
    %v974 = vadd.f32 %v903, %v956
    %v975 = vadd.f32 %v904, %v956
    %v976 = vadd.f32 %v905, %v956
    %v977 = vadd.f32 %v906, %v956
    %v978 = vadd.f32 %v907, %v956
    %v979 = vadd.f32 %v908, %v956
    %v980 = vadd.f32 %v909, %v956
    %v981 = vadd.f32 %v910, %v956
    %v982 = vadd.f32 %v911, %v956
    %v983 = vadd.f32 %v912, %v956
    %v984 = vadd.f32 %v913, %v956
    %v985 = vadd.f32 %v914, %v956
    %v986 = vadd.f32 %v915, %v956
    %v987 = vadd.f32 %v916, %v956
    %v988 = vadd.f32 %v917, %v956
    %v989 = vadd.f32 %v918, %v956
    %v990 = vadd.f32 %v919, %v956
    %v991 = vadd.f32 %v920, %v956
    %v992 = vadd.f32 %v921, %v956
    %v993 = vadd.f32 %v922, %v956
    %v994 = vadd.f32 %v923, %v956
    %v995 = vadd.f32 %v924, %v956
    %v996 = vadd.f32 %v925, %v956
    %v997 = vadd.f32 %v926, %v956
    %v998 = vadd.f32 %v927, %v956
    %v999 = vadd.f32 %v928, %v956
    %v1000 = vadd.f32 %v929, %v956
    %v1001 = vadd.f32 %v930, %v956
    %v1002 = vadd.f32 %v931, %v956
    %v1003 = vadd.f32 %v932, %v956
    %v1004 = vadd.f32 %v933, %v956
    %v1005 = vadd.f32 %v934, %v956
    %v1006 = vadd.f32 %v935, %v956
    %v1007 = vadd.f32 %v936, %v956
    %v1008 = vadd.f32 %v937, %v956
    %v1009 = vadd.f32 %v938, %v956
    %v1010 = vadd.f32 %v939, %v956
    %v1011 = vadd.f32 %v940, %v956
    %v1012 = vadd.f32 %v941, %v956
    %v1013 = vadd.f32 %v942, %v956
    %v1014 = vadd.f32 %v943, %v956
    %v1015 = vadd.f32 %v944, %v956
    %v1016 = vadd.f32 %v945, %v956
    %v1017 = vadd.f32 %v946, %v956
    %v1018 = vadd.f32 %v947, %v956
    %v1019 = vadd.f32 %v948, %v956
    %v1020 = vadd.f32 %v949, %v956
    %v1021 = vadd.f32 %v950, %v956
    %vm1022 = vcmp.ge.f32.partialorder %v958, 0.0
    %vm1023 = vcmp.ge.f32.partialorder %v959, 0.0
    %vm1024 = vcmp.ge.f32.partialorder %v960, 0.0
    %vm1025 = vcmp.ge.f32.partialorder %v961, 0.0
    %vm1026 = vcmp.ge.f32.partialorder %v962, 0.0
    %vm1027 = vcmp.ge.f32.partialorder %v963, 0.0
    %vm1028 = vcmp.ge.f32.partialorder %v964, 0.0
    %vm1029 = vcmp.ge.f32.partialorder %v965, 0.0
    %vm1030 = vcmp.ge.f32.partialorder %v966, 0.0
    %vm1031 = vcmp.ge.f32.partialorder %v967, 0.0
    %vm1032 = vcmp.ge.f32.partialorder %v968, 0.0
    %vm1033 = vcmp.ge.f32.partialorder %v969, 0.0
    %vm1034 = vcmp.ge.f32.partialorder %v970, 0.0
    %vm1035 = vcmp.ge.f32.partialorder %v971, 0.0
    %vm1036 = vcmp.ge.f32.partialorder %v972, 0.0
    %vm1037 = vcmp.ge.f32.partialorder %v973, 0.0
    %vm1038 = vcmp.ge.f32.partialorder %v974, 0.0
    %vm1039 = vcmp.ge.f32.partialorder %v975, 0.0
    %vm1040 = vcmp.ge.f32.partialorder %v976, 0.0
    %vm1041 = vcmp.ge.f32.partialorder %v977, 0.0
    %vm1042 = vcmp.ge.f32.partialorder %v978, 0.0
    %vm1043 = vcmp.ge.f32.partialorder %v979, 0.0
    %vm1044 = vcmp.ge.f32.partialorder %v980, 0.0
    %vm1045 = vcmp.ge.f32.partialorder %v981, 0.0
    %vm1046 = vcmp.ge.f32.partialorder %v982, 0.0
    %vm1047 = vcmp.ge.f32.partialorder %v983, 0.0
    %vm1048 = vcmp.ge.f32.partialorder %v984, 0.0
    %vm1049 = vcmp.ge.f32.partialorder %v985, 0.0
    %vm1050 = vcmp.ge.f32.partialorder %v986, 0.0
    %vm1051 = vcmp.ge.f32.partialorder %v987, 0.0
    %vm1052 = vcmp.ge.f32.partialorder %v988, 0.0
    %vm1053 = vcmp.ge.f32.partialorder %v989, 0.0
    %vm1054 = vcmp.ge.f32.partialorder %v990, 0.0
    %vm1055 = vcmp.ge.f32.partialorder %v991, 0.0
    %vm1056 = vcmp.ge.f32.partialorder %v992, 0.0
    %vm1057 = vcmp.ge.f32.partialorder %v993, 0.0
    %vm1058 = vcmp.ge.f32.partialorder %v994, 0.0
    %vm1059 = vcmp.ge.f32.partialorder %v995, 0.0
    %vm1060 = vcmp.ge.f32.partialorder %v996, 0.0
    %vm1061 = vcmp.ge.f32.partialorder %v997, 0.0
    %vm1062 = vcmp.ge.f32.partialorder %v998, 0.0
    %vm1063 = vcmp.ge.f32.partialorder %v999, 0.0
    %vm1064 = vcmp.ge.f32.partialorder %v1000, 0.0
    %vm1065 = vcmp.ge.f32.partialorder %v1001, 0.0
    %vm1066 = vcmp.ge.f32.partialorder %v1002, 0.0
    %vm1067 = vcmp.ge.f32.partialorder %v1003, 0.0
    %vm1068 = vcmp.ge.f32.partialorder %v1004, 0.0
    %vm1069 = vcmp.ge.f32.partialorder %v1005, 0.0
    %vm1070 = vcmp.ge.f32.partialorder %v1006, 0.0
    %vm1071 = vcmp.ge.f32.partialorder %v1007, 0.0
    %vm1072 = vcmp.ge.f32.partialorder %v1008, 0.0
    %vm1073 = vcmp.ge.f32.partialorder %v1009, 0.0
    %vm1074 = vcmp.ge.f32.partialorder %v1010, 0.0
    %vm1075 = vcmp.ge.f32.partialorder %v1011, 0.0
    %vm1076 = vcmp.ge.f32.partialorder %v1012, 0.0
    %vm1077 = vcmp.ge.f32.partialorder %v1013, 0.0
    %vm1078 = vcmp.ge.f32.partialorder %v1014, 0.0
    %vm1079 = vcmp.ge.f32.partialorder %v1015, 0.0
    %vm1080 = vcmp.ge.f32.partialorder %v1016, 0.0
    %vm1081 = vcmp.ge.f32.partialorder %v1017, 0.0
    %vm1082 = vcmp.ge.f32.partialorder %v1018, 0.0
    %vm1083 = vcmp.ge.f32.partialorder %v1019, 0.0
    %vm1084 = vcmp.ge.f32.partialorder %v1020, 0.0
    %vm1085 = vcmp.ge.f32.partialorder %v1021, 0.0
    %v1086 = vmul.f32 %v958, 0.2
    %v1087 = vmul.f32 %v959, 0.2
    %v1088 = vmul.f32 %v960, 0.2
    %v1089 = vmul.f32 %v961, 0.2
    %v1090 = vmul.f32 %v962, 0.2
    %v1091 = vmul.f32 %v963, 0.2
    %v1092 = vmul.f32 %v964, 0.2
    %v1093 = vmul.f32 %v965, 0.2
    %v1094 = vmul.f32 %v966, 0.2
    %v1095 = vmul.f32 %v967, 0.2
    %v1096 = vmul.f32 %v968, 0.2
    %v1097 = vmul.f32 %v969, 0.2
    %v1098 = vmul.f32 %v970, 0.2
    %v1099 = vmul.f32 %v971, 0.2
    %v1100 = vmul.f32 %v972, 0.2
    %v1101 = vmul.f32 %v973, 0.2
    %v1102 = vmul.f32 %v974, 0.2
    %v1103 = vmul.f32 %v975, 0.2
    %v1104 = vmul.f32 %v976, 0.2
    %v1105 = vmul.f32 %v977, 0.2
    %v1106 = vmul.f32 %v978, 0.2
    %v1107 = vmul.f32 %v979, 0.2
    %v1108 = vmul.f32 %v980, 0.2
    %v1109 = vmul.f32 %v981, 0.2
    %v1110 = vmul.f32 %v982, 0.2
    %v1111 = vmul.f32 %v983, 0.2
    %v1112 = vmul.f32 %v984, 0.2
    %v1113 = vmul.f32 %v985, 0.2
    %v1114 = vmul.f32 %v986, 0.2
    %v1115 = vmul.f32 %v987, 0.2
    %v1116 = vmul.f32 %v988, 0.2
    %v1117 = vmul.f32 %v989, 0.2
    %v1118 = vmul.f32 %v990, 0.2
    %v1119 = vmul.f32 %v991, 0.2
    %v1120 = vmul.f32 %v992, 0.2
    %v1121 = vmul.f32 %v993, 0.2
    %v1122 = vmul.f32 %v994, 0.2
    %v1123 = vmul.f32 %v995, 0.2
    %v1124 = vmul.f32 %v996, 0.2
    %v1125 = vmul.f32 %v997, 0.2
    %v1126 = vmul.f32 %v998, 0.2
    %v1127 = vmul.f32 %v999, 0.2
    %v1128 = vmul.f32 %v1000, 0.2
    %v1129 = vmul.f32 %v1001, 0.2
    %v1130 = vmul.f32 %v1002, 0.2
    %v1131 = vmul.f32 %v1003, 0.2
    %v1132 = vmul.f32 %v1004, 0.2
    %v1133 = vmul.f32 %v1005, 0.2
    %v1134 = vmul.f32 %v1006, 0.2
    %v1135 = vmul.f32 %v1007, 0.2
    %v1136 = vmul.f32 %v1008, 0.2
    %v1137 = vmul.f32 %v1009, 0.2
    %v1138 = vmul.f32 %v1010, 0.2
    %v1139 = vmul.f32 %v1011, 0.2
    %v1140 = vmul.f32 %v1012, 0.2
    %v1141 = vmul.f32 %v1013, 0.2
    %v1142 = vmul.f32 %v1014, 0.2
    %v1143 = vmul.f32 %v1015, 0.2
    %v1144 = vmul.f32 %v1016, 0.2
    %v1145 = vmul.f32 %v1017, 0.2
    %v1146 = vmul.f32 %v1018, 0.2
    %v1147 = vmul.f32 %v1019, 0.2
    %v1148 = vmul.f32 %v1020, 0.2
    %v1149 = vmul.f32 %v1021, 0.2
    %v1150 = vsel %vm1022, %v958, %v1086
    %v1151 = vsel %vm1023, %v959, %v1087
    %v1152 = vsel %vm1024, %v960, %v1088
    %v1153 = vsel %vm1025, %v961, %v1089
    %v1154 = vsel %vm1026, %v962, %v1090
    %v1155 = vsel %vm1027, %v963, %v1091
    %v1156 = vsel %vm1028, %v964, %v1092
    %v1157 = vsel %vm1029, %v965, %v1093
    %v1158 = vsel %vm1030, %v966, %v1094
    %v1159 = vsel %vm1031, %v967, %v1095
    %v1160 = vsel %vm1032, %v968, %v1096
    %v1161 = vsel %vm1033, %v969, %v1097
    %v1162 = vsel %vm1034, %v970, %v1098
    %v1163 = vsel %vm1035, %v971, %v1099
    %v1164 = vsel %vm1036, %v972, %v1100
    %v1165 = vsel %vm1037, %v973, %v1101
    %v1166 = vsel %vm1038, %v974, %v1102
    %v1167 = vsel %vm1039, %v975, %v1103
    %v1168 = vsel %vm1040, %v976, %v1104
    %v1169 = vsel %vm1041, %v977, %v1105
    %v1170 = vsel %vm1042, %v978, %v1106
    %v1171 = vsel %vm1043, %v979, %v1107
    %v1172 = vsel %vm1044, %v980, %v1108
    %v1173 = vsel %vm1045, %v981, %v1109
    %v1174 = vsel %vm1046, %v982, %v1110
    %v1175 = vsel %vm1047, %v983, %v1111
    %v1176 = vsel %vm1048, %v984, %v1112
    %v1177 = vsel %vm1049, %v985, %v1113
    %v1178 = vsel %vm1050, %v986, %v1114
    %v1179 = vsel %vm1051, %v987, %v1115
    %v1180 = vsel %vm1052, %v988, %v1116
    %v1181 = vsel %vm1053, %v989, %v1117
    %v1182 = vsel %vm1054, %v990, %v1118
    %v1183 = vsel %vm1055, %v991, %v1119
    %v1184 = vsel %vm1056, %v992, %v1120
    %v1185 = vsel %vm1057, %v993, %v1121
    %v1186 = vsel %vm1058, %v994, %v1122
    %v1187 = vsel %vm1059, %v995, %v1123
    %v1188 = vsel %vm1060, %v996, %v1124
    %v1189 = vsel %vm1061, %v997, %v1125
    %v1190 = vsel %vm1062, %v998, %v1126
    %v1191 = vsel %vm1063, %v999, %v1127
    %v1192 = vsel %vm1064, %v1000, %v1128
    %v1193 = vsel %vm1065, %v1001, %v1129
    %v1194 = vsel %vm1066, %v1002, %v1130
    %v1195 = vsel %vm1067, %v1003, %v1131
    %v1196 = vsel %vm1068, %v1004, %v1132
    %v1197 = vsel %vm1069, %v1005, %v1133
    %v1198 = vsel %vm1070, %v1006, %v1134
    %v1199 = vsel %vm1071, %v1007, %v1135
    %v1200 = vsel %vm1072, %v1008, %v1136
    %v1201 = vsel %vm1073, %v1009, %v1137
    %v1202 = vsel %vm1074, %v1010, %v1138
    %v1203 = vsel %vm1075, %v1011, %v1139
    %v1204 = vsel %vm1076, %v1012, %v1140
    %v1205 = vsel %vm1077, %v1013, %v1141
    %v1206 = vsel %vm1078, %v1014, %v1142
    %v1207 = vsel %vm1079, %v1015, %v1143
    %v1208 = vsel %vm1080, %v1016, %v1144
    %v1209 = vsel %vm1081, %v1017, %v1145
    %v1210 = vsel %vm1082, %v1018, %v1146
    %v1211 = vsel %vm1083, %v1019, %v1147
    %v1212 = vsel %vm1084, %v1020, %v1148
    %v1213 = vsel %vm1085, %v1021, %v1149
    %v1214 = vpack.c.bf16 %v1151, %v1150
    %v1215 = vpack.c.bf16 %v1153, %v1152
    %v1216 = vpack.c.bf16 %v1155, %v1154
    %v1217 = vpack.c.bf16 %v1157, %v1156
    %v1218 = vpack.c.bf16 %v1159, %v1158
    %v1219 = vpack.c.bf16 %v1161, %v1160
    %v1220 = vpack.c.bf16 %v1163, %v1162
    %v1221 = vpack.c.bf16 %v1165, %v1164
    %v1222 = vpack.c.bf16 %v1167, %v1166
    %v1223 = vpack.c.bf16 %v1169, %v1168
    %v1224 = vpack.c.bf16 %v1171, %v1170
    %v1225 = vpack.c.bf16 %v1173, %v1172
    %v1226 = vpack.c.bf16 %v1175, %v1174
    %v1227 = vpack.c.bf16 %v1177, %v1176
    %v1228 = vpack.c.bf16 %v1179, %v1178
    %v1229 = vpack.c.bf16 %v1181, %v1180
    %v1230 = vpack.c.bf16 %v1183, %v1182
    %v1231 = vpack.c.bf16 %v1185, %v1184
    %v1232 = vpack.c.bf16 %v1187, %v1186
    %v1233 = vpack.c.bf16 %v1189, %v1188
    %v1234 = vpack.c.bf16 %v1191, %v1190
    %v1235 = vpack.c.bf16 %v1193, %v1192
    %v1236 = vpack.c.bf16 %v1195, %v1194
    %v1237 = vpack.c.bf16 %v1197, %v1196
    %v1238 = vpack.c.bf16 %v1199, %v1198
    %v1239 = vpack.c.bf16 %v1201, %v1200
    %v1240 = vpack.c.bf16 %v1203, %v1202
    %v1241 = vpack.c.bf16 %v1205, %v1204
    %v1242 = vpack.c.bf16 %v1207, %v1206
    %v1243 = vpack.c.bf16 %v1209, %v1208
    %v1244 = vpack.c.bf16 %v1211, %v1210
    %v1245 = vpack.c.bf16 %v1213, %v1212
    %v1278 = vunpack.c.l.b16 %v1214
    %v1279 = vunpack.c.h.b16 %v1214
    %v1280 = vunpack.c.l.b16 %v1215
    %v1281 = vunpack.c.h.b16 %v1215
    %v1282 = vunpack.c.l.b16 %v1216
    %v1283 = vunpack.c.h.b16 %v1216
    %v1284 = vunpack.c.l.b16 %v1217
    %v1285 = vunpack.c.h.b16 %v1217
    %v1286 = vunpack.c.l.b16 %v1218
    %v1287 = vunpack.c.h.b16 %v1218
    %v1288 = vunpack.c.l.b16 %v1219
    %v1289 = vunpack.c.h.b16 %v1219
    %v1290 = vunpack.c.l.b16 %v1220
    %v1291 = vunpack.c.h.b16 %v1220
    %v1292 = vunpack.c.l.b16 %v1221
    %v1293 = vunpack.c.h.b16 %v1221
    %v1294 = vunpack.c.l.b16 %v1222
    %v1295 = vunpack.c.h.b16 %v1222
    %v1296 = vunpack.c.l.b16 %v1223
    %v1297 = vunpack.c.h.b16 %v1223
    %v1298 = vunpack.c.l.b16 %v1224
    %v1299 = vunpack.c.h.b16 %v1224
    %v1300 = vunpack.c.l.b16 %v1225
    %v1301 = vunpack.c.h.b16 %v1225
    %v1302 = vunpack.c.l.b16 %v1226
    %v1303 = vunpack.c.h.b16 %v1226
    %v1304 = vunpack.c.l.b16 %v1227
    %v1305 = vunpack.c.h.b16 %v1227
    %v1306 = vunpack.c.l.b16 %v1228
    %v1307 = vunpack.c.h.b16 %v1228
    %v1308 = vunpack.c.l.b16 %v1229
    %v1309 = vunpack.c.h.b16 %v1229
    %v1310 = vunpack.c.l.b16 %v1230
    %v1311 = vunpack.c.h.b16 %v1230
    %v1312 = vunpack.c.l.b16 %v1231
    %v1313 = vunpack.c.h.b16 %v1231
    %v1314 = vunpack.c.l.b16 %v1232
    %v1315 = vunpack.c.h.b16 %v1232
    %v1316 = vunpack.c.l.b16 %v1233
    %v1317 = vunpack.c.h.b16 %v1233
    %v1318 = vunpack.c.l.b16 %v1234
    %v1319 = vunpack.c.h.b16 %v1234
    %v1320 = vunpack.c.l.b16 %v1235
    %v1321 = vunpack.c.h.b16 %v1235
    %v1322 = vunpack.c.l.b16 %v1236
    %v1323 = vunpack.c.h.b16 %v1236
    %v1324 = vunpack.c.l.b16 %v1237
    %v1325 = vunpack.c.h.b16 %v1237
    %v1326 = vunpack.c.l.b16 %v1238
    %v1327 = vunpack.c.h.b16 %v1238
    %v1328 = vunpack.c.l.b16 %v1239
    %v1329 = vunpack.c.h.b16 %v1239
    %v1330 = vunpack.c.l.b16 %v1240
    %v1331 = vunpack.c.h.b16 %v1240
    %v1332 = vunpack.c.l.b16 %v1241
    %v1333 = vunpack.c.h.b16 %v1241
    %v1334 = vunpack.c.l.b16 %v1242
    %v1335 = vunpack.c.h.b16 %v1242
    %v1336 = vunpack.c.l.b16 %v1243
    %v1337 = vunpack.c.h.b16 %v1243
    %v1338 = vunpack.c.l.b16 %v1244
    %v1339 = vunpack.c.h.b16 %v1244
    %v1340 = vunpack.c.l.b16 %v1245
    %v1341 = vunpack.c.h.b16 %v1245
    %v1342 = vpack.c.b16 %v1278, %v1278
    %v1343 = vpack.c.b16 %v1279, %v1279
    %v1344 = vpack.c.b16 %v1280, %v1280
    %v1345 = vpack.c.b16 %v1281, %v1281
    %v1346 = vpack.c.b16 %v1282, %v1282
    %v1347 = vpack.c.b16 %v1283, %v1283
    %v1348 = vpack.c.b16 %v1284, %v1284
    %v1349 = vpack.c.b16 %v1285, %v1285
    %v1350 = vpack.c.b16 %v1286, %v1286
    %v1351 = vpack.c.b16 %v1287, %v1287
    %v1352 = vpack.c.b16 %v1288, %v1288
    %v1353 = vpack.c.b16 %v1289, %v1289
    %v1354 = vpack.c.b16 %v1290, %v1290
    %v1355 = vpack.c.b16 %v1291, %v1291
    %v1356 = vpack.c.b16 %v1292, %v1292
    %v1357 = vpack.c.b16 %v1293, %v1293
    %v1358 = vpack.c.b16 %v1294, %v1294
    %v1359 = vpack.c.b16 %v1295, %v1295
    %v1360 = vpack.c.b16 %v1296, %v1296
    %v1361 = vpack.c.b16 %v1297, %v1297
    %v1362 = vpack.c.b16 %v1298, %v1298
    %v1363 = vpack.c.b16 %v1299, %v1299
    %v1364 = vpack.c.b16 %v1300, %v1300
    %v1365 = vpack.c.b16 %v1301, %v1301
    %v1366 = vpack.c.b16 %v1302, %v1302
    %v1367 = vpack.c.b16 %v1303, %v1303
    %v1368 = vpack.c.b16 %v1304, %v1304
    %v1369 = vpack.c.b16 %v1305, %v1305
    %v1370 = vpack.c.b16 %v1306, %v1306
    %v1371 = vpack.c.b16 %v1307, %v1307
    %v1372 = vpack.c.b16 %v1308, %v1308
    %v1373 = vpack.c.b16 %v1309, %v1309
    %v1374 = vpack.c.b16 %v1310, %v1310
    %v1375 = vpack.c.b16 %v1311, %v1311
    %v1376 = vpack.c.b16 %v1312, %v1312
    %v1377 = vpack.c.b16 %v1313, %v1313
    %v1378 = vpack.c.b16 %v1314, %v1314
    %v1379 = vpack.c.b16 %v1315, %v1315
    %v1380 = vpack.c.b16 %v1316, %v1316
    %v1381 = vpack.c.b16 %v1317, %v1317
    %v1382 = vpack.c.b16 %v1318, %v1318
    %v1383 = vpack.c.b16 %v1319, %v1319
    %v1384 = vpack.c.b16 %v1320, %v1320
    %v1385 = vpack.c.b16 %v1321, %v1321
    %v1386 = vpack.c.b16 %v1322, %v1322
    %v1387 = vpack.c.b16 %v1323, %v1323
    %v1388 = vpack.c.b16 %v1324, %v1324
    %v1389 = vpack.c.b16 %v1325, %v1325
    %v1390 = vpack.c.b16 %v1326, %v1326
    %v1391 = vpack.c.b16 %v1327, %v1327
    %v1392 = vpack.c.b16 %v1328, %v1328
    %v1393 = vpack.c.b16 %v1329, %v1329
    %v1394 = vpack.c.b16 %v1330, %v1330
    %v1395 = vpack.c.b16 %v1331, %v1331
    %v1396 = vpack.c.b16 %v1332, %v1332
    %v1397 = vpack.c.b16 %v1333, %v1333
    %v1398 = vpack.c.b16 %v1334, %v1334
    %v1399 = vpack.c.b16 %v1335, %v1335
    %v1400 = vpack.c.b16 %v1336, %v1336
    %v1401 = vpack.c.b16 %v1337, %v1337
    %v1402 = vpack.c.b16 %v1338, %v1338
    %v1403 = vpack.c.b16 %v1339, %v1339
    %v1404 = vpack.c.b16 %v1340, %v1340
    %v1405 = vpack.c.b16 %v1341, %v1341
    %1470 = vst [vmem:[%s3] sm:$0xf] %v1342
    %1471 = vst [vmem:[%s3 + $0x4] sm:$0xf] %v1343
    %1472 = vst [vmem:[%s3 + $0x8] sm:$0xf] %v1344
    %1473 = vst [vmem:[%s3 + $0xc] sm:$0xf] %v1345
    %1474 = vst [vmem:[%s3 + $0x10] sm:$0xf] %v1346
    %1475 = vst [vmem:[%s3 + $0x14] sm:$0xf] %v1347
    %1476 = vst [vmem:[%s3 + $0x18] sm:$0xf] %v1348
    %1477 = vst [vmem:[%s3 + $0x1c] sm:$0xf] %v1349
    %1478 = vst [vmem:[%s3 + $0x20] sm:$0xf] %v1350
    %1479 = vst [vmem:[%s3 + $0x24] sm:$0xf] %v1351
    %1480 = vst [vmem:[%s3 + $0x28] sm:$0xf] %v1352
    %1481 = vst [vmem:[%s3 + $0x2c] sm:$0xf] %v1353
    %1482 = vst [vmem:[%s3 + $0x30] sm:$0xf] %v1354
    %1483 = vst [vmem:[%s3 + $0x34] sm:$0xf] %v1355
    %1484 = vst [vmem:[%s3 + $0x38] sm:$0xf] %v1356
    %1485 = vst [vmem:[%s3 + $0x3c] sm:$0xf] %v1357
    %1486 = vst [vmem:[%s3 + $0x40] sm:$0xf] %v1358
    %1487 = vst [vmem:[%s3 + $0x44] sm:$0xf] %v1359
    %1488 = vst [vmem:[%s3 + $0x48] sm:$0xf] %v1360
    %1489 = vst [vmem:[%s3 + $0x4c] sm:$0xf] %v1361
    %1490 = vst [vmem:[%s3 + $0x50] sm:$0xf] %v1362
    %1491 = vst [vmem:[%s3 + $0x54] sm:$0xf] %v1363
    %1492 = vst [vmem:[%s3 + $0x58] sm:$0xf] %v1364
    %1493 = vst [vmem:[%s3 + $0x5c] sm:$0xf] %v1365
    %1494 = vst [vmem:[%s3 + $0x60] sm:$0xf] %v1366
    %1495 = vst [vmem:[%s3 + $0x64] sm:$0xf] %v1367
    %1496 = vst [vmem:[%s3 + $0x68] sm:$0xf] %v1368
    %1497 = vst [vmem:[%s3 + $0x6c] sm:$0xf] %v1369
    %1498 = vst [vmem:[%s3 + $0x70] sm:$0xf] %v1370
    %1499 = vst [vmem:[%s3 + $0x74] sm:$0xf] %v1371
    %1500 = vst [vmem:[%s3 + $0x78] sm:$0xf] %v1372
    %1501 = vst [vmem:[%s3 + $0x7c] sm:$0xf] %v1373
    %1502 = vst [vmem:[%s3 + $0x80] sm:$0xf] %v1374
    %1503 = vst [vmem:[%s3 + $0x84] sm:$0xf] %v1375
    %1504 = vst [vmem:[%s3 + $0x88] sm:$0xf] %v1376
    %1505 = vst [vmem:[%s3 + $0x8c] sm:$0xf] %v1377
    %1506 = vst [vmem:[%s3 + $0x90] sm:$0xf] %v1378
    %1507 = vst [vmem:[%s3 + $0x94] sm:$0xf] %v1379
    %1508 = vst [vmem:[%s3 + $0x98] sm:$0xf] %v1380
    %1509 = vst [vmem:[%s3 + $0x9c] sm:$0xf] %v1381
    %1510 = vst [vmem:[%s3 + $0xa0] sm:$0xf] %v1382
    %1511 = vst [vmem:[%s3 + $0xa4] sm:$0xf] %v1383
    %1512 = vst [vmem:[%s3 + $0xa8] sm:$0xf] %v1384
    %1513 = vst [vmem:[%s3 + $0xac] sm:$0xf] %v1385
    %1514 = vst [vmem:[%s3 + $0xb0] sm:$0xf] %v1386
    %1515 = vst [vmem:[%s3 + $0xb4] sm:$0xf] %v1387
    %1516 = vst [vmem:[%s3 + $0xb8] sm:$0xf] %v1388
    %1517 = vst [vmem:[%s3 + $0xbc] sm:$0xf] %v1389
    %1518 = vst [vmem:[%s3 + $0xc0] sm:$0xf] %v1390
    %1519 = vst [vmem:[%s3 + $0xc4] sm:$0xf] %v1391
    %1520 = vst [vmem:[%s3 + $0xc8] sm:$0xf] %v1392
    %1521 = vst [vmem:[%s3 + $0xcc] sm:$0xf] %v1393
    %1522 = vst [vmem:[%s3 + $0xd0] sm:$0xf] %v1394
    %1523 = vst [vmem:[%s3 + $0xd4] sm:$0xf] %v1395
    %1524 = vst [vmem:[%s3 + $0xd8] sm:$0xf] %v1396
    %1525 = vst [vmem:[%s3 + $0xdc] sm:$0xf] %v1397
    %1526 = vst [vmem:[%s3 + $0xe0] sm:$0xf] %v1398
    %1527 = vst [vmem:[%s3 + $0xe4] sm:$0xf] %v1399
    %1528 = vst [vmem:[%s3 + $0xe8] sm:$0xf] %v1400
    %1529 = vst [vmem:[%s3 + $0xec] sm:$0xf] %v1401
    %1530 = vst [vmem:[%s3 + $0xf0] sm:$0xf] %v1402
    %1531 = vst [vmem:[%s3 + $0xf4] sm:$0xf] %v1403
    %1532 = vst [vmem:[%s3 + $0xf8] sm:$0xf] %v1404
    %1533 = vst [vmem:[%s3 + $0xfc] sm:$0xf] %v1405
  $region21: #{nlayer_discriminator_forward.11} parent=0 // pred_fallthru
    _
  // Predicated region
  $region22: #{nlayer_discriminator_forward.11} parent=0 // pred_check
    _
  $region23: #{nlayer_discriminator_forward.11} parent=0 // pred_check_branch
    %1535 = sbr.rel (0) target = $region25
  $region24: #{nlayer_discriminator_forward.11} parent=0 // pred_region
    _
  $region25: #{nlayer_discriminator_forward.11} parent=0 // pred_fallthru
    _
  // Predicated region
  $region26: #{nlayer_discriminator_forward.11} parent=0 // pred_check
    _
  $region27: #{nlayer_discriminator_forward.11} parent=0 // pred_check_branch
    %1537 = sbr.rel (0) target = $region29
  $region28: #{nlayer_discriminator_forward.11} parent=0 // pred_region
    _
  $region29: #{nlayer_discriminator_forward.11} parent=0 // pred_fallthru
    _

// kernel: nlayer_discriminator_forward.12
$region0: #{nlayer_discriminator_forward.12}
  #allocation0 [shape = 'u32[]', space=smem, size = 0x4, offset = 0x4, fixed_abs, tag = 'smem constant byte address 0x4 - core index']
  #allocation1 [shape = 'u32[144,128]{1,0:T(1,128)}', space=vmem, size = 0x12000, scoped, tag = 'internal scratch']
  #allocation2 [shape = 'f32[128,128]{1,0:T(8,128)}', space=vmem, size = 0x10000, scoped, tag = 'scratch operand']
  %s0 = inlined_call_operand.vmem [shape: bf16[128,128], index: 0, kind: input, shape index: {}]
  %s1 = inlined_call_operand.vmem [shape: bf16[128,128], index: 1, kind: input, shape index: {}]
  %s2 = inlined_call_operand.vmem [shape: f32[1,128], index: 2, kind: input, shape index: {}]
  %s3 = inlined_call_operand.vmem [shape: bf16[128,128], index: 3, kind: output, shape index: {}]
  %s4 = sld [smem:[#allocation0]]
  $region30: #{nlayer_discriminator_forward.12} parent=0
    _
  %s6 = ssub.s32 1, %s4
  %s7 = scalar_select 0, %s6, %s4
  // Predicated region
  $region2: #{nlayer_discriminator_forward.12} parent=0 // pred_check
    _
  $region3: #{nlayer_discriminator_forward.12} parent=0 // pred_check_branch
    %9 = sbr.rel (0) target = $region5
  $region4: #{nlayer_discriminator_forward.12} parent=0 // pred_region
    _
  $region5: #{nlayer_discriminator_forward.12} parent=0 // pred_fallthru
    _
  // Predicated region
  $region6: #{nlayer_discriminator_forward.12} parent=0 // pred_check
    _
  $region7: #{nlayer_discriminator_forward.12} parent=0 // pred_check_branch
    %11 = sbr.rel (0) target = $region9
  $region8: #{nlayer_discriminator_forward.12} parent=0 // pred_region
    _
  $region9: #{nlayer_discriminator_forward.12} parent=0 // pred_fallthru
    _
  // Predicated region
  $region10: #{nlayer_discriminator_forward.12} parent=0 // pred_check
    _
  $region11: #{nlayer_discriminator_forward.12} parent=0 // pred_check_branch
    %13 = sbr.rel (0) target = $region13
  $region12: #{nlayer_discriminator_forward.12} parent=0 // pred_region
    _
  $region13: #{nlayer_discriminator_forward.12} parent=0 // pred_fallthru
    _
  %p15 = scmp.eq.s32.totalorder 0, 0
  // Predicated region
  $region14: #{nlayer_discriminator_forward.12} parent=0 // pred_check
    %p16 = pneg %p15
  $region15: #{nlayer_discriminator_forward.12} parent=0 // pred_check_branch
    %18 = sbr.rel (%p16) target = $region17
  $region16: #{nlayer_discriminator_forward.12} parent=0 // pred_region
    %19 = vst [vmem:[#allocation2] sm:$0xff] 0.0
    %20 = vst [vmem:[#allocation2 + $0x8] sm:$0xff] 0.0
    %21 = vst [vmem:[#allocation2 + $0x10] sm:$0xff] 0.0
    %22 = vst [vmem:[#allocation2 + $0x18] sm:$0xff] 0.0
    %23 = vst [vmem:[#allocation2 + $0x20] sm:$0xff] 0.0
    %24 = vst [vmem:[#allocation2 + $0x28] sm:$0xff] 0.0
    %25 = vst [vmem:[#allocation2 + $0x30] sm:$0xff] 0.0
    %26 = vst [vmem:[#allocation2 + $0x38] sm:$0xff] 0.0
    %27 = vst [vmem:[#allocation2 + $0x40] sm:$0xff] 0.0
    %28 = vst [vmem:[#allocation2 + $0x48] sm:$0xff] 0.0
    %29 = vst [vmem:[#allocation2 + $0x50] sm:$0xff] 0.0
    %30 = vst [vmem:[#allocation2 + $0x58] sm:$0xff] 0.0
    %31 = vst [vmem:[#allocation2 + $0x60] sm:$0xff] 0.0
    %32 = vst [vmem:[#allocation2 + $0x68] sm:$0xff] 0.0
    %33 = vst [vmem:[#allocation2 + $0x70] sm:$0xff] 0.0
    %34 = vst [vmem:[#allocation2 + $0x78] sm:$0xff] 0.0
  $region17: #{nlayer_discriminator_forward.12} parent=0 // pred_fallthru
    _
  %v35 = vld [vmem:[#allocation2] sm:$0xff]
  %v36 = vld [vmem:[#allocation2 + $0x8] sm:$0xff]
  %v37 = vld [vmem:[#allocation2 + $0x10] sm:$0xff]
  %v38 = vld [vmem:[#allocation2 + $0x18] sm:$0xff]
  %v39 = vld [vmem:[#allocation2 + $0x20] sm:$0xff]
  %v40 = vld [vmem:[#allocation2 + $0x28] sm:$0xff]
  %v41 = vld [vmem:[#allocation2 + $0x30] sm:$0xff]
  %v42 = vld [vmem:[#allocation2 + $0x38] sm:$0xff]
  %v43 = vld [vmem:[#allocation2 + $0x40] sm:$0xff]
  %v44 = vld [vmem:[#allocation2 + $0x48] sm:$0xff]
  %v45 = vld [vmem:[#allocation2 + $0x50] sm:$0xff]
  %v46 = vld [vmem:[#allocation2 + $0x58] sm:$0xff]
  %v47 = vld [vmem:[#allocation2 + $0x60] sm:$0xff]
  %v48 = vld [vmem:[#allocation2 + $0x68] sm:$0xff]
  %v49 = vld [vmem:[#allocation2 + $0x70] sm:$0xff]
  %v50 = vld [vmem:[#allocation2 + $0x78] sm:$0xff]
  %v51 = vld [vmem:[%s0] sm:$0xf]
  %v52 = vld [vmem:[%s0 + $0x4] sm:$0xf]
  %v53 = vld [vmem:[%s0 + $0x8] sm:$0xf]
  %v54 = vld [vmem:[%s0 + $0xc] sm:$0xf]
  %v55 = vld [vmem:[%s0 + $0x10] sm:$0xf]
  %v56 = vld [vmem:[%s0 + $0x14] sm:$0xf]
  %v57 = vld [vmem:[%s0 + $0x18] sm:$0xf]
  %v58 = vld [vmem:[%s0 + $0x1c] sm:$0xf]
  %v59 = vld [vmem:[%s0 + $0x20] sm:$0xf]
  %v60 = vld [vmem:[%s0 + $0x24] sm:$0xf]
  %v61 = vld [vmem:[%s0 + $0x28] sm:$0xf]
  %v62 = vld [vmem:[%s0 + $0x2c] sm:$0xf]
  %v63 = vld [vmem:[%s0 + $0x30] sm:$0xf]
  %v64 = vld [vmem:[%s0 + $0x34] sm:$0xf]
  %v65 = vld [vmem:[%s0 + $0x38] sm:$0xf]
  %v66 = vld [vmem:[%s0 + $0x3c] sm:$0xf]
  %v67 = vld [vmem:[%s1] sm:$0xf]
  %v68 = vld [vmem:[%s1 + $0x4] sm:$0xf]
  %v69 = vld [vmem:[%s1 + $0x8] sm:$0xf]
  %v70 = vld [vmem:[%s1 + $0xc] sm:$0xf]
  %v71 = vld [vmem:[%s1 + $0x10] sm:$0xf]
  %v72 = vld [vmem:[%s1 + $0x14] sm:$0xf]
  %v73 = vld [vmem:[%s1 + $0x18] sm:$0xf]
  %v74 = vld [vmem:[%s1 + $0x1c] sm:$0xf]
  %v75 = vld [vmem:[%s1 + $0x20] sm:$0xf]
  %v76 = vld [vmem:[%s1 + $0x24] sm:$0xf]
  %v77 = vld [vmem:[%s1 + $0x28] sm:$0xf]
  %v78 = vld [vmem:[%s1 + $0x2c] sm:$0xf]
  %v79 = vld [vmem:[%s1 + $0x30] sm:$0xf]
  %v80 = vld [vmem:[%s1 + $0x34] sm:$0xf]
  %v81 = vld [vmem:[%s1 + $0x38] sm:$0xf]
  %v82 = vld [vmem:[%s1 + $0x3c] sm:$0xf]
  %v99 = vunpack.c.l.b16 %v51
  %v100 = vunpack.c.l.b16 %v52
  %v101 = vunpack.c.l.b16 %v53
  %v102 = vunpack.c.l.b16 %v54
  %v103 = vunpack.c.l.b16 %v55
  %v104 = vunpack.c.l.b16 %v56
  %v105 = vunpack.c.l.b16 %v57
  %v106 = vunpack.c.l.b16 %v58
  %v107 = vunpack.c.l.b16 %v59
  %v108 = vunpack.c.l.b16 %v60
  %v109 = vunpack.c.l.b16 %v61
  %v110 = vunpack.c.l.b16 %v62
  %v111 = vunpack.c.l.b16 %v63
  %v112 = vunpack.c.l.b16 %v64
  %v113 = vunpack.c.l.b16 %v65
  %v114 = vunpack.c.l.b16 %v66
  %v115 = vpack.c.b16 %v100, %v99
  %v116 = vpack.c.b16 %v102, %v101
  %v117 = vpack.c.b16 %v104, %v103
  %v118 = vpack.c.b16 %v106, %v105
  %v119 = vpack.c.b16 %v108, %v107
  %v120 = vpack.c.b16 %v110, %v109
  %v121 = vpack.c.b16 %v112, %v111
  %v122 = vpack.c.b16 %v114, %v113
  %v147 = vunpack.c.l.b16 %v67
  %v148 = vunpack.c.l.b16 %v68
  %v149 = vunpack.c.l.b16 %v69
  %v150 = vunpack.c.l.b16 %v70
  %v151 = vunpack.c.l.b16 %v71
  %v152 = vunpack.c.l.b16 %v72
  %v153 = vunpack.c.l.b16 %v73
  %v154 = vunpack.c.l.b16 %v74
  %v155 = vunpack.c.l.b16 %v75
  %v156 = vunpack.c.l.b16 %v76
  %v157 = vunpack.c.l.b16 %v77
  %v158 = vunpack.c.l.b16 %v78
  %v159 = vunpack.c.l.b16 %v79
  %v160 = vunpack.c.l.b16 %v80
  %v161 = vunpack.c.l.b16 %v81
  %v162 = vunpack.c.l.b16 %v82
  %v163 = vpack.c.b16 %v148, %v147
  %v164 = vpack.c.b16 %v150, %v149
  %v165 = vpack.c.b16 %v152, %v151
  %v166 = vpack.c.b16 %v154, %v153
  %v167 = vpack.c.b16 %v156, %v155
  %v168 = vpack.c.b16 %v158, %v157
  %v169 = vpack.c.b16 %v160, %v159
  %v170 = vpack.c.b16 %v162, %v161
  %179 = vmatprep.subr.bf16.mxu0 0
  %180 = vmatpush1.bf16.msra.mxu0 %v163
  %181 = vmatprep.subr.bf16.mxu0 0
  %182 = vmatpush1.bf16.msra.mxu0 %v164
  %183 = vmatprep.subr.bf16.mxu0 0
  %184 = vmatpush1.bf16.msra.mxu0 %v165
  %185 = vmatprep.subr.bf16.mxu0 0
  %186 = vmatpush1.bf16.msra.mxu0 %v166
  %187 = vmatprep.subr.bf16.mxu0 0
  %188 = vmatpush1.bf16.msra.mxu0 %v167
  %189 = vmatprep.subr.bf16.mxu0 0
  %190 = vmatpush1.bf16.msra.mxu0 %v168
  %191 = vmatprep.subr.bf16.mxu0 0
  %192 = vmatpush1.bf16.msra.mxu0 %v169
  %193 = vmatprep.subr.bf16.mxu0 0
  %194 = vmatpush1.bf16.msra.mxu0 %v170
  %195 = vmatprep.subr.bf16.mxu0 0
  %196 = vmatpush1.bf16.msra.mxu0 0
  %197 = vmatprep.subr.bf16.mxu0 0
  %198 = vmatpush1.bf16.msra.mxu0 0
  %199 = vmatprep.subr.bf16.mxu0 0
  %200 = vmatpush1.bf16.msra.mxu0 0
  %201 = vmatprep.subr.bf16.mxu0 0
  %202 = vmatpush1.bf16.msra.mxu0 0
  %203 = vmatprep.subr.bf16.mxu0 0
  %204 = vmatpush1.bf16.msra.mxu0 0
  %205 = vmatprep.subr.bf16.mxu0 0
  %206 = vmatpush1.bf16.msra.mxu0 0
  %207 = vmatprep.subr.bf16.mxu0 0
  %208 = vmatpush1.bf16.msra.mxu0 0
  %209 = vmatprep.subr.bf16.mxu0 0
  %210 = vmatpush1.bf16.msra.mxu0 0
  %211 = vmatprep.mubr.bf16.mxu0 0
  %212 = vmatmul.mubr.bf16.gmra.mrb[0].mxu0 %v115
  %v213 = vpop.f32.mrb[0].mxu0
  %v214 = vadd.f32 0.0, %v213
  %v215 = vpop.f32.mrb[0].mxu0
  %v216 = vpop.f32.mrb[0].mxu0
  %v217 = vadd.f32 0.0, %v216
  %v218 = vpop.f32.mrb[0].mxu0
  %219 = vmatprep.mubr.bf16.mxu0 0
  %220 = vmatmul.mubr.bf16.gmra.mrb[0].mxu0 %v116
  %v221 = vpop.f32.mrb[0].mxu0
  %v222 = vadd.f32 0.0, %v221
  %v223 = vpop.f32.mrb[0].mxu0
  %v224 = vpop.f32.mrb[0].mxu0
  %v225 = vadd.f32 0.0, %v224
  %v226 = vpop.f32.mrb[0].mxu0
  %227 = vmatprep.mubr.bf16.mxu0 0
  %228 = vmatmul.mubr.bf16.gmra.mrb[0].mxu0 %v117
  %v229 = vpop.f32.mrb[0].mxu0
  %v230 = vadd.f32 0.0, %v229
  %v231 = vpop.f32.mrb[0].mxu0
  %v232 = vpop.f32.mrb[0].mxu0
  %v233 = vadd.f32 0.0, %v232
  %v234 = vpop.f32.mrb[0].mxu0
  %235 = vmatprep.mubr.bf16.mxu0 0
  %236 = vmatmul.mubr.bf16.gmra.mrb[0].mxu0 %v118
  %v237 = vpop.f32.mrb[0].mxu0
  %v238 = vadd.f32 0.0, %v237
  %v239 = vpop.f32.mrb[0].mxu0
  %v240 = vpop.f32.mrb[0].mxu0
  %v241 = vadd.f32 0.0, %v240
  %v242 = vpop.f32.mrb[0].mxu0
  %243 = vmatprep.mubr.bf16.mxu0 0
  %244 = vmatmul.mubr.bf16.gmra.mrb[0].mxu0 %v119
  %v245 = vpop.f32.mrb[0].mxu0
  %v246 = vadd.f32 0.0, %v245
  %v247 = vpop.f32.mrb[0].mxu0
  %v248 = vpop.f32.mrb[0].mxu0
  %v249 = vadd.f32 0.0, %v248
  %v250 = vpop.f32.mrb[0].mxu0
  %251 = vmatprep.mubr.bf16.mxu0 0
  %252 = vmatmul.mubr.bf16.gmra.mrb[0].mxu0 %v120
  %v253 = vpop.f32.mrb[0].mxu0
  %v254 = vadd.f32 0.0, %v253
  %v255 = vpop.f32.mrb[0].mxu0
  %v256 = vpop.f32.mrb[0].mxu0
  %v257 = vadd.f32 0.0, %v256
  %v258 = vpop.f32.mrb[0].mxu0
  %259 = vmatprep.mubr.bf16.mxu0 0
  %260 = vmatmul.mubr.bf16.gmra.mrb[0].mxu0 %v121
  %v261 = vpop.f32.mrb[0].mxu0
  %v262 = vadd.f32 0.0, %v261
  %v263 = vpop.f32.mrb[0].mxu0
  %v264 = vpop.f32.mrb[0].mxu0
  %v265 = vadd.f32 0.0, %v264
  %v266 = vpop.f32.mrb[0].mxu0
  %267 = vmatprep.mubr.bf16.mxu0 0
  %268 = vmatmul.mubr.bf16.gmra.mrb[0].mxu0 %v122
  %v269 = vpop.f32.mrb[0].mxu0
  %v270 = vadd.f32 0.0, %v269
  %v271 = vpop.f32.mrb[0].mxu0
  %v272 = vpop.f32.mrb[0].mxu0
  %v273 = vadd.f32 0.0, %v272
  %v274 = vpop.f32.mrb[0].mxu0
  %275 = vdwg.mxu0
  %v276 = vadd.f32 %v35, %v214
  %v277 = vadd.f32 %v36, %v217
  %v278 = vadd.f32 %v37, %v222
  %v279 = vadd.f32 %v38, %v225
  %v280 = vadd.f32 %v39, %v230
  %v281 = vadd.f32 %v40, %v233
  %v282 = vadd.f32 %v41, %v238
  %v283 = vadd.f32 %v42, %v241
  %v284 = vadd.f32 %v43, %v246
  %v285 = vadd.f32 %v44, %v249
  %v286 = vadd.f32 %v45, %v254
  %v287 = vadd.f32 %v46, %v257
  %v288 = vadd.f32 %v47, %v262
  %v289 = vadd.f32 %v48, %v265
  %v290 = vadd.f32 %v49, %v270
  %v291 = vadd.f32 %v50, %v273
  %292 = vst [vmem:[#allocation2] sm:$0xff] %v276
  %293 = vst [vmem:[#allocation2 + $0x8] sm:$0xff] %v277
  %294 = vst [vmem:[#allocation2 + $0x10] sm:$0xff] %v278
  %295 = vst [vmem:[#allocation2 + $0x18] sm:$0xff] %v279
  %296 = vst [vmem:[#allocation2 + $0x20] sm:$0xff] %v280
  %297 = vst [vmem:[#allocation2 + $0x28] sm:$0xff] %v281
  %298 = vst [vmem:[#allocation2 + $0x30] sm:$0xff] %v282
  %299 = vst [vmem:[#allocation2 + $0x38] sm:$0xff] %v283
  %300 = vst [vmem:[#allocation2 + $0x40] sm:$0xff] %v284
  %301 = vst [vmem:[#allocation2 + $0x48] sm:$0xff] %v285
  %302 = vst [vmem:[#allocation2 + $0x50] sm:$0xff] %v286
  %303 = vst [vmem:[#allocation2 + $0x58] sm:$0xff] %v287
  %304 = vst [vmem:[#allocation2 + $0x60] sm:$0xff] %v288
  %305 = vst [vmem:[#allocation2 + $0x68] sm:$0xff] %v289
  %306 = vst [vmem:[#allocation2 + $0x70] sm:$0xff] %v290
  %307 = vst [vmem:[#allocation2 + $0x78] sm:$0xff] %v291
  // Predicated region
  $region18: #{nlayer_discriminator_forward.12} parent=0 // pred_check
    %p308 = pneg %p15
  $region19: #{nlayer_discriminator_forward.12} parent=0 // pred_check_branch
    %310 = sbr.rel (%p308) target = $region21
  $region20: #{nlayer_discriminator_forward.12} parent=0 // pred_region
    %v311 = vld [vmem:[#allocation2] sm:$0xff]
    %v312 = vld [vmem:[#allocation2 + $0x8] sm:$0xff]
    %v313 = vld [vmem:[#allocation2 + $0x10] sm:$0xff]
    %v314 = vld [vmem:[#allocation2 + $0x18] sm:$0xff]
    %v315 = vld [vmem:[#allocation2 + $0x20] sm:$0xff]
    %v316 = vld [vmem:[#allocation2 + $0x28] sm:$0xff]
    %v317 = vld [vmem:[#allocation2 + $0x30] sm:$0xff]
    %v318 = vld [vmem:[#allocation2 + $0x38] sm:$0xff]
    %v319 = vld [vmem:[#allocation2 + $0x40] sm:$0xff]
    %v320 = vld [vmem:[#allocation2 + $0x48] sm:$0xff]
    %v321 = vld [vmem:[#allocation2 + $0x50] sm:$0xff]
    %v322 = vld [vmem:[#allocation2 + $0x58] sm:$0xff]
    %v323 = vld [vmem:[#allocation2 + $0x60] sm:$0xff]
    %v324 = vld [vmem:[#allocation2 + $0x68] sm:$0xff]
    %v325 = vld [vmem:[#allocation2 + $0x70] sm:$0xff]
    %v326 = vld [vmem:[#allocation2 + $0x78] sm:$0xff]
    %v327 = vld [vmem:[%s2] sm:$0x1]
    %v329 = vlaneseq
    %v330 = vshrl.u32 %v329, 7
    %v331 = vsub.s32 0, %v330
    %v332 = vrot.slane %v327, %v331
    %v334 = vadd.f32 %v311, %v332
    %v335 = vadd.f32 %v312, %v332
    %v336 = vadd.f32 %v313, %v332
    %v337 = vadd.f32 %v314, %v332
    %v338 = vadd.f32 %v315, %v332
    %v339 = vadd.f32 %v316, %v332
    %v340 = vadd.f32 %v317, %v332
    %v341 = vadd.f32 %v318, %v332
    %v342 = vadd.f32 %v319, %v332
    %v343 = vadd.f32 %v320, %v332
    %v344 = vadd.f32 %v321, %v332
    %v345 = vadd.f32 %v322, %v332
    %v346 = vadd.f32 %v323, %v332
    %v347 = vadd.f32 %v324, %v332
    %v348 = vadd.f32 %v325, %v332
    %v349 = vadd.f32 %v326, %v332
    %v350 = vpack.c.bf16 %v335, %v334
    %v351 = vpack.c.bf16 %v337, %v336
    %v352 = vpack.c.bf16 %v339, %v338
    %v353 = vpack.c.bf16 %v341, %v340
    %v354 = vpack.c.bf16 %v343, %v342
    %v355 = vpack.c.bf16 %v345, %v344
    %v356 = vpack.c.bf16 %v347, %v346
    %v357 = vpack.c.bf16 %v349, %v348
    %v366 = vunpack.c.l.b16 %v350
    %v367 = vunpack.c.h.b16 %v350
    %v368 = vunpack.c.l.b16 %v351
    %v369 = vunpack.c.h.b16 %v351
    %v370 = vunpack.c.l.b16 %v352
    %v371 = vunpack.c.h.b16 %v352
    %v372 = vunpack.c.l.b16 %v353
    %v373 = vunpack.c.h.b16 %v353
    %v374 = vunpack.c.l.b16 %v354
    %v375 = vunpack.c.h.b16 %v354
    %v376 = vunpack.c.l.b16 %v355
    %v377 = vunpack.c.h.b16 %v355
    %v378 = vunpack.c.l.b16 %v356
    %v379 = vunpack.c.h.b16 %v356
    %v380 = vunpack.c.l.b16 %v357
    %v381 = vunpack.c.h.b16 %v357
    %v382 = vpack.c.b16 %v366, %v366
    %v383 = vpack.c.b16 %v367, %v367
    %v384 = vpack.c.b16 %v368, %v368
    %v385 = vpack.c.b16 %v369, %v369
    %v386 = vpack.c.b16 %v370, %v370
    %v387 = vpack.c.b16 %v371, %v371
    %v388 = vpack.c.b16 %v372, %v372
    %v389 = vpack.c.b16 %v373, %v373
    %v390 = vpack.c.b16 %v374, %v374
    %v391 = vpack.c.b16 %v375, %v375
    %v392 = vpack.c.b16 %v376, %v376
    %v393 = vpack.c.b16 %v377, %v377
    %v394 = vpack.c.b16 %v378, %v378
    %v395 = vpack.c.b16 %v379, %v379
    %v396 = vpack.c.b16 %v380, %v380
    %v397 = vpack.c.b16 %v381, %v381
    %414 = vst [vmem:[%s3] sm:$0xf] %v382
    %415 = vst [vmem:[%s3 + $0x4] sm:$0xf] %v383
    %416 = vst [vmem:[%s3 + $0x8] sm:$0xf] %v384
    %417 = vst [vmem:[%s3 + $0xc] sm:$0xf] %v385
    %418 = vst [vmem:[%s3 + $0x10] sm:$0xf] %v386
    %419 = vst [vmem:[%s3 + $0x14] sm:$0xf] %v387
    %420 = vst [vmem:[%s3 + $0x18] sm:$0xf] %v388
    %421 = vst [vmem:[%s3 + $0x1c] sm:$0xf] %v389
    %422 = vst [vmem:[%s3 + $0x20] sm:$0xf] %v390
    %423 = vst [vmem:[%s3 + $0x24] sm:$0xf] %v391
    %424 = vst [vmem:[%s3 + $0x28] sm:$0xf] %v392
    %425 = vst [vmem:[%s3 + $0x2c] sm:$0xf] %v393
    %426 = vst [vmem:[%s3 + $0x30] sm:$0xf] %v394
    %427 = vst [vmem:[%s3 + $0x34] sm:$0xf] %v395
    %428 = vst [vmem:[%s3 + $0x38] sm:$0xf] %v396
    %429 = vst [vmem:[%s3 + $0x3c] sm:$0xf] %v397
  $region21: #{nlayer_discriminator_forward.12} parent=0 // pred_fallthru
    _
  // Predicated region
  $region22: #{nlayer_discriminator_forward.12} parent=0 // pred_check
    _
  $region23: #{nlayer_discriminator_forward.12} parent=0 // pred_check_branch
    %431 = sbr.rel (0) target = $region25
  $region24: #{nlayer_discriminator_forward.12} parent=0 // pred_region
    _
  $region25: #{nlayer_discriminator_forward.12} parent=0 // pred_fallthru
    _
  // Predicated region
  $region26: #{nlayer_discriminator_forward.12} parent=0 // pred_check
    _
  $region27: #{nlayer_discriminator_forward.12} parent=0 // pred_check_branch
    %433 = sbr.rel (0) target = $region29
  $region28: #{nlayer_discriminator_forward.12} parent=0 // pred_region
    _
  $region29: #{nlayer_discriminator_forward.12} parent=0 // pred_fallthru
    _

// kernel: nlayer_discriminator_forward.13
$region0: #{nlayer_discriminator_forward.13}
  #allocation0 [shape = 'u32[]', space=smem, size = 0x4, offset = 0x4, fixed_abs, tag = 'smem constant byte address 0x4 - core index']
  #allocation1 [shape = 'u32[144,128]{1,0:T(1,128)}', space=vmem, size = 0x12000, scoped, tag = 'internal scratch']
  %s0 = inlined_call_operand.vmem [shape: bf16[128,128], index: 0, kind: input, shape index: {}]
  %s1 = inlined_call_operand.vmem [shape: f32[1,128], index: 1, kind: output, shape index: {0}]
  %s2 = inlined_call_operand.vmem [shape: f32[1,128], index: 2, kind: output, shape index: {1}]
  %3 = xla_tuple %s1, %s2
  %s4 = sld [smem:[#allocation0]]
  $region26: #{nlayer_discriminator_forward.13} parent=0
    _
  %s6 = ssub.s32 1, %s4
  %s7 = scalar_select 0, %s6, %s4
  // Predicated region
  $region2: #{nlayer_discriminator_forward.13} parent=0 // pred_check
    _
  $region3: #{nlayer_discriminator_forward.13} parent=0 // pred_check_branch
    %9 = sbr.rel (0) target = $region5
  $region4: #{nlayer_discriminator_forward.13} parent=0 // pred_region
    _
  $region5: #{nlayer_discriminator_forward.13} parent=0 // pred_fallthru
    _
  %p10 = scmp.eq.s32.totalorder 0, 0
  // Predicated region
  $region6: #{nlayer_discriminator_forward.13} parent=0 // pred_check
    %p11 = pneg %p10
  $region7: #{nlayer_discriminator_forward.13} parent=0 // pred_check_branch
    %13 = sbr.rel (%p11) target = $region9
  $region8: #{nlayer_discriminator_forward.13} parent=0 // pred_region
    %14 = vst [vmem:[%s1] sm:$0x1] 0.0
    %15 = vst [vmem:[%s2] sm:$0x1] 0.0
  $region9: #{nlayer_discriminator_forward.13} parent=0 // pred_fallthru
    _
  %v16 = vld [vmem:[%s0] sm:$0xf]
  %v17 = vld [vmem:[%s0 + $0x4] sm:$0xf]
  %v18 = vld [vmem:[%s0 + $0x8] sm:$0xf]
  %v19 = vld [vmem:[%s0 + $0xc] sm:$0xf]
  %v20 = vld [vmem:[%s0 + $0x10] sm:$0xf]
  %v21 = vld [vmem:[%s0 + $0x14] sm:$0xf]
  %v22 = vld [vmem:[%s0 + $0x18] sm:$0xf]
  %v23 = vld [vmem:[%s0 + $0x1c] sm:$0xf]
  %v24 = vld [vmem:[%s0 + $0x20] sm:$0xf]
  %v25 = vld [vmem:[%s0 + $0x24] sm:$0xf]
  %v26 = vld [vmem:[%s0 + $0x28] sm:$0xf]
  %v27 = vld [vmem:[%s0 + $0x2c] sm:$0xf]
  %v28 = vld [vmem:[%s0 + $0x30] sm:$0xf]
  %v29 = vld [vmem:[%s0 + $0x34] sm:$0xf]
  %v30 = vld [vmem:[%s0 + $0x38] sm:$0xf]
  %v31 = vld [vmem:[%s0 + $0x3c] sm:$0xf]
  %v32 = vunpack.c.l.bf16 %v16
  %v33 = vunpack.c.l.bf16 %v17
  %v34 = vunpack.c.l.bf16 %v18
  %v35 = vunpack.c.l.bf16 %v19
  %v36 = vunpack.c.l.bf16 %v20
  %v37 = vunpack.c.l.bf16 %v21
  %v38 = vunpack.c.l.bf16 %v22
  %v39 = vunpack.c.l.bf16 %v23
  %v40 = vunpack.c.l.bf16 %v24
  %v41 = vunpack.c.l.bf16 %v25
  %v42 = vunpack.c.l.bf16 %v26
  %v43 = vunpack.c.l.bf16 %v27
  %v44 = vunpack.c.l.bf16 %v28
  %v45 = vunpack.c.l.bf16 %v29
  %v46 = vunpack.c.l.bf16 %v30
  %v47 = vunpack.c.l.bf16 %v31
  %v48 = vld [vmem:[%s1] sm:$0x1]
  %v49 = vadd.f32 %v32, %v33
  %v50 = vadd.f32 %v49, %v34
  %v51 = vadd.f32 %v50, %v35
  %v52 = vadd.f32 %v51, %v36
  %v53 = vadd.f32 %v52, %v37
  %v54 = vadd.f32 %v53, %v38
  %v55 = vadd.f32 %v54, %v39
  %v56 = vadd.f32 %v55, %v40
  %v57 = vadd.f32 %v56, %v41
  %v58 = vadd.f32 %v57, %v42
  %v59 = vadd.f32 %v58, %v43
  %v60 = vadd.f32 %v59, %v44
  %v61 = vadd.f32 %v60, %v45
  %v62 = vadd.f32 %v61, %v46
  %v63 = vadd.f32 %v62, %v47
  %v64 = vrot.slane %v63, 4
  %v65 = vadd.f32 %v63, %v64
  %v66 = vrot.slane %v65, 2
  %v67 = vadd.f32 %v65, %v66
  %v68 = vrot.slane %v67, 1
  %v69 = vadd.f32 %v67, %v68
  %v70 = vadd.f32 %v48, %v69
  %71 = vst [vmem:[%s1] sm:$0x1] %v70
  %v72 = vld [vmem:[%s2] sm:$0x1]
  %v73 = vmul.f32 %v32, %v32
  %v74 = vmul.f32 %v33, %v33
  %v75 = vmul.f32 %v34, %v34
  %v76 = vmul.f32 %v35, %v35
  %v77 = vmul.f32 %v36, %v36
  %v78 = vmul.f32 %v37, %v37
  %v79 = vmul.f32 %v38, %v38
  %v80 = vmul.f32 %v39, %v39
  %v81 = vmul.f32 %v40, %v40
  %v82 = vmul.f32 %v41, %v41
  %v83 = vmul.f32 %v42, %v42
  %v84 = vmul.f32 %v43, %v43
  %v85 = vmul.f32 %v44, %v44
  %v86 = vmul.f32 %v45, %v45
  %v87 = vmul.f32 %v46, %v46
  %v88 = vmul.f32 %v47, %v47
  %v89 = vadd.f32 %v73, %v74
  %v90 = vadd.f32 %v89, %v75
  %v91 = vadd.f32 %v90, %v76
  %v92 = vadd.f32 %v91, %v77
  %v93 = vadd.f32 %v92, %v78
  %v94 = vadd.f32 %v93, %v79
  %v95 = vadd.f32 %v94, %v80
  %v96 = vadd.f32 %v95, %v81
  %v97 = vadd.f32 %v96, %v82
  %v98 = vadd.f32 %v97, %v83
  %v99 = vadd.f32 %v98, %v84
  %v100 = vadd.f32 %v99, %v85
  %v101 = vadd.f32 %v100, %v86
  %v102 = vadd.f32 %v101, %v87
  %v103 = vadd.f32 %v102, %v88
  %v104 = vrot.slane %v103, 4
  %v105 = vadd.f32 %v103, %v104
  %v106 = vrot.slane %v105, 2
  %v107 = vadd.f32 %v105, %v106
  %v108 = vrot.slane %v107, 1
  %v109 = vadd.f32 %v107, %v108
  %v110 = vadd.f32 %v72, %v109
  %111 = vst [vmem:[%s2] sm:$0x1] %v110
  // Predicated region
  $region10: #{nlayer_discriminator_forward.13} parent=0 // pred_check
    _
  $region11: #{nlayer_discriminator_forward.13} parent=0 // pred_check_branch
    %113 = sbr.rel (0) target = $region13
  $region12: #{nlayer_discriminator_forward.13} parent=0 // pred_region
    _
  $region13: #{nlayer_discriminator_forward.13} parent=0 // pred_fallthru
    _
  // Predicated region
  $region14: #{nlayer_discriminator_forward.13} parent=0 // pred_check
    _
  $region15: #{nlayer_discriminator_forward.13} parent=0 // pred_check_branch
    %115 = sbr.rel (0) target = $region17
  $region16: #{nlayer_discriminator_forward.13} parent=0 // pred_region
    _
  $region17: #{nlayer_discriminator_forward.13} parent=0 // pred_fallthru
    _
  // Predicated region
  $region18: #{nlayer_discriminator_forward.13} parent=0 // pred_check
    _
  $region19: #{nlayer_discriminator_forward.13} parent=0 // pred_check_branch
    %117 = sbr.rel (0) target = $region21
  $region20: #{nlayer_discriminator_forward.13} parent=0 // pred_region
    _
  $region21: #{nlayer_discriminator_forward.13} parent=0 // pred_fallthru
    _
  // Predicated region
  $region22: #{nlayer_discriminator_forward.13} parent=0 // pred_check
    _
  $region23: #{nlayer_discriminator_forward.13} parent=0 // pred_check_branch
    %119 = sbr.rel (0) target = $region25
  $region24: #{nlayer_discriminator_forward.13} parent=0 // pred_region
    _
  $region25: #{nlayer_discriminator_forward.13} parent=0 // pred_fallthru
    _

// kernel: nlayer_discriminator_forward.14
$region0: #{nlayer_discriminator_forward.14}
  #allocation0 [shape = 'u32[]', space=smem, size = 0x4, offset = 0x4, fixed_abs, tag = 'smem constant byte address 0x4 - core index']
  #allocation1 [shape = 'u32[144,128]{1,0:T(1,128)}', space=vmem, size = 0x12000, scoped, tag = 'internal scratch']
  %s0 = inlined_call_operand.vmem [shape: bf16[128,128], index: 0, kind: input, shape index: {}]
  %s1 = inlined_call_operand.vmem [shape: f32[1,128], index: 1, kind: input, shape index: {}]
  %s2 = inlined_call_operand.vmem [shape: f32[1,128], index: 2, kind: input, shape index: {}]
  %s3 = inlined_call_operand.vmem [shape: bf16[128,128], index: 3, kind: output, shape index: {}]
  %s4 = sld [smem:[#allocation0]]
  $region22: #{nlayer_discriminator_forward.14} parent=0
    _
  %s6 = ssub.s32 1, %s4
  %s7 = scalar_select 0, %s6, %s4
  // Predicated region
  $region2: #{nlayer_discriminator_forward.14} parent=0 // pred_check
    _
  $region3: #{nlayer_discriminator_forward.14} parent=0 // pred_check_branch
    %9 = sbr.rel (0) target = $region5
  $region4: #{nlayer_discriminator_forward.14} parent=0 // pred_region
    _
  $region5: #{nlayer_discriminator_forward.14} parent=0 // pred_fallthru
    _
  // Predicated region
  $region6: #{nlayer_discriminator_forward.14} parent=0 // pred_check
    _
  $region7: #{nlayer_discriminator_forward.14} parent=0 // pred_check_branch
    %11 = sbr.rel (0) target = $region9
  $region8: #{nlayer_discriminator_forward.14} parent=0 // pred_region
    _
  $region9: #{nlayer_discriminator_forward.14} parent=0 // pred_fallthru
    _
  // Predicated region
  $region10: #{nlayer_discriminator_forward.14} parent=0 // pred_check
    _
  $region11: #{nlayer_discriminator_forward.14} parent=0 // pred_check_branch
    %13 = sbr.rel (0) target = $region13
  $region12: #{nlayer_discriminator_forward.14} parent=0 // pred_region
    _
  $region13: #{nlayer_discriminator_forward.14} parent=0 // pred_fallthru
    _
  %v14 = vld [vmem:[%s0] sm:$0xf]
  %v15 = vld [vmem:[%s0 + $0x4] sm:$0xf]
  %v16 = vld [vmem:[%s0 + $0x8] sm:$0xf]
  %v17 = vld [vmem:[%s0 + $0xc] sm:$0xf]
  %v18 = vld [vmem:[%s0 + $0x10] sm:$0xf]
  %v19 = vld [vmem:[%s0 + $0x14] sm:$0xf]
  %v20 = vld [vmem:[%s0 + $0x18] sm:$0xf]
  %v21 = vld [vmem:[%s0 + $0x1c] sm:$0xf]
  %v22 = vld [vmem:[%s0 + $0x20] sm:$0xf]
  %v23 = vld [vmem:[%s0 + $0x24] sm:$0xf]
  %v24 = vld [vmem:[%s0 + $0x28] sm:$0xf]
  %v25 = vld [vmem:[%s0 + $0x2c] sm:$0xf]
  %v26 = vld [vmem:[%s0 + $0x30] sm:$0xf]
  %v27 = vld [vmem:[%s0 + $0x34] sm:$0xf]
  %v28 = vld [vmem:[%s0 + $0x38] sm:$0xf]
  %v29 = vld [vmem:[%s0 + $0x3c] sm:$0xf]
  %v30 = vunpack.c.l.bf16 %v14
  %v31 = vunpack.c.l.bf16 %v15
  %v32 = vunpack.c.l.bf16 %v16
  %v33 = vunpack.c.l.bf16 %v17
  %v34 = vunpack.c.l.bf16 %v18
  %v35 = vunpack.c.l.bf16 %v19
  %v36 = vunpack.c.l.bf16 %v20
  %v37 = vunpack.c.l.bf16 %v21
  %v38 = vunpack.c.l.bf16 %v22
  %v39 = vunpack.c.l.bf16 %v23
  %v40 = vunpack.c.l.bf16 %v24
  %v41 = vunpack.c.l.bf16 %v25
  %v42 = vunpack.c.l.bf16 %v26
  %v43 = vunpack.c.l.bf16 %v27
  %v44 = vunpack.c.l.bf16 %v28
  %v45 = vunpack.c.l.bf16 %v29
  %v46 = vld [vmem:[%s1] sm:$0x1]
  %v48 = vlaneseq
  %v49 = vshrl.u32 %v48, 7
  %v50 = vsub.s32 0, %v49
  %v51 = vrot.slane %v46, %v50
  %v53 = vmul.f32 %v30, %v51
  %v54 = vmul.f32 %v31, %v51
  %v55 = vmul.f32 %v32, %v51
  %v56 = vmul.f32 %v33, %v51
  %v57 = vmul.f32 %v34, %v51
  %v58 = vmul.f32 %v35, %v51
  %v59 = vmul.f32 %v36, %v51
  %v60 = vmul.f32 %v37, %v51
  %v61 = vmul.f32 %v38, %v51
  %v62 = vmul.f32 %v39, %v51
  %v63 = vmul.f32 %v40, %v51
  %v64 = vmul.f32 %v41, %v51
  %v65 = vmul.f32 %v42, %v51
  %v66 = vmul.f32 %v43, %v51
  %v67 = vmul.f32 %v44, %v51
  %v68 = vmul.f32 %v45, %v51
  %v69 = vld [vmem:[%s2] sm:$0x1]
  %v71 = vlaneseq
  %v72 = vshrl.u32 %v71, 7
  %v73 = vsub.s32 0, %v72
  %v74 = vrot.slane %v69, %v73
  %v76 = vadd.f32 %v53, %v74
  %v77 = vadd.f32 %v54, %v74
  %v78 = vadd.f32 %v55, %v74
  %v79 = vadd.f32 %v56, %v74
  %v80 = vadd.f32 %v57, %v74
  %v81 = vadd.f32 %v58, %v74
  %v82 = vadd.f32 %v59, %v74
  %v83 = vadd.f32 %v60, %v74
  %v84 = vadd.f32 %v61, %v74
  %v85 = vadd.f32 %v62, %v74
  %v86 = vadd.f32 %v63, %v74
  %v87 = vadd.f32 %v64, %v74
  %v88 = vadd.f32 %v65, %v74
  %v89 = vadd.f32 %v66, %v74
  %v90 = vadd.f32 %v67, %v74
  %v91 = vadd.f32 %v68, %v74
  %vm92 = vcmp.ge.f32.partialorder %v76, 0.0
  %vm93 = vcmp.ge.f32.partialorder %v77, 0.0
  %vm94 = vcmp.ge.f32.partialorder %v78, 0.0
  %vm95 = vcmp.ge.f32.partialorder %v79, 0.0
  %vm96 = vcmp.ge.f32.partialorder %v80, 0.0
  %vm97 = vcmp.ge.f32.partialorder %v81, 0.0
  %vm98 = vcmp.ge.f32.partialorder %v82, 0.0
  %vm99 = vcmp.ge.f32.partialorder %v83, 0.0
  %vm100 = vcmp.ge.f32.partialorder %v84, 0.0
  %vm101 = vcmp.ge.f32.partialorder %v85, 0.0
  %vm102 = vcmp.ge.f32.partialorder %v86, 0.0
  %vm103 = vcmp.ge.f32.partialorder %v87, 0.0
  %vm104 = vcmp.ge.f32.partialorder %v88, 0.0
  %vm105 = vcmp.ge.f32.partialorder %v89, 0.0
  %vm106 = vcmp.ge.f32.partialorder %v90, 0.0
  %vm107 = vcmp.ge.f32.partialorder %v91, 0.0
  %v108 = vmul.f32 %v76, 0.2
  %v109 = vmul.f32 %v77, 0.2
  %v110 = vmul.f32 %v78, 0.2
  %v111 = vmul.f32 %v79, 0.2
  %v112 = vmul.f32 %v80, 0.2
  %v113 = vmul.f32 %v81, 0.2
  %v114 = vmul.f32 %v82, 0.2
  %v115 = vmul.f32 %v83, 0.2
  %v116 = vmul.f32 %v84, 0.2
  %v117 = vmul.f32 %v85, 0.2
  %v118 = vmul.f32 %v86, 0.2
  %v119 = vmul.f32 %v87, 0.2
  %v120 = vmul.f32 %v88, 0.2
  %v121 = vmul.f32 %v89, 0.2
  %v122 = vmul.f32 %v90, 0.2
  %v123 = vmul.f32 %v91, 0.2
  %v124 = vsel %vm92, %v76, %v108
  %v125 = vsel %vm93, %v77, %v109
  %v126 = vsel %vm94, %v78, %v110
  %v127 = vsel %vm95, %v79, %v111
  %v128 = vsel %vm96, %v80, %v112
  %v129 = vsel %vm97, %v81, %v113
  %v130 = vsel %vm98, %v82, %v114
  %v131 = vsel %vm99, %v83, %v115
  %v132 = vsel %vm100, %v84, %v116
  %v133 = vsel %vm101, %v85, %v117
  %v134 = vsel %vm102, %v86, %v118
  %v135 = vsel %vm103, %v87, %v119
  %v136 = vsel %vm104, %v88, %v120
  %v137 = vsel %vm105, %v89, %v121
  %v138 = vsel %vm106, %v90, %v122
  %v139 = vsel %vm107, %v91, %v123
  %v140 = vpack.c.bf16 %v125, %v124
  %v141 = vpack.c.bf16 %v127, %v126
  %v142 = vpack.c.bf16 %v129, %v128
  %v143 = vpack.c.bf16 %v131, %v130
  %v144 = vpack.c.bf16 %v133, %v132
  %v145 = vpack.c.bf16 %v135, %v134
  %v146 = vpack.c.bf16 %v137, %v136
  %v147 = vpack.c.bf16 %v139, %v138
  %v156 = vunpack.c.l.b16 %v140
  %v157 = vunpack.c.h.b16 %v140
  %v158 = vunpack.c.l.b16 %v141
  %v159 = vunpack.c.h.b16 %v141
  %v160 = vunpack.c.l.b16 %v142
  %v161 = vunpack.c.h.b16 %v142
  %v162 = vunpack.c.l.b16 %v143
  %v163 = vunpack.c.h.b16 %v143
  %v164 = vunpack.c.l.b16 %v144
  %v165 = vunpack.c.h.b16 %v144
  %v166 = vunpack.c.l.b16 %v145
  %v167 = vunpack.c.h.b16 %v145
  %v168 = vunpack.c.l.b16 %v146
  %v169 = vunpack.c.h.b16 %v146
  %v170 = vunpack.c.l.b16 %v147
  %v171 = vunpack.c.h.b16 %v147
  %v172 = vpack.c.b16 %v156, %v156
  %v173 = vpack.c.b16 %v157, %v157
  %v174 = vpack.c.b16 %v158, %v158
  %v175 = vpack.c.b16 %v159, %v159
  %v176 = vpack.c.b16 %v160, %v160
  %v177 = vpack.c.b16 %v161, %v161
  %v178 = vpack.c.b16 %v162, %v162
  %v179 = vpack.c.b16 %v163, %v163
  %v180 = vpack.c.b16 %v164, %v164
  %v181 = vpack.c.b16 %v165, %v165
  %v182 = vpack.c.b16 %v166, %v166
  %v183 = vpack.c.b16 %v167, %v167
  %v184 = vpack.c.b16 %v168, %v168
  %v185 = vpack.c.b16 %v169, %v169
  %v186 = vpack.c.b16 %v170, %v170
  %v187 = vpack.c.b16 %v171, %v171
  %204 = vst [vmem:[%s3] sm:$0xf] %v172
  %205 = vst [vmem:[%s3 + $0x4] sm:$0xf] %v173
  %206 = vst [vmem:[%s3 + $0x8] sm:$0xf] %v174
  %207 = vst [vmem:[%s3 + $0xc] sm:$0xf] %v175
  %208 = vst [vmem:[%s3 + $0x10] sm:$0xf] %v176
  %209 = vst [vmem:[%s3 + $0x14] sm:$0xf] %v177
  %210 = vst [vmem:[%s3 + $0x18] sm:$0xf] %v178
  %211 = vst [vmem:[%s3 + $0x1c] sm:$0xf] %v179
  %212 = vst [vmem:[%s3 + $0x20] sm:$0xf] %v180
  %213 = vst [vmem:[%s3 + $0x24] sm:$0xf] %v181
  %214 = vst [vmem:[%s3 + $0x28] sm:$0xf] %v182
  %215 = vst [vmem:[%s3 + $0x2c] sm:$0xf] %v183
  %216 = vst [vmem:[%s3 + $0x30] sm:$0xf] %v184
  %217 = vst [vmem:[%s3 + $0x34] sm:$0xf] %v185
  %218 = vst [vmem:[%s3 + $0x38] sm:$0xf] %v186
  %219 = vst [vmem:[%s3 + $0x3c] sm:$0xf] %v187
  // Predicated region
  $region14: #{nlayer_discriminator_forward.14} parent=0 // pred_check
    _
  $region15: #{nlayer_discriminator_forward.14} parent=0 // pred_check_branch
    %221 = sbr.rel (0) target = $region17
  $region16: #{nlayer_discriminator_forward.14} parent=0 // pred_region
    _
  $region17: #{nlayer_discriminator_forward.14} parent=0 // pred_fallthru
    _
  // Predicated region
  $region18: #{nlayer_discriminator_forward.14} parent=0 // pred_check
    _
  $region19: #{nlayer_discriminator_forward.14} parent=0 // pred_check_branch
    %223 = sbr.rel (0) target = $region21
  $region20: #{nlayer_discriminator_forward.14} parent=0 // pred_region
    _
  $region21: #{nlayer_discriminator_forward.14} parent=0 // pred_fallthru
    _

// kernel: nlayer_discriminator_forward.15
$region0: #{nlayer_discriminator_forward.15}
  #allocation0 [shape = 'u32[]', space=smem, size = 0x4, offset = 0x4, fixed_abs, tag = 'smem constant byte address 0x4 - core index']
  #allocation1 [shape = 'u32[144,128]{1,0:T(1,128)}', space=vmem, size = 0x12000, scoped, tag = 'internal scratch']
  #allocation2 [shape = 'f32[32,128]{1,0:T(8,128)}', space=vmem, size = 0x4000, scoped, tag = 'scratch operand']
  %s0 = inlined_call_operand.vmem [shape: bf16[32,256], index: 0, kind: input, shape index: {}]
  %s1 = inlined_call_operand.vmem [shape: bf16[256,128], index: 1, kind: input, shape index: {}]
  %s2 = inlined_call_operand.vmem [shape: f32[1,128], index: 2, kind: input, shape index: {}]
  %s3 = inlined_call_operand.vmem [shape: bf16[32,128], index: 3, kind: output, shape index: {}]
  %s4 = sld [smem:[#allocation0]]
  $region30: #{nlayer_discriminator_forward.15} parent=0
    _
  %s6 = ssub.s32 1, %s4
  %s7 = scalar_select 0, %s6, %s4
  // Predicated region
  $region2: #{nlayer_discriminator_forward.15} parent=0 // pred_check
    _
  $region3: #{nlayer_discriminator_forward.15} parent=0 // pred_check_branch
    %9 = sbr.rel (0) target = $region5
  $region4: #{nlayer_discriminator_forward.15} parent=0 // pred_region
    _
  $region5: #{nlayer_discriminator_forward.15} parent=0 // pred_fallthru
    _
  // Predicated region
  $region6: #{nlayer_discriminator_forward.15} parent=0 // pred_check
    _
  $region7: #{nlayer_discriminator_forward.15} parent=0 // pred_check_branch
    %11 = sbr.rel (0) target = $region9
  $region8: #{nlayer_discriminator_forward.15} parent=0 // pred_region
    _
  $region9: #{nlayer_discriminator_forward.15} parent=0 // pred_fallthru
    _
  // Predicated region
  $region10: #{nlayer_discriminator_forward.15} parent=0 // pred_check
    _
  $region11: #{nlayer_discriminator_forward.15} parent=0 // pred_check_branch
    %13 = sbr.rel (0) target = $region13
  $region12: #{nlayer_discriminator_forward.15} parent=0 // pred_region
    _
  $region13: #{nlayer_discriminator_forward.15} parent=0 // pred_fallthru
    _
  %p15 = scmp.eq.s32.totalorder 0, 0
  // Predicated region
  $region14: #{nlayer_discriminator_forward.15} parent=0 // pred_check
    %p16 = pneg %p15
  $region15: #{nlayer_discriminator_forward.15} parent=0 // pred_check_branch
    %18 = sbr.rel (%p16) target = $region17
  $region16: #{nlayer_discriminator_forward.15} parent=0 // pred_region
    %19 = vst [vmem:[#allocation2] sm:$0xff] 0.0
    %20 = vst [vmem:[#allocation2 + $0x8] sm:$0xff] 0.0
    %21 = vst [vmem:[#allocation2 + $0x10] sm:$0xff] 0.0
    %22 = vst [vmem:[#allocation2 + $0x18] sm:$0xff] 0.0
  $region17: #{nlayer_discriminator_forward.15} parent=0 // pred_fallthru
    _
  %v23 = vld [vmem:[#allocation2] sm:$0xff]
  %v24 = vld [vmem:[#allocation2 + $0x8] sm:$0xff]
  %v25 = vld [vmem:[#allocation2 + $0x10] sm:$0xff]
  %v26 = vld [vmem:[#allocation2 + $0x18] sm:$0xff]
  %v27 = vld [vmem:[%s0] sm:$0xff]
  %v28 = vld [vmem:[%s0 + $0x8] sm:$0xff]
  %v29 = vld [vmem:[%s0 + $0x10] sm:$0xff]
  %v30 = vld [vmem:[%s0 + $0x18] sm:$0xff]
  %v31 = vld [vmem:[%s1] sm:$0xf]
  %v32 = vld [vmem:[%s1 + $0x4] sm:$0xf]
  %v33 = vld [vmem:[%s1 + $0x8] sm:$0xf]
  %v34 = vld [vmem:[%s1 + $0xc] sm:$0xf]
  %v35 = vld [vmem:[%s1 + $0x10] sm:$0xf]
  %v36 = vld [vmem:[%s1 + $0x14] sm:$0xf]
  %v37 = vld [vmem:[%s1 + $0x18] sm:$0xf]
  %v38 = vld [vmem:[%s1 + $0x1c] sm:$0xf]
  %v39 = vld [vmem:[%s1 + $0x20] sm:$0xf]
  %v40 = vld [vmem:[%s1 + $0x24] sm:$0xf]
  %v41 = vld [vmem:[%s1 + $0x28] sm:$0xf]
  %v42 = vld [vmem:[%s1 + $0x2c] sm:$0xf]
  %v43 = vld [vmem:[%s1 + $0x30] sm:$0xf]
  %v44 = vld [vmem:[%s1 + $0x34] sm:$0xf]
  %v45 = vld [vmem:[%s1 + $0x38] sm:$0xf]
  %v46 = vld [vmem:[%s1 + $0x3c] sm:$0xf]
  %v47 = vld [vmem:[%s1 + $0x40] sm:$0xf]
  %v48 = vld [vmem:[%s1 + $0x44] sm:$0xf]
  %v49 = vld [vmem:[%s1 + $0x48] sm:$0xf]
  %v50 = vld [vmem:[%s1 + $0x4c] sm:$0xf]
  %v51 = vld [vmem:[%s1 + $0x50] sm:$0xf]
  %v52 = vld [vmem:[%s1 + $0x54] sm:$0xf]
  %v53 = vld [vmem:[%s1 + $0x58] sm:$0xf]
  %v54 = vld [vmem:[%s1 + $0x5c] sm:$0xf]
  %v55 = vld [vmem:[%s1 + $0x60] sm:$0xf]
  %v56 = vld [vmem:[%s1 + $0x64] sm:$0xf]
  %v57 = vld [vmem:[%s1 + $0x68] sm:$0xf]
  %v58 = vld [vmem:[%s1 + $0x6c] sm:$0xf]
  %v59 = vld [vmem:[%s1 + $0x70] sm:$0xf]
  %v60 = vld [vmem:[%s1 + $0x74] sm:$0xf]
  %v61 = vld [vmem:[%s1 + $0x78] sm:$0xf]
  %v62 = vld [vmem:[%s1 + $0x7c] sm:$0xf]
  %v67 = vunpack.c.l.b16 %v27
  %v68 = vunpack.c.h.b16 %v27
  %v69 = vunpack.c.l.b16 %v28
  %v70 = vunpack.c.h.b16 %v28
  %v71 = vunpack.c.l.b16 %v29
  %v72 = vunpack.c.h.b16 %v29
  %v73 = vunpack.c.l.b16 %v30
  %v74 = vunpack.c.h.b16 %v30
  %v75 = vpack.c.b16 %v69, %v67
  %v76 = vpack.c.b16 %v70, %v68
  %v77 = vpack.c.b16 %v73, %v71
  %v78 = vpack.c.b16 %v74, %v72
  %v115 = vunpack.c.l.b16 %v31
  %v116 = vunpack.c.l.b16 %v32
  %v117 = vunpack.c.l.b16 %v33
  %v118 = vunpack.c.l.b16 %v34
  %v119 = vunpack.c.l.b16 %v35
  %v120 = vunpack.c.l.b16 %v36
  %v121 = vunpack.c.l.b16 %v37
  %v122 = vunpack.c.l.b16 %v38
  %v123 = vunpack.c.l.b16 %v39
  %v124 = vunpack.c.l.b16 %v40
  %v125 = vunpack.c.l.b16 %v41
  %v126 = vunpack.c.l.b16 %v42
  %v127 = vunpack.c.l.b16 %v43
  %v128 = vunpack.c.l.b16 %v44
  %v129 = vunpack.c.l.b16 %v45
  %v130 = vunpack.c.l.b16 %v46
  %v131 = vunpack.c.l.b16 %v47
  %v132 = vunpack.c.l.b16 %v48
  %v133 = vunpack.c.l.b16 %v49
  %v134 = vunpack.c.l.b16 %v50
  %v135 = vunpack.c.l.b16 %v51
  %v136 = vunpack.c.l.b16 %v52
  %v137 = vunpack.c.l.b16 %v53
  %v138 = vunpack.c.l.b16 %v54
  %v139 = vunpack.c.l.b16 %v55
  %v140 = vunpack.c.l.b16 %v56
  %v141 = vunpack.c.l.b16 %v57
  %v142 = vunpack.c.l.b16 %v58
  %v143 = vunpack.c.l.b16 %v59
  %v144 = vunpack.c.l.b16 %v60
  %v145 = vunpack.c.l.b16 %v61
  %v146 = vunpack.c.l.b16 %v62
  %v147 = vpack.c.b16 %v116, %v115
  %v148 = vpack.c.b16 %v118, %v117
  %v149 = vpack.c.b16 %v120, %v119
  %v150 = vpack.c.b16 %v122, %v121
  %v151 = vpack.c.b16 %v124, %v123
  %v152 = vpack.c.b16 %v126, %v125
  %v153 = vpack.c.b16 %v128, %v127
  %v154 = vpack.c.b16 %v130, %v129
  %v155 = vpack.c.b16 %v132, %v131
  %v156 = vpack.c.b16 %v134, %v133
  %v157 = vpack.c.b16 %v136, %v135
  %v158 = vpack.c.b16 %v138, %v137
  %v159 = vpack.c.b16 %v140, %v139
  %v160 = vpack.c.b16 %v142, %v141
  %v161 = vpack.c.b16 %v144, %v143
  %v162 = vpack.c.b16 %v146, %v145
  %179 = vmatprep.subr.bf16.mxu0 0
  %180 = vmatpush1.bf16.msra.mxu0 %v147
  %181 = vmatprep.subr.bf16.mxu0 0
  %182 = vmatpush1.bf16.msra.mxu0 %v148
  %183 = vmatprep.subr.bf16.mxu0 0
  %184 = vmatpush1.bf16.msra.mxu0 %v149
  %185 = vmatprep.subr.bf16.mxu0 0
  %186 = vmatpush1.bf16.msra.mxu0 %v150
  %187 = vmatprep.subr.bf16.mxu0 0
  %188 = vmatpush1.bf16.msra.mxu0 %v151
  %189 = vmatprep.subr.bf16.mxu0 0
  %190 = vmatpush1.bf16.msra.mxu0 %v152
  %191 = vmatprep.subr.bf16.mxu0 0
  %192 = vmatpush1.bf16.msra.mxu0 %v153
  %193 = vmatprep.subr.bf16.mxu0 0
  %194 = vmatpush1.bf16.msra.mxu0 %v154
  %195 = vmatprep.subr.bf16.mxu0 0
  %196 = vmatpush1.bf16.msra.mxu0 %v155
  %197 = vmatprep.subr.bf16.mxu0 0
  %198 = vmatpush1.bf16.msra.mxu0 %v156
  %199 = vmatprep.subr.bf16.mxu0 0
  %200 = vmatpush1.bf16.msra.mxu0 %v157
  %201 = vmatprep.subr.bf16.mxu0 0
  %202 = vmatpush1.bf16.msra.mxu0 %v158
  %203 = vmatprep.subr.bf16.mxu0 0
  %204 = vmatpush1.bf16.msra.mxu0 %v159
  %205 = vmatprep.subr.bf16.mxu0 0
  %206 = vmatpush1.bf16.msra.mxu0 %v160
  %207 = vmatprep.subr.bf16.mxu0 0
  %208 = vmatpush1.bf16.msra.mxu0 %v161
  %209 = vmatprep.subr.bf16.mxu0 0
  %210 = vmatpush1.bf16.msra.mxu0 %v162
  %211 = vmatprep.mubr.bf16.mxu0 %v76
  %212 = vmatmul.mubr.bf16.gmra.mrb[0].mxu0 %v75
  %v213 = vpop.f32.mrb[0].mxu0
  %v214 = vadd.f32 0.0, %v213
  %v215 = vpop.f32.mrb[0].mxu0
  %v216 = vpop.f32.mrb[0].mxu0
  %v217 = vadd.f32 0.0, %v216
  %v218 = vpop.f32.mrb[0].mxu0
  %219 = vmatprep.mubr.bf16.mxu0 %v78
  %220 = vmatmul.mubr.bf16.gmra.mrb[0].mxu0 %v77
  %v221 = vpop.f32.mrb[0].mxu0
  %v222 = vadd.f32 0.0, %v221
  %v223 = vpop.f32.mrb[0].mxu0
  %v224 = vpop.f32.mrb[0].mxu0
  %v225 = vadd.f32 0.0, %v224
  %v226 = vpop.f32.mrb[0].mxu0
  %227 = vdwg.mxu0
  %v228 = vadd.f32 %v23, %v214
  %v229 = vadd.f32 %v24, %v217
  %v230 = vadd.f32 %v25, %v222
  %v231 = vadd.f32 %v26, %v225
  %232 = vst [vmem:[#allocation2] sm:$0xff] %v228
  %233 = vst [vmem:[#allocation2 + $0x8] sm:$0xff] %v229
  %234 = vst [vmem:[#allocation2 + $0x10] sm:$0xff] %v230
  %235 = vst [vmem:[#allocation2 + $0x18] sm:$0xff] %v231
  // Predicated region
  $region18: #{nlayer_discriminator_forward.15} parent=0 // pred_check
    %p236 = pneg %p15
  $region19: #{nlayer_discriminator_forward.15} parent=0 // pred_check_branch
    %238 = sbr.rel (%p236) target = $region21
  $region20: #{nlayer_discriminator_forward.15} parent=0 // pred_region
    %v239 = vld [vmem:[#allocation2] sm:$0xff]
    %v240 = vld [vmem:[#allocation2 + $0x8] sm:$0xff]
    %v241 = vld [vmem:[#allocation2 + $0x10] sm:$0xff]
    %v242 = vld [vmem:[#allocation2 + $0x18] sm:$0xff]
    %v243 = vld [vmem:[%s2] sm:$0x1]
    %v245 = vlaneseq
    %v246 = vshrl.u32 %v245, 7
    %v247 = vsub.s32 0, %v246
    %v248 = vrot.slane %v243, %v247
    %v250 = vadd.f32 %v239, %v248
    %v251 = vadd.f32 %v240, %v248
    %v252 = vadd.f32 %v241, %v248
    %v253 = vadd.f32 %v242, %v248
    %v254 = vpack.c.bf16 %v251, %v250
    %v255 = vpack.c.bf16 %v253, %v252
    %v258 = vunpack.c.l.b16 %v254
    %v259 = vunpack.c.h.b16 %v254
    %v260 = vunpack.c.l.b16 %v255
    %v261 = vunpack.c.h.b16 %v255
    %v262 = vpack.c.b16 %v258, %v258
    %v263 = vpack.c.b16 %v259, %v259
    %v264 = vpack.c.b16 %v260, %v260
    %v265 = vpack.c.b16 %v261, %v261
    %270 = vst [vmem:[%s3] sm:$0xf] %v262
    %271 = vst [vmem:[%s3 + $0x4] sm:$0xf] %v263
    %272 = vst [vmem:[%s3 + $0x8] sm:$0xf] %v264
    %273 = vst [vmem:[%s3 + $0xc] sm:$0xf] %v265
  $region21: #{nlayer_discriminator_forward.15} parent=0 // pred_fallthru
    _
  // Predicated region
  $region22: #{nlayer_discriminator_forward.15} parent=0 // pred_check
    _
  $region23: #{nlayer_discriminator_forward.15} parent=0 // pred_check_branch
    %275 = sbr.rel (0) target = $region25
  $region24: #{nlayer_discriminator_forward.15} parent=0 // pred_region
    _
  $region25: #{nlayer_discriminator_forward.15} parent=0 // pred_fallthru
    _
  // Predicated region
  $region26: #{nlayer_discriminator_forward.15} parent=0 // pred_check
    _
  $region27: #{nlayer_discriminator_forward.15} parent=0 // pred_check_branch
    %277 = sbr.rel (0) target = $region29
  $region28: #{nlayer_discriminator_forward.15} parent=0 // pred_region
    _
  $region29: #{nlayer_discriminator_forward.15} parent=0 // pred_fallthru
    _

// kernel: nlayer_discriminator_forward.17
$region0: #{nlayer_discriminator_forward.17}
  #allocation0 [shape = 'u32[]', space=smem, size = 0x4, offset = 0x4, fixed_abs, tag = 'smem constant byte address 0x4 - core index']
  #allocation1 [shape = 'u32[144,128]{1,0:T(1,128)}', space=vmem, size = 0x12000, scoped, tag = 'internal scratch']
  %s0 = inlined_call_operand.vmem [shape: bf16[32,128], index: 0, kind: input, shape index: {}]
  %s1 = inlined_call_operand.vmem [shape: f32[1,128], index: 1, kind: input, shape index: {}]
  %s2 = inlined_call_operand.vmem [shape: f32[1,128], index: 2, kind: input, shape index: {}]
  %s3 = inlined_call_operand.vmem [shape: bf16[32,128], index: 3, kind: output, shape index: {}]
  %s4 = sld [smem:[#allocation0]]
  $region22: #{nlayer_discriminator_forward.17} parent=0
    _
  %s6 = ssub.s32 1, %s4
  %s7 = scalar_select 0, %s6, %s4
  // Predicated region
  $region2: #{nlayer_discriminator_forward.17} parent=0 // pred_check
    _
  $region3: #{nlayer_discriminator_forward.17} parent=0 // pred_check_branch
    %9 = sbr.rel (0) target = $region5
  $region4: #{nlayer_discriminator_forward.17} parent=0 // pred_region
    _
  $region5: #{nlayer_discriminator_forward.17} parent=0 // pred_fallthru
    _
  // Predicated region
  $region6: #{nlayer_discriminator_forward.17} parent=0 // pred_check
    _
  $region7: #{nlayer_discriminator_forward.17} parent=0 // pred_check_branch
    %11 = sbr.rel (0) target = $region9
  $region8: #{nlayer_discriminator_forward.17} parent=0 // pred_region
    _
  $region9: #{nlayer_discriminator_forward.17} parent=0 // pred_fallthru
    _
  // Predicated region
  $region10: #{nlayer_discriminator_forward.17} parent=0 // pred_check
    _
  $region11: #{nlayer_discriminator_forward.17} parent=0 // pred_check_branch
    %13 = sbr.rel (0) target = $region13
  $region12: #{nlayer_discriminator_forward.17} parent=0 // pred_region
    _
  $region13: #{nlayer_discriminator_forward.17} parent=0 // pred_fallthru
    _
  %v14 = vld [vmem:[%s0] sm:$0xf]
  %v15 = vld [vmem:[%s0 + $0x4] sm:$0xf]
  %v16 = vld [vmem:[%s0 + $0x8] sm:$0xf]
  %v17 = vld [vmem:[%s0 + $0xc] sm:$0xf]
  %v18 = vunpack.c.l.bf16 %v14
  %v19 = vunpack.c.l.bf16 %v15
  %v20 = vunpack.c.l.bf16 %v16
  %v21 = vunpack.c.l.bf16 %v17
  %v22 = vld [vmem:[%s1] sm:$0x1]
  %v24 = vlaneseq
  %v25 = vshrl.u32 %v24, 7
  %v26 = vsub.s32 0, %v25
  %v27 = vrot.slane %v22, %v26
  %v29 = vmul.f32 %v18, %v27
  %v30 = vmul.f32 %v19, %v27
  %v31 = vmul.f32 %v20, %v27
  %v32 = vmul.f32 %v21, %v27
  %v33 = vld [vmem:[%s2] sm:$0x1]
  %v35 = vlaneseq
  %v36 = vshrl.u32 %v35, 7
  %v37 = vsub.s32 0, %v36
  %v38 = vrot.slane %v33, %v37
  %v40 = vadd.f32 %v29, %v38
  %v41 = vadd.f32 %v30, %v38
  %v42 = vadd.f32 %v31, %v38
  %v43 = vadd.f32 %v32, %v38
  %vm44 = vcmp.ge.f32.partialorder %v40, 0.0
  %vm45 = vcmp.ge.f32.partialorder %v41, 0.0
  %vm46 = vcmp.ge.f32.partialorder %v42, 0.0
  %vm47 = vcmp.ge.f32.partialorder %v43, 0.0
  %v48 = vmul.f32 %v40, 0.2
  %v49 = vmul.f32 %v41, 0.2
  %v50 = vmul.f32 %v42, 0.2
  %v51 = vmul.f32 %v43, 0.2
  %v52 = vsel %vm44, %v40, %v48
  %v53 = vsel %vm45, %v41, %v49
  %v54 = vsel %vm46, %v42, %v50
  %v55 = vsel %vm47, %v43, %v51
  %v56 = vpack.c.bf16 %v53, %v52
  %v57 = vpack.c.bf16 %v55, %v54
  %v60 = vunpack.c.l.b16 %v56
  %v61 = vunpack.c.h.b16 %v56
  %v62 = vunpack.c.l.b16 %v57
  %v63 = vunpack.c.h.b16 %v57
  %v64 = vpack.c.b16 %v60, %v60
  %v65 = vpack.c.b16 %v61, %v61
  %v66 = vpack.c.b16 %v62, %v62
  %v67 = vpack.c.b16 %v63, %v63
  %72 = vst [vmem:[%s3] sm:$0xf] %v64
  %73 = vst [vmem:[%s3 + $0x4] sm:$0xf] %v65
  %74 = vst [vmem:[%s3 + $0x8] sm:$0xf] %v66
  %75 = vst [vmem:[%s3 + $0xc] sm:$0xf] %v67
  // Predicated region
  $region14: #{nlayer_discriminator_forward.17} parent=0 // pred_check
    _
  $region15: #{nlayer_discriminator_forward.17} parent=0 // pred_check_branch
    %77 = sbr.rel (0) target = $region17
  $region16: #{nlayer_discriminator_forward.17} parent=0 // pred_region
    _
  $region17: #{nlayer_discriminator_forward.17} parent=0 // pred_fallthru
    _
  // Predicated region
  $region18: #{nlayer_discriminator_forward.17} parent=0 // pred_check
    _
  $region19: #{nlayer_discriminator_forward.17} parent=0 // pred_check_branch
    %79 = sbr.rel (0) target = $region21
  $region20: #{nlayer_discriminator_forward.17} parent=0 // pred_region
    _
  $region21: #{nlayer_discriminator_forward.17} parent=0 // pred_fallthru
    _

// kernel: nlayer_discriminator_forward.16
$region0: #{nlayer_discriminator_forward.16}
  #allocation0 [shape = 'u32[]', space=smem, size = 0x4, offset = 0x4, fixed_abs, tag = 'smem constant byte address 0x4 - core index']
  #allocation1 [shape = 'u32[144,128]{1,0:T(1,128)}', space=vmem, size = 0x12000, scoped, tag = 'internal scratch']
  %s0 = inlined_call_operand.vmem [shape: bf16[32,128], index: 0, kind: input, shape index: {}]
  %s1 = inlined_call_operand.vmem [shape: f32[1,128], index: 1, kind: output, shape index: {0}]
  %s2 = inlined_call_operand.vmem [shape: f32[1,128], index: 2, kind: output, shape index: {1}]
  %3 = xla_tuple %s1, %s2
  %s4 = sld [smem:[#allocation0]]
  $region26: #{nlayer_discriminator_forward.16} parent=0
    _
  %s6 = ssub.s32 1, %s4
  %s7 = scalar_select 0, %s6, %s4
  // Predicated region
  $region2: #{nlayer_discriminator_forward.16} parent=0 // pred_check
    _
  $region3: #{nlayer_discriminator_forward.16} parent=0 // pred_check_branch
    %9 = sbr.rel (0) target = $region5
  $region4: #{nlayer_discriminator_forward.16} parent=0 // pred_region
    _
  $region5: #{nlayer_discriminator_forward.16} parent=0 // pred_fallthru
    _
  %p10 = scmp.eq.s32.totalorder 0, 0
  // Predicated region
  $region6: #{nlayer_discriminator_forward.16} parent=0 // pred_check
    %p11 = pneg %p10
  $region7: #{nlayer_discriminator_forward.16} parent=0 // pred_check_branch
    %13 = sbr.rel (%p11) target = $region9
  $region8: #{nlayer_discriminator_forward.16} parent=0 // pred_region
    %14 = vst [vmem:[%s1] sm:$0x1] 0.0
    %15 = vst [vmem:[%s2] sm:$0x1] 0.0
  $region9: #{nlayer_discriminator_forward.16} parent=0 // pred_fallthru
    _
  %v16 = vld [vmem:[%s0] sm:$0xf]
  %v17 = vld [vmem:[%s0 + $0x4] sm:$0xf]
  %v18 = vld [vmem:[%s0 + $0x8] sm:$0xf]
  %v19 = vld [vmem:[%s0 + $0xc] sm:$0xf]
  %v20 = vunpack.c.l.bf16 %v16
  %v21 = vunpack.c.l.bf16 %v17
  %v22 = vunpack.c.l.bf16 %v18
  %v23 = vunpack.c.l.bf16 %v19
  %v24 = vld [vmem:[%s1] sm:$0x1]
  %v25 = vadd.f32 %v20, %v21
  %v26 = vadd.f32 %v25, %v22
  %v27 = vadd.f32 %v26, %v23
  %v28 = vrot.slane %v27, 4
  %v29 = vadd.f32 %v27, %v28
  %v30 = vrot.slane %v29, 2
  %v31 = vadd.f32 %v29, %v30
  %v32 = vrot.slane %v31, 1
  %v33 = vadd.f32 %v31, %v32
  %v34 = vadd.f32 %v24, %v33
  %35 = vst [vmem:[%s1] sm:$0x1] %v34
  %v36 = vld [vmem:[%s2] sm:$0x1]
  %v37 = vmul.f32 %v20, %v20
  %v38 = vmul.f32 %v21, %v21
  %v39 = vmul.f32 %v22, %v22
  %v40 = vmul.f32 %v23, %v23
  %v41 = vadd.f32 %v37, %v38
  %v42 = vadd.f32 %v41, %v39
  %v43 = vadd.f32 %v42, %v40
  %v44 = vrot.slane %v43, 4
  %v45 = vadd.f32 %v43, %v44
  %v46 = vrot.slane %v45, 2
  %v47 = vadd.f32 %v45, %v46
  %v48 = vrot.slane %v47, 1
  %v49 = vadd.f32 %v47, %v48
  %v50 = vadd.f32 %v36, %v49
  %51 = vst [vmem:[%s2] sm:$0x1] %v50
  // Predicated region
  $region10: #{nlayer_discriminator_forward.16} parent=0 // pred_check
    _
  $region11: #{nlayer_discriminator_forward.16} parent=0 // pred_check_branch
    %53 = sbr.rel (0) target = $region13
  $region12: #{nlayer_discriminator_forward.16} parent=0 // pred_region
    _
  $region13: #{nlayer_discriminator_forward.16} parent=0 // pred_fallthru
    _
  // Predicated region
  $region14: #{nlayer_discriminator_forward.16} parent=0 // pred_check
    _
  $region15: #{nlayer_discriminator_forward.16} parent=0 // pred_check_branch
    %55 = sbr.rel (0) target = $region17
  $region16: #{nlayer_discriminator_forward.16} parent=0 // pred_region
    _
  $region17: #{nlayer_discriminator_forward.16} parent=0 // pred_fallthru
    _
  // Predicated region
  $region18: #{nlayer_discriminator_forward.16} parent=0 // pred_check
    _
  $region19: #{nlayer_discriminator_forward.16} parent=0 // pred_check_branch
    %57 = sbr.rel (0) target = $region21
  $region20: #{nlayer_discriminator_forward.16} parent=0 // pred_region
    _
  $region21: #{nlayer_discriminator_forward.16} parent=0 // pred_fallthru
    _
  // Predicated region
  $region22: #{nlayer_discriminator_forward.16} parent=0 // pred_check
    _
  $region23: #{nlayer_discriminator_forward.16} parent=0 // pred_check_branch
    %59 = sbr.rel (0) target = $region25
  $region24: #{nlayer_discriminator_forward.16} parent=0 // pred_region
    _
  $region25: #{nlayer_discriminator_forward.16} parent=0 // pred_fallthru
    _

// kernel: nlayer_discriminator_forward.19
$region0: #{nlayer_discriminator_forward.19}
  #allocation0 [shape = 'u32[]', space=smem, size = 0x4, offset = 0x4, fixed_abs, tag = 'smem constant byte address 0x4 - core index']
  #allocation1 [shape = 'u32[144,128]{1,0:T(1,128)}', space=vmem, size = 0x12000, scoped, tag = 'internal scratch']
  %s0 = inlined_call_operand.vmem [shape: bf16[24,128], index: 0, kind: input, shape index: {}]
  %s1 = inlined_call_operand.vmem [shape: f32[1,128], index: 1, kind: output, shape index: {0}]
  %s2 = inlined_call_operand.vmem [shape: f32[1,128], index: 2, kind: output, shape index: {1}]
  %3 = xla_tuple %s1, %s2
  %s4 = sld [smem:[#allocation0]]
  $region26: #{nlayer_discriminator_forward.19} parent=0
    _
  %s6 = ssub.s32 1, %s4
  %s7 = scalar_select 0, %s6, %s4
  // Predicated region
  $region2: #{nlayer_discriminator_forward.19} parent=0 // pred_check
    _
  $region3: #{nlayer_discriminator_forward.19} parent=0 // pred_check_branch
    %9 = sbr.rel (0) target = $region5
  $region4: #{nlayer_discriminator_forward.19} parent=0 // pred_region
    _
  $region5: #{nlayer_discriminator_forward.19} parent=0 // pred_fallthru
    _
  %p10 = scmp.eq.s32.totalorder 0, 0
  // Predicated region
  $region6: #{nlayer_discriminator_forward.19} parent=0 // pred_check
    %p11 = pneg %p10
  $region7: #{nlayer_discriminator_forward.19} parent=0 // pred_check_branch
    %13 = sbr.rel (%p11) target = $region9
  $region8: #{nlayer_discriminator_forward.19} parent=0 // pred_region
    %14 = vst [vmem:[%s1] sm:$0x1] 0.0
    %15 = vst [vmem:[%s2] sm:$0x1] 0.0
  $region9: #{nlayer_discriminator_forward.19} parent=0 // pred_fallthru
    _
  %v16 = vld [vmem:[%s0] sm:$0xf]
  %v17 = vld [vmem:[%s0 + $0x4] sm:$0xf]
  %v18 = vld [vmem:[%s0 + $0x8] sm:$0xf]
  %v19 = vunpack.c.l.bf16 %v16
  %v20 = vunpack.c.l.bf16 %v17
  %v21 = vunpack.c.l.bf16 %v18
  %v22 = vld [vmem:[%s1] sm:$0x1]
  %v23 = vadd.f32 %v19, %v20
  %v24 = vadd.f32 %v23, %v21
  %v25 = vrot.slane %v24, 4
  %v26 = vadd.f32 %v24, %v25
  %v27 = vrot.slane %v26, 2
  %v28 = vadd.f32 %v26, %v27
  %v29 = vrot.slane %v28, 1
  %v30 = vadd.f32 %v28, %v29
  %v31 = vadd.f32 %v22, %v30
  %32 = vst [vmem:[%s1] sm:$0x1] %v31
  %v33 = vld [vmem:[%s2] sm:$0x1]
  %v34 = vmul.f32 %v19, %v19
  %v35 = vmul.f32 %v20, %v20
  %v36 = vmul.f32 %v21, %v21
  %v37 = vadd.f32 %v34, %v35
  %v38 = vadd.f32 %v37, %v36
  %v39 = vrot.slane %v38, 4
  %v40 = vadd.f32 %v38, %v39
  %v41 = vrot.slane %v40, 2
  %v42 = vadd.f32 %v40, %v41
  %v43 = vrot.slane %v42, 1
  %v44 = vadd.f32 %v42, %v43
  %v45 = vadd.f32 %v33, %v44
  %46 = vst [vmem:[%s2] sm:$0x1] %v45
  // Predicated region
  $region10: #{nlayer_discriminator_forward.19} parent=0 // pred_check
    _
  $region11: #{nlayer_discriminator_forward.19} parent=0 // pred_check_branch
    %48 = sbr.rel (0) target = $region13
  $region12: #{nlayer_discriminator_forward.19} parent=0 // pred_region
    _
  $region13: #{nlayer_discriminator_forward.19} parent=0 // pred_fallthru
    _
  // Predicated region
  $region14: #{nlayer_discriminator_forward.19} parent=0 // pred_check
    _
  $region15: #{nlayer_discriminator_forward.19} parent=0 // pred_check_branch
    %50 = sbr.rel (0) target = $region17
  $region16: #{nlayer_discriminator_forward.19} parent=0 // pred_region
    _
  $region17: #{nlayer_discriminator_forward.19} parent=0 // pred_fallthru
    _
  // Predicated region
  $region18: #{nlayer_discriminator_forward.19} parent=0 // pred_check
    _
  $region19: #{nlayer_discriminator_forward.19} parent=0 // pred_check_branch
    %52 = sbr.rel (0) target = $region21
  $region20: #{nlayer_discriminator_forward.19} parent=0 // pred_region
    _
  $region21: #{nlayer_discriminator_forward.19} parent=0 // pred_fallthru
    _
  // Predicated region
  $region22: #{nlayer_discriminator_forward.19} parent=0 // pred_check
    _
  $region23: #{nlayer_discriminator_forward.19} parent=0 // pred_check_branch
    %54 = sbr.rel (0) target = $region25
  $region24: #{nlayer_discriminator_forward.19} parent=0 // pred_region
    _
  $region25: #{nlayer_discriminator_forward.19} parent=0 // pred_fallthru
    _

// kernel: nlayer_discriminator_forward.20
$region0: #{nlayer_discriminator_forward.20}
  #allocation0 [shape = 'u32[]', space=smem, size = 0x4, offset = 0x4, fixed_abs, tag = 'smem constant byte address 0x4 - core index']
  #allocation1 [shape = 'u32[144,128]{1,0:T(1,128)}', space=vmem, size = 0x12000, scoped, tag = 'internal scratch']
  %s0 = inlined_call_operand.vmem [shape: bf16[24,128], index: 0, kind: input, shape index: {}]
  %s1 = inlined_call_operand.vmem [shape: f32[1,128], index: 1, kind: input, shape index: {}]
  %s2 = inlined_call_operand.vmem [shape: f32[1,128], index: 2, kind: input, shape index: {}]
  %s3 = inlined_call_operand.vmem [shape: bf16[24,128], index: 3, kind: output, shape index: {}]
  %s4 = sld [smem:[#allocation0]]
  $region22: #{nlayer_discriminator_forward.20} parent=0
    _
  %s6 = ssub.s32 1, %s4
  %s7 = scalar_select 0, %s6, %s4
  // Predicated region
  $region2: #{nlayer_discriminator_forward.20} parent=0 // pred_check
    _
  $region3: #{nlayer_discriminator_forward.20} parent=0 // pred_check_branch
    %9 = sbr.rel (0) target = $region5
  $region4: #{nlayer_discriminator_forward.20} parent=0 // pred_region
    _
  $region5: #{nlayer_discriminator_forward.20} parent=0 // pred_fallthru
    _
  // Predicated region
  $region6: #{nlayer_discriminator_forward.20} parent=0 // pred_check
    _
  $region7: #{nlayer_discriminator_forward.20} parent=0 // pred_check_branch
    %11 = sbr.rel (0) target = $region9
  $region8: #{nlayer_discriminator_forward.20} parent=0 // pred_region
    _
  $region9: #{nlayer_discriminator_forward.20} parent=0 // pred_fallthru
    _
  // Predicated region
  $region10: #{nlayer_discriminator_forward.20} parent=0 // pred_check
    _
  $region11: #{nlayer_discriminator_forward.20} parent=0 // pred_check_branch
    %13 = sbr.rel (0) target = $region13
  $region12: #{nlayer_discriminator_forward.20} parent=0 // pred_region
    _
  $region13: #{nlayer_discriminator_forward.20} parent=0 // pred_fallthru
    _
  %v14 = vld [vmem:[%s0] sm:$0xf]
  %v15 = vld [vmem:[%s0 + $0x4] sm:$0xf]
  %v16 = vld [vmem:[%s0 + $0x8] sm:$0xf]
  %v17 = vunpack.c.l.bf16 %v14
  %v18 = vunpack.c.l.bf16 %v15
  %v19 = vunpack.c.l.bf16 %v16
  %v20 = vld [vmem:[%s1] sm:$0x1]
  %v22 = vlaneseq
  %v23 = vshrl.u32 %v22, 7
  %v24 = vsub.s32 0, %v23
  %v25 = vrot.slane %v20, %v24
  %v27 = vmul.f32 %v17, %v25
  %v28 = vmul.f32 %v18, %v25
  %v29 = vmul.f32 %v19, %v25
  %v30 = vld [vmem:[%s2] sm:$0x1]
  %v32 = vlaneseq
  %v33 = vshrl.u32 %v32, 7
  %v34 = vsub.s32 0, %v33
  %v35 = vrot.slane %v30, %v34
  %v37 = vadd.f32 %v27, %v35
  %v38 = vadd.f32 %v28, %v35
  %v39 = vadd.f32 %v29, %v35
  %vm40 = vcmp.ge.f32.partialorder %v37, 0.0
  %vm41 = vcmp.ge.f32.partialorder %v38, 0.0
  %vm42 = vcmp.ge.f32.partialorder %v39, 0.0
  %v43 = vmul.f32 %v37, 0.2
  %v44 = vmul.f32 %v38, 0.2
  %v45 = vmul.f32 %v39, 0.2
  %v46 = vsel %vm40, %v37, %v43
  %v47 = vsel %vm41, %v38, %v44
  %v48 = vsel %vm42, %v39, %v45
  %v49 = vpack.c.bf16 %v47, %v46
  %v50 = vpack.c.bf16 %v48, %v48
  %v53 = vunpack.c.l.b16 %v49
  %v54 = vunpack.c.h.b16 %v49
  %v55 = vunpack.c.l.b16 %v50
  %v56 = vpack.c.b16 %v53, %v53
  %v57 = vpack.c.b16 %v54, %v54
  %v58 = vpack.c.b16 %v55, %v55
  %62 = vst [vmem:[%s3] sm:$0xf] %v56
  %63 = vst [vmem:[%s3 + $0x4] sm:$0xf] %v57
  %64 = vst [vmem:[%s3 + $0x8] sm:$0xf] %v58
  // Predicated region
  $region14: #{nlayer_discriminator_forward.20} parent=0 // pred_check
    _
  $region15: #{nlayer_discriminator_forward.20} parent=0 // pred_check_branch
    %66 = sbr.rel (0) target = $region17
  $region16: #{nlayer_discriminator_forward.20} parent=0 // pred_region
    _
  $region17: #{nlayer_discriminator_forward.20} parent=0 // pred_fallthru
    _
  // Predicated region
  $region18: #{nlayer_discriminator_forward.20} parent=0 // pred_check
    _
  $region19: #{nlayer_discriminator_forward.20} parent=0 // pred_check_branch
    %68 = sbr.rel (0) target = $region21
  $region20: #{nlayer_discriminator_forward.20} parent=0 // pred_region
    _
  $region21: #{nlayer_discriminator_forward.20} parent=0 // pred_fallthru
    _

// kernel: nlayer_discriminator_forward.18
$region0: #{nlayer_discriminator_forward.18}
  #allocation0 [shape = 'u32[]', space=smem, size = 0x4, offset = 0x4, fixed_abs, tag = 'smem constant byte address 0x4 - core index']
  #allocation1 [shape = 'u32[144,128]{1,0:T(1,128)}', space=vmem, size = 0x12000, scoped, tag = 'internal scratch']
  #allocation2 [shape = 'f32[24,128]{1,0:T(8,128)}', space=vmem, size = 0x3000, scoped, tag = 'scratch operand']
  %s0 = inlined_call_operand.vmem [shape: bf16[24,512], index: 0, kind: input, shape index: {}]
  %s1 = inlined_call_operand.vmem [shape: bf16[512,128], index: 1, kind: input, shape index: {}]
  %s2 = inlined_call_operand.vmem [shape: f32[1,128], index: 2, kind: input, shape index: {}]
  %s3 = inlined_call_operand.vmem [shape: bf16[24,128], index: 3, kind: output, shape index: {}]
  %s4 = sld [smem:[#allocation0]]
  $region30: #{nlayer_discriminator_forward.18} parent=0
    _
  %s6 = ssub.s32 1, %s4
  %s7 = scalar_select 0, %s6, %s4
  // Predicated region
  $region2: #{nlayer_discriminator_forward.18} parent=0 // pred_check
    _
  $region3: #{nlayer_discriminator_forward.18} parent=0 // pred_check_branch
    %9 = sbr.rel (0) target = $region5
  $region4: #{nlayer_discriminator_forward.18} parent=0 // pred_region
    _
  $region5: #{nlayer_discriminator_forward.18} parent=0 // pred_fallthru
    _
  // Predicated region
  $region6: #{nlayer_discriminator_forward.18} parent=0 // pred_check
    _
  $region7: #{nlayer_discriminator_forward.18} parent=0 // pred_check_branch
    %11 = sbr.rel (0) target = $region9
  $region8: #{nlayer_discriminator_forward.18} parent=0 // pred_region
    _
  $region9: #{nlayer_discriminator_forward.18} parent=0 // pred_fallthru
    _
  // Predicated region
  $region10: #{nlayer_discriminator_forward.18} parent=0 // pred_check
    _
  $region11: #{nlayer_discriminator_forward.18} parent=0 // pred_check_branch
    %13 = sbr.rel (0) target = $region13
  $region12: #{nlayer_discriminator_forward.18} parent=0 // pred_region
    _
  $region13: #{nlayer_discriminator_forward.18} parent=0 // pred_fallthru
    _
  %p15 = scmp.eq.s32.totalorder 0, 0
  // Predicated region
  $region14: #{nlayer_discriminator_forward.18} parent=0 // pred_check
    %p16 = pneg %p15
  $region15: #{nlayer_discriminator_forward.18} parent=0 // pred_check_branch
    %18 = sbr.rel (%p16) target = $region17
  $region16: #{nlayer_discriminator_forward.18} parent=0 // pred_region
    %19 = vst [vmem:[#allocation2] sm:$0xff] 0.0
    %20 = vst [vmem:[#allocation2 + $0x8] sm:$0xff] 0.0
    %21 = vst [vmem:[#allocation2 + $0x10] sm:$0xff] 0.0
  $region17: #{nlayer_discriminator_forward.18} parent=0 // pred_fallthru
    _
  %v22 = vld [vmem:[#allocation2] sm:$0xff]
  %v23 = vld [vmem:[#allocation2 + $0x8] sm:$0xff]
  %v24 = vld [vmem:[#allocation2 + $0x10] sm:$0xff]
  %v25 = vld [vmem:[%s0] sm:$0xff]
  %v26 = vld [vmem:[%s0 + $0x8] sm:$0xff]
  %v27 = vld [vmem:[%s0 + $0x10] sm:$0xff]
  %v28 = vld [vmem:[%s0 + $0x18] sm:$0xff]
  %v29 = vld [vmem:[%s0 + $0x20] sm:$0xff]
  %v30 = vld [vmem:[%s0 + $0x28] sm:$0xff]
  %v31 = vld [vmem:[%s1] sm:$0xf]
  %v32 = vld [vmem:[%s1 + $0x4] sm:$0xf]
  %v33 = vld [vmem:[%s1 + $0x8] sm:$0xf]
  %v34 = vld [vmem:[%s1 + $0xc] sm:$0xf]
  %v35 = vld [vmem:[%s1 + $0x10] sm:$0xf]
  %v36 = vld [vmem:[%s1 + $0x14] sm:$0xf]
  %v37 = vld [vmem:[%s1 + $0x18] sm:$0xf]
  %v38 = vld [vmem:[%s1 + $0x1c] sm:$0xf]
  %v39 = vld [vmem:[%s1 + $0x20] sm:$0xf]
  %v40 = vld [vmem:[%s1 + $0x24] sm:$0xf]
  %v41 = vld [vmem:[%s1 + $0x28] sm:$0xf]
  %v42 = vld [vmem:[%s1 + $0x2c] sm:$0xf]
  %v43 = vld [vmem:[%s1 + $0x30] sm:$0xf]
  %v44 = vld [vmem:[%s1 + $0x34] sm:$0xf]
  %v45 = vld [vmem:[%s1 + $0x38] sm:$0xf]
  %v46 = vld [vmem:[%s1 + $0x3c] sm:$0xf]
  %v47 = vld [vmem:[%s1 + $0x40] sm:$0xf]
  %v48 = vld [vmem:[%s1 + $0x44] sm:$0xf]
  %v49 = vld [vmem:[%s1 + $0x48] sm:$0xf]
  %v50 = vld [vmem:[%s1 + $0x4c] sm:$0xf]
  %v51 = vld [vmem:[%s1 + $0x50] sm:$0xf]
  %v52 = vld [vmem:[%s1 + $0x54] sm:$0xf]
  %v53 = vld [vmem:[%s1 + $0x58] sm:$0xf]
  %v54 = vld [vmem:[%s1 + $0x5c] sm:$0xf]
  %v55 = vld [vmem:[%s1 + $0x60] sm:$0xf]
  %v56 = vld [vmem:[%s1 + $0x64] sm:$0xf]
  %v57 = vld [vmem:[%s1 + $0x68] sm:$0xf]
  %v58 = vld [vmem:[%s1 + $0x6c] sm:$0xf]
  %v59 = vld [vmem:[%s1 + $0x70] sm:$0xf]
  %v60 = vld [vmem:[%s1 + $0x74] sm:$0xf]
  %v61 = vld [vmem:[%s1 + $0x78] sm:$0xf]
  %v62 = vld [vmem:[%s1 + $0x7c] sm:$0xf]
  %v63 = vld [vmem:[%s1 + $0x80] sm:$0xf]
  %v64 = vld [vmem:[%s1 + $0x84] sm:$0xf]
  %v65 = vld [vmem:[%s1 + $0x88] sm:$0xf]
  %v66 = vld [vmem:[%s1 + $0x8c] sm:$0xf]
  %v67 = vld [vmem:[%s1 + $0x90] sm:$0xf]
  %v68 = vld [vmem:[%s1 + $0x94] sm:$0xf]
  %v69 = vld [vmem:[%s1 + $0x98] sm:$0xf]
  %v70 = vld [vmem:[%s1 + $0x9c] sm:$0xf]
  %v71 = vld [vmem:[%s1 + $0xa0] sm:$0xf]
  %v72 = vld [vmem:[%s1 + $0xa4] sm:$0xf]
  %v73 = vld [vmem:[%s1 + $0xa8] sm:$0xf]
  %v74 = vld [vmem:[%s1 + $0xac] sm:$0xf]
  %v75 = vld [vmem:[%s1 + $0xb0] sm:$0xf]
  %v76 = vld [vmem:[%s1 + $0xb4] sm:$0xf]
  %v77 = vld [vmem:[%s1 + $0xb8] sm:$0xf]
  %v78 = vld [vmem:[%s1 + $0xbc] sm:$0xf]
  %v79 = vld [vmem:[%s1 + $0xc0] sm:$0xf]
  %v80 = vld [vmem:[%s1 + $0xc4] sm:$0xf]
  %v81 = vld [vmem:[%s1 + $0xc8] sm:$0xf]
  %v82 = vld [vmem:[%s1 + $0xcc] sm:$0xf]
  %v83 = vld [vmem:[%s1 + $0xd0] sm:$0xf]
  %v84 = vld [vmem:[%s1 + $0xd4] sm:$0xf]
  %v85 = vld [vmem:[%s1 + $0xd8] sm:$0xf]
  %v86 = vld [vmem:[%s1 + $0xdc] sm:$0xf]
  %v87 = vld [vmem:[%s1 + $0xe0] sm:$0xf]
  %v88 = vld [vmem:[%s1 + $0xe4] sm:$0xf]
  %v89 = vld [vmem:[%s1 + $0xe8] sm:$0xf]
  %v90 = vld [vmem:[%s1 + $0xec] sm:$0xf]
  %v91 = vld [vmem:[%s1 + $0xf0] sm:$0xf]
  %v92 = vld [vmem:[%s1 + $0xf4] sm:$0xf]
  %v93 = vld [vmem:[%s1 + $0xf8] sm:$0xf]
  %v94 = vld [vmem:[%s1 + $0xfc] sm:$0xf]
  %v101 = vunpack.c.l.b16 %v25
  %v102 = vunpack.c.h.b16 %v25
  %v103 = vunpack.c.l.b16 %v26
  %v104 = vunpack.c.h.b16 %v26
  %v105 = vunpack.c.l.b16 %v27
  %v106 = vunpack.c.h.b16 %v27
  %v107 = vunpack.c.l.b16 %v28
  %v108 = vunpack.c.h.b16 %v28
  %v109 = vunpack.c.l.b16 %v29
  %v110 = vunpack.c.h.b16 %v29
  %v111 = vunpack.c.l.b16 %v30
  %v112 = vunpack.c.h.b16 %v30
  %v113 = vpack.c.b16 %v105, %v101
  %v114 = vpack.c.b16 %v106, %v102
  %v115 = vpack.c.b16 %v107, %v103
  %v116 = vpack.c.b16 %v108, %v104
  %v117 = vpack.c.b16 %v109, %v109
  %v118 = vpack.c.b16 %v110, %v110
  %v119 = vpack.c.b16 %v111, %v111
  %v120 = vpack.c.b16 %v112, %v112
  %v193 = vunpack.c.l.b16 %v31
  %v194 = vunpack.c.l.b16 %v32
  %v195 = vunpack.c.l.b16 %v33
  %v196 = vunpack.c.l.b16 %v34
  %v197 = vunpack.c.l.b16 %v35
  %v198 = vunpack.c.l.b16 %v36
  %v199 = vunpack.c.l.b16 %v37
  %v200 = vunpack.c.l.b16 %v38
  %v201 = vunpack.c.l.b16 %v39
  %v202 = vunpack.c.l.b16 %v40
  %v203 = vunpack.c.l.b16 %v41
  %v204 = vunpack.c.l.b16 %v42
  %v205 = vunpack.c.l.b16 %v43
  %v206 = vunpack.c.l.b16 %v44
  %v207 = vunpack.c.l.b16 %v45
  %v208 = vunpack.c.l.b16 %v46
  %v209 = vunpack.c.l.b16 %v47
  %v210 = vunpack.c.l.b16 %v48
  %v211 = vunpack.c.l.b16 %v49
  %v212 = vunpack.c.l.b16 %v50
  %v213 = vunpack.c.l.b16 %v51
  %v214 = vunpack.c.l.b16 %v52
  %v215 = vunpack.c.l.b16 %v53
  %v216 = vunpack.c.l.b16 %v54
  %v217 = vunpack.c.l.b16 %v55
  %v218 = vunpack.c.l.b16 %v56
  %v219 = vunpack.c.l.b16 %v57
  %v220 = vunpack.c.l.b16 %v58
  %v221 = vunpack.c.l.b16 %v59
  %v222 = vunpack.c.l.b16 %v60
  %v223 = vunpack.c.l.b16 %v61
  %v224 = vunpack.c.l.b16 %v62
  %v225 = vunpack.c.l.b16 %v63
  %v226 = vunpack.c.l.b16 %v64
  %v227 = vunpack.c.l.b16 %v65
  %v228 = vunpack.c.l.b16 %v66
  %v229 = vunpack.c.l.b16 %v67
  %v230 = vunpack.c.l.b16 %v68
  %v231 = vunpack.c.l.b16 %v69
  %v232 = vunpack.c.l.b16 %v70
  %v233 = vunpack.c.l.b16 %v71
  %v234 = vunpack.c.l.b16 %v72
  %v235 = vunpack.c.l.b16 %v73
  %v236 = vunpack.c.l.b16 %v74
  %v237 = vunpack.c.l.b16 %v75
  %v238 = vunpack.c.l.b16 %v76
  %v239 = vunpack.c.l.b16 %v77
  %v240 = vunpack.c.l.b16 %v78
  %v241 = vunpack.c.l.b16 %v79
  %v242 = vunpack.c.l.b16 %v80
  %v243 = vunpack.c.l.b16 %v81
  %v244 = vunpack.c.l.b16 %v82
  %v245 = vunpack.c.l.b16 %v83
  %v246 = vunpack.c.l.b16 %v84
  %v247 = vunpack.c.l.b16 %v85
  %v248 = vunpack.c.l.b16 %v86
  %v249 = vunpack.c.l.b16 %v87
  %v250 = vunpack.c.l.b16 %v88
  %v251 = vunpack.c.l.b16 %v89
  %v252 = vunpack.c.l.b16 %v90
  %v253 = vunpack.c.l.b16 %v91
  %v254 = vunpack.c.l.b16 %v92
  %v255 = vunpack.c.l.b16 %v93
  %v256 = vunpack.c.l.b16 %v94
  %v257 = vpack.c.b16 %v194, %v193
  %v258 = vpack.c.b16 %v196, %v195
  %v259 = vpack.c.b16 %v198, %v197
  %v260 = vpack.c.b16 %v200, %v199
  %v261 = vpack.c.b16 %v202, %v201
  %v262 = vpack.c.b16 %v204, %v203
  %v263 = vpack.c.b16 %v206, %v205
  %v264 = vpack.c.b16 %v208, %v207
  %v265 = vpack.c.b16 %v210, %v209
  %v266 = vpack.c.b16 %v212, %v211
  %v267 = vpack.c.b16 %v214, %v213
  %v268 = vpack.c.b16 %v216, %v215
  %v269 = vpack.c.b16 %v218, %v217
  %v270 = vpack.c.b16 %v220, %v219
  %v271 = vpack.c.b16 %v222, %v221
  %v272 = vpack.c.b16 %v224, %v223
  %v273 = vpack.c.b16 %v226, %v225
  %v274 = vpack.c.b16 %v228, %v227
  %v275 = vpack.c.b16 %v230, %v229
  %v276 = vpack.c.b16 %v232, %v231
  %v277 = vpack.c.b16 %v234, %v233
  %v278 = vpack.c.b16 %v236, %v235
  %v279 = vpack.c.b16 %v238, %v237
  %v280 = vpack.c.b16 %v240, %v239
  %v281 = vpack.c.b16 %v242, %v241
  %v282 = vpack.c.b16 %v244, %v243
  %v283 = vpack.c.b16 %v246, %v245
  %v284 = vpack.c.b16 %v248, %v247
  %v285 = vpack.c.b16 %v250, %v249
  %v286 = vpack.c.b16 %v252, %v251
  %v287 = vpack.c.b16 %v254, %v253
  %v288 = vpack.c.b16 %v256, %v255
  %321 = vmatprep.subr.bf16.mxu0 0
  %322 = vmatpush1.bf16.msra.mxu0 %v257
  %323 = vmatprep.subr.bf16.mxu0 0
  %324 = vmatpush1.bf16.msra.mxu0 %v258
  %325 = vmatprep.subr.bf16.mxu0 0
  %326 = vmatpush1.bf16.msra.mxu0 %v259
  %327 = vmatprep.subr.bf16.mxu0 0
  %328 = vmatpush1.bf16.msra.mxu0 %v260
  %329 = vmatprep.subr.bf16.mxu0 0
  %330 = vmatpush1.bf16.msra.mxu0 %v261
  %331 = vmatprep.subr.bf16.mxu0 0
  %332 = vmatpush1.bf16.msra.mxu0 %v262
  %333 = vmatprep.subr.bf16.mxu0 0
  %334 = vmatpush1.bf16.msra.mxu0 %v263
  %335 = vmatprep.subr.bf16.mxu0 0
  %336 = vmatpush1.bf16.msra.mxu0 %v264
  %337 = vmatprep.subr.bf16.mxu0 0
  %338 = vmatpush1.bf16.msra.mxu0 %v265
  %339 = vmatprep.subr.bf16.mxu0 0
  %340 = vmatpush1.bf16.msra.mxu0 %v266
  %341 = vmatprep.subr.bf16.mxu0 0
  %342 = vmatpush1.bf16.msra.mxu0 %v267
  %343 = vmatprep.subr.bf16.mxu0 0
  %344 = vmatpush1.bf16.msra.mxu0 %v268
  %345 = vmatprep.subr.bf16.mxu0 0
  %346 = vmatpush1.bf16.msra.mxu0 %v269
  %347 = vmatprep.subr.bf16.mxu0 0
  %348 = vmatpush1.bf16.msra.mxu0 %v270
  %349 = vmatprep.subr.bf16.mxu0 0
  %350 = vmatpush1.bf16.msra.mxu0 %v271
  %351 = vmatprep.subr.bf16.mxu0 0
  %352 = vmatpush1.bf16.msra.mxu0 %v272
  %353 = vmatprep.mubr.bf16.mxu0 %v114
  %354 = vmatmul.mubr.bf16.gmra.mrb[0].mxu0 %v113
  %v355 = vpop.f32.mrb[0].mxu0
  %v356 = vadd.f32 0.0, %v355
  %v357 = vpop.f32.mrb[0].mxu0
  %v358 = vpop.f32.mrb[0].mxu0
  %v359 = vadd.f32 0.0, %v358
  %v360 = vpop.f32.mrb[0].mxu0
  %361 = vmatprep.mubr.bf16.mxu0 %v118
  %362 = vmatmul.mubr.bf16.gmra.mrb[0].mxu0 %v117
  %v363 = vpop.f32.mrb[0].mxu0
  %v364 = vadd.f32 0.0, %v363
  %v365 = vpop.f32.mrb[0].mxu0
  %v366 = vpop.f32.mrb[0].mxu0
  %v367 = vpop.f32.mrb[0].mxu0
  %368 = vdwg.mxu0
  %369 = vmatprep.subr.bf16.mxu0 0
  %370 = vmatpush1.bf16.msra.mxu0 %v273
  %371 = vmatprep.subr.bf16.mxu0 0
  %372 = vmatpush1.bf16.msra.mxu0 %v274
  %373 = vmatprep.subr.bf16.mxu0 0
  %374 = vmatpush1.bf16.msra.mxu0 %v275
  %375 = vmatprep.subr.bf16.mxu0 0
  %376 = vmatpush1.bf16.msra.mxu0 %v276
  %377 = vmatprep.subr.bf16.mxu0 0
  %378 = vmatpush1.bf16.msra.mxu0 %v277
  %379 = vmatprep.subr.bf16.mxu0 0
  %380 = vmatpush1.bf16.msra.mxu0 %v278
  %381 = vmatprep.subr.bf16.mxu0 0
  %382 = vmatpush1.bf16.msra.mxu0 %v279
  %383 = vmatprep.subr.bf16.mxu0 0
  %384 = vmatpush1.bf16.msra.mxu0 %v280
  %385 = vmatprep.subr.bf16.mxu0 0
  %386 = vmatpush1.bf16.msra.mxu0 %v281
  %387 = vmatprep.subr.bf16.mxu0 0
  %388 = vmatpush1.bf16.msra.mxu0 %v282
  %389 = vmatprep.subr.bf16.mxu0 0
  %390 = vmatpush1.bf16.msra.mxu0 %v283
  %391 = vmatprep.subr.bf16.mxu0 0
  %392 = vmatpush1.bf16.msra.mxu0 %v284
  %393 = vmatprep.subr.bf16.mxu0 0
  %394 = vmatpush1.bf16.msra.mxu0 %v285
  %395 = vmatprep.subr.bf16.mxu0 0
  %396 = vmatpush1.bf16.msra.mxu0 %v286
  %397 = vmatprep.subr.bf16.mxu0 0
  %398 = vmatpush1.bf16.msra.mxu0 %v287
  %399 = vmatprep.subr.bf16.mxu0 0
  %400 = vmatpush1.bf16.msra.mxu0 %v288
  %401 = vmatprep.mubr.bf16.mxu0 %v116
  %402 = vmatmul.mubr.bf16.gmra.mrb[0].mxu0 %v115
  %v403 = vpop.f32.mrb[0].mxu0
  %v404 = vadd.f32 %v356, %v403
  %v405 = vpop.f32.mrb[0].mxu0
  %v406 = vpop.f32.mrb[0].mxu0
  %v407 = vadd.f32 %v359, %v406
  %v408 = vpop.f32.mrb[0].mxu0
  %409 = vmatprep.mubr.bf16.mxu0 %v120
  %410 = vmatmul.mubr.bf16.gmra.mrb[0].mxu0 %v119
  %v411 = vpop.f32.mrb[0].mxu0
  %v412 = vadd.f32 %v364, %v411
  %v413 = vpop.f32.mrb[0].mxu0
  %v414 = vpop.f32.mrb[0].mxu0
  %v415 = vpop.f32.mrb[0].mxu0
  %416 = vdwg.mxu0
  %v417 = vadd.f32 %v22, %v404
  %v418 = vadd.f32 %v23, %v407
  %v419 = vadd.f32 %v24, %v412
  %420 = vst [vmem:[#allocation2] sm:$0xff] %v417
  %421 = vst [vmem:[#allocation2 + $0x8] sm:$0xff] %v418
  %422 = vst [vmem:[#allocation2 + $0x10] sm:$0xff] %v419
  // Predicated region
  $region18: #{nlayer_discriminator_forward.18} parent=0 // pred_check
    %p423 = pneg %p15
  $region19: #{nlayer_discriminator_forward.18} parent=0 // pred_check_branch
    %425 = sbr.rel (%p423) target = $region21
  $region20: #{nlayer_discriminator_forward.18} parent=0 // pred_region
    %v426 = vld [vmem:[#allocation2] sm:$0xff]
    %v427 = vld [vmem:[#allocation2 + $0x8] sm:$0xff]
    %v428 = vld [vmem:[#allocation2 + $0x10] sm:$0xff]
    %v429 = vld [vmem:[%s2] sm:$0x1]
    %v431 = vlaneseq
    %v432 = vshrl.u32 %v431, 7
    %v433 = vsub.s32 0, %v432
    %v434 = vrot.slane %v429, %v433
    %v436 = vadd.f32 %v426, %v434
    %v437 = vadd.f32 %v427, %v434
    %v438 = vadd.f32 %v428, %v434
    %v439 = vpack.c.bf16 %v437, %v436
    %v440 = vpack.c.bf16 %v438, %v438
    %v443 = vunpack.c.l.b16 %v439
    %v444 = vunpack.c.h.b16 %v439
    %v445 = vunpack.c.l.b16 %v440
    %v446 = vpack.c.b16 %v443, %v443
    %v447 = vpack.c.b16 %v444, %v444
    %v448 = vpack.c.b16 %v445, %v445
    %452 = vst [vmem:[%s3] sm:$0xf] %v446
    %453 = vst [vmem:[%s3 + $0x4] sm:$0xf] %v447
    %454 = vst [vmem:[%s3 + $0x8] sm:$0xf] %v448
  $region21: #{nlayer_discriminator_forward.18} parent=0 // pred_fallthru
    _
  // Predicated region
  $region22: #{nlayer_discriminator_forward.18} parent=0 // pred_check
    _
  $region23: #{nlayer_discriminator_forward.18} parent=0 // pred_check_branch
    %456 = sbr.rel (0) target = $region25
  $region24: #{nlayer_discriminator_forward.18} parent=0 // pred_region
    _
  $region25: #{nlayer_discriminator_forward.18} parent=0 // pred_fallthru
    _
  // Predicated region
  $region26: #{nlayer_discriminator_forward.18} parent=0 // pred_check
    _
  $region27: #{nlayer_discriminator_forward.18} parent=0 // pred_check_branch
    %458 = sbr.rel (0) target = $region29
  $region28: #{nlayer_discriminator_forward.18} parent=0 // pred_region
    _
  $region29: #{nlayer_discriminator_forward.18} parent=0 // pred_fallthru
    _

// kernel: nlayer_discriminator_forward.21
$region0: #{nlayer_discriminator_forward.21}
  #allocation0 [shape = 'u32[]', space=smem, size = 0x4, offset = 0x4, fixed_abs, tag = 'smem constant byte address 0x4 - core index']
  #allocation1 [shape = 'u32[144,128]{1,0:T(1,128)}', space=vmem, size = 0x12000, scoped, tag = 'internal scratch']
  #allocation2 [shape = 'f32[8,128]{1,0:T(8,128)}', space=vmem, size = 0x1000, scoped, tag = 'scratch operand']
  %s0 = inlined_call_operand.vmem [shape: bf16[8,1024], index: 0, kind: input, shape index: {}]
  %s1 = inlined_call_operand.vmem [shape: bf16[1024,128], index: 1, kind: input, shape index: {}]
  %s2 = inlined_call_operand.vmem [shape: f32[1,128], index: 2, kind: input, shape index: {}]
  %s3 = inlined_call_operand.vmem [shape: f32[8,128], index: 3, kind: output, shape index: {}]
  %s4 = sld [smem:[#allocation0]]
  $region53: #{nlayer_discriminator_forward.21} parent=0
    _
  %s6 = ssub.s32 1, %s4
  %s7 = scalar_select 0, %s6, %s4
  loop: start=0, step=1, limit=4
  $region2: #{nlayer_discriminator_forward.21} parent=0 // loop_pre_header
    _
  $region3: #{nlayer_discriminator_forward.21} parent=0 // loop_header
    %s9 = sphi 0, %s13
    %p10 = scmp.ge.s32.totalorder %s9, 4
    %s16 = sphi 0, %s35
    %s17 = sphi 0, %s31
    %s18 = sphi 0, %s27
    %s19 = sphi 0, %s16
    %s20 = sphi 0, %s17
    %s21 = sphi 0, %s18
    %s22 = sphi 0, %s19
    %s23 = sphi 0, %s20
    %s24 = sphi 0, %s21
    %s40 = sphi 0, %s42
    %s43 = sphi 0, %s40
    %s44 = sphi 0, %s43
    %s60 = sphi 0, %s44
    %s68 = sphi 0, %s70
    %s71 = sphi 0, %s68
    %s72 = sphi 0, %s71
    %s88 = sphi 0, %s72
    %s94 = sphi 0, %s96
    %s97 = sphi 0, %s94
    %s98 = sphi 0, %s97
    %s114 = sphi 0, %s98
    %s122 = sphi 0, %s124
    %s125 = sphi 0, %s122
    %s126 = sphi 0, %s125
    %s142 = sphi 0, %s126
  $region4: #{nlayer_discriminator_forward.21} parent=0 // loop_header_branch
    %12 = sbr.rel (%p10) target = $region8
  $region5: #{nlayer_discriminator_forward.21} parent=0 // loop_body
    %s14 = ssub.s32 %s9, 1
    %s15 = ssub.s32 %s9, 2
    %s25 = sadd.s32 1, %s18
    %p26 = scmp.ge.s32.totalorder %s25, 2
    %s27 = scalar_select %p26, 0, %s25
    %s28 = sadd.s32 1, %s17
    %s29 = scalar_select %p26, %s28, %s17
    %p30 = scmp.ge.s32.totalorder %s29, 1
    %s31 = scalar_select %p30, 0, %s29
    %s32 = sadd.s32 1, %s16
    %s33 = scalar_select %p30, %s32, %s16
    %p34 = scmp.ge.s32.totalorder %s33, 1
    %s35 = scalar_select %p34, 0, %s33
    %s36 = ssub.s32 %s16, %s35
    %s37 = ssub.s32 %s18, %s27
    %s38 = sor.u32 %s36, %s37
    %p39 = scmp.eq.s32.totalorder %s38, 0
    %s41 = sadd.s32 %s40, 1
    %s42 = scalar_select %p39, %s40, %s41
    %p45 = pneg %p39
    %p46 = scmp.eq.s32.totalorder %s9, 1
    %p47 = por %p45, %p46
    %p48 = scmp.ne.s32.totalorder %s40, %s43
    %p49 = scmp.eq.s32.totalorder %s9, 0
    %p50 = por %p48, %p49
    %p51 = scmp.ne.s32.totalorder %s40, %s43
    %p52 = scmp.eq.s32.totalorder %s14, 1
    %p53 = por %p51, %p52
    %p54 = scmp.ne.s32.totalorder %s43, %s44
    %p55 = scmp.eq.s32.totalorder %s14, 0
    %p56 = por %p54, %p55
    %p57 = scmp.ne.s32.totalorder %s43, %s44
    %p58 = scmp.eq.s32.totalorder %s15, 1
    %p59 = por %p57, %p58
    %p61 = scmp.ne.s32.totalorder %s44, %s60
    %p62 = scmp.eq.s32.totalorder %s15, 0
    %p63 = por %p61, %p62
    %s64 = ssub.s32 %s18, %s27
    %s65 = ssub.s32 %s17, %s31
    %s66 = sor.u32 %s64, %s65
    %p67 = scmp.eq.s32.totalorder %s66, 0
    %s69 = sadd.s32 %s68, 1
    %s70 = scalar_select %p67, %s68, %s69
    %p73 = pneg %p67
    %p74 = scmp.eq.s32.totalorder %s9, 1
    %p75 = por %p73, %p74
    %p76 = scmp.ne.s32.totalorder %s68, %s71
    %p77 = scmp.eq.s32.totalorder %s9, 0
    %p78 = por %p76, %p77
    %p79 = scmp.ne.s32.totalorder %s68, %s71
    %p80 = scmp.eq.s32.totalorder %s14, 1
    %p81 = por %p79, %p80
    %p82 = scmp.ne.s32.totalorder %s71, %s72
    %p83 = scmp.eq.s32.totalorder %s14, 0
    %p84 = por %p82, %p83
    %p85 = scmp.ne.s32.totalorder %s71, %s72
    %p86 = scmp.eq.s32.totalorder %s15, 1
    %p87 = por %p85, %p86
    %p89 = scmp.ne.s32.totalorder %s72, %s88
    %p90 = scmp.eq.s32.totalorder %s15, 0
    %p91 = por %p89, %p90
    %s92 = ssub.s32 %s17, %s31
    %p93 = scmp.eq.s32.totalorder %s92, 0
    %s95 = sadd.s32 %s94, 1
    %s96 = scalar_select %p93, %s94, %s95
    %p99 = pneg %p93
    %p100 = scmp.eq.s32.totalorder %s9, 1
    %p101 = por %p99, %p100
    %p102 = scmp.ne.s32.totalorder %s94, %s97
    %p103 = scmp.eq.s32.totalorder %s9, 0
    %p104 = por %p102, %p103
    %p105 = scmp.ne.s32.totalorder %s94, %s97
    %p106 = scmp.eq.s32.totalorder %s14, 1
    %p107 = por %p105, %p106
    %p108 = scmp.ne.s32.totalorder %s97, %s98
    %p109 = scmp.eq.s32.totalorder %s14, 0
    %p110 = por %p108, %p109
    %p111 = scmp.ne.s32.totalorder %s97, %s98
    %p112 = scmp.eq.s32.totalorder %s15, 1
    %p113 = por %p111, %p112
    %p115 = scmp.ne.s32.totalorder %s98, %s114
    %p116 = scmp.eq.s32.totalorder %s15, 0
    %p117 = por %p115, %p116
    %s118 = ssub.s32 %s16, %s35
    %s119 = ssub.s32 %s17, %s31
    %s120 = sor.u32 %s118, %s119
    %p121 = scmp.eq.s32.totalorder %s120, 0
    %s123 = sadd.s32 %s122, 1
    %s124 = scalar_select %p121, %s122, %s123
    %p127 = pneg %p121
    %p128 = scmp.eq.s32.totalorder %s9, 1
    %p129 = por %p127, %p128
    %p130 = scmp.ne.s32.totalorder %s122, %s125
    %p131 = scmp.eq.s32.totalorder %s9, 0
    %p132 = por %p130, %p131
    %p133 = scmp.ne.s32.totalorder %s122, %s125
    %p134 = scmp.eq.s32.totalorder %s14, 1
    %p135 = por %p133, %p134
    %p136 = scmp.ne.s32.totalorder %s125, %s126
    %p137 = scmp.eq.s32.totalorder %s14, 0
    %p138 = por %p136, %p137
    %p139 = scmp.ne.s32.totalorder %s125, %s126
    %p140 = scmp.eq.s32.totalorder %s15, 1
    %p141 = por %p139, %p140
    %p143 = scmp.ne.s32.totalorder %s126, %s142
    %p144 = scmp.eq.s32.totalorder %s15, 0
    %p145 = por %p143, %p144
    %p146 = scmp.le.s32.totalorder 1, %s9
    %p147 = scmp.lt.s32.totalorder %s9, 3
    %p148 = pnand %p146, %p147
    %p149 = pneg %p148
    // Predicated region
    $region9: #{nlayer_discriminator_forward.21} parent=5 // pred_check
      _
    $region10: #{nlayer_discriminator_forward.21} parent=5 // pred_check_branch
      %151 = sbr.rel (%p148) target = $region12
    $region11: #{nlayer_discriminator_forward.21} parent=5 // pred_region
      %s152 = ssub.s32 %s9, 1
      // Predicated region
      $region13: #{nlayer_discriminator_forward.21} parent=11 // pred_check
        %p153 = pneg %p110
      $region14: #{nlayer_discriminator_forward.21} parent=11 // pred_check_branch
        %155 = sbr.rel (%p153) target = $region16
      $region15: #{nlayer_discriminator_forward.21} parent=11 // pred_region
        %p156 = scmp.lt.s32.totalorder %s20, 0
        %s157 = scalar_select %p156, %s20, 0
        %s158 = scalar_lea.vmem %s2, %s157
      $region16: #{nlayer_discriminator_forward.21} parent=11 // pred_fallthru
        _
    $region12: #{nlayer_discriminator_forward.21} parent=5 // pred_fallthru
      _
    %p159 = scmp.lt.s32.totalorder %s9, 2
    // Predicated region
    $region17: #{nlayer_discriminator_forward.21} parent=5 // pred_check
      %p160 = pneg %p159
    $region18: #{nlayer_discriminator_forward.21} parent=5 // pred_check_branch
      %162 = sbr.rel (%p160) target = $region20
    $region19: #{nlayer_discriminator_forward.21} parent=5 // pred_region
      // Predicated region
      $region21: #{nlayer_discriminator_forward.21} parent=19 // pred_check
        %p163 = pneg %p50
      $region22: #{nlayer_discriminator_forward.21} parent=19 // pred_check_branch
        %165 = sbr.rel (%p163) target = $region24
      $region23: #{nlayer_discriminator_forward.21} parent=19 // pred_region
        %s166 = smul.u32 4, %s18
        %p167 = scmp.lt.s32.totalorder %s16, 0
        %s168 = scalar_select %p167, %s16, 0
        %p169 = scmp.lt.s32.totalorder %s166, 7
        %s170 = scalar_select %p169, %s166, 7
        %s171 = smul.addr %s168, 8
        %s172 = sadd.s32 %s170, %s171
        %s173 = smul.addr %s172, 4
        %s174 = scalar_lea.vmem %s0, %s173
        %s175 = smul.u32 4, %s18
      $region24: #{nlayer_discriminator_forward.21} parent=19 // pred_fallthru
        _
      // Predicated region
      $region25: #{nlayer_discriminator_forward.21} parent=19 // pred_check
        %p176 = pneg %p78
      $region26: #{nlayer_discriminator_forward.21} parent=19 // pred_check_branch
        %178 = sbr.rel (%p176) target = $region28
      $region27: #{nlayer_discriminator_forward.21} parent=19 // pred_region
        %s179 = smul.u32 64, %s18
        %p180 = scmp.lt.s32.totalorder %s179, 127
        %s181 = scalar_select %p180, %s179, 127
        %p182 = scmp.lt.s32.totalorder %s17, 0
        %s183 = scalar_select %p182, %s17, 0
        %s184 = sadd.s32 %s183, %s181
        %s185 = smul.addr %s184, 4
        %s186 = scalar_lea.vmem %s1, %s185
        %s187 = smul.u32 64, %s18
      $region28: #{nlayer_discriminator_forward.21} parent=19 // pred_fallthru
        _
    $region20: #{nlayer_discriminator_forward.21} parent=5 // pred_fallthru
      _
    %p188 = scmp.le.s32.totalorder 1, %s9
    %p189 = scmp.lt.s32.totalorder %s9, 3
    %p190 = pnand %p188, %p189
    %p191 = pneg %p190
    // Predicated region
    $region29: #{nlayer_discriminator_forward.21} parent=5 // pred_check
      _
    $region30: #{nlayer_discriminator_forward.21} parent=5 // pred_check_branch
      %193 = sbr.rel (%p190) target = $region32
    $region31: #{nlayer_discriminator_forward.21} parent=5 // pred_region
      %s194 = ssub.s32 %s9, 1
      %s195 = smul.u32 4, %s21
      %p196 = scmp.lt.s32.totalorder %s19, 0
      %s197 = scalar_select %p196, %s19, 0
      %p198 = scmp.lt.s32.totalorder %s195, 7
      %s199 = scalar_select %p198, %s195, 7
      %s200 = smul.addr %s197, 8
      %s201 = sadd.s32 %s199, %s200
      %s202 = smul.addr %s201, 4
      %s203 = scalar_lea.vmem %s0, %s202
      %p204 = pneg %p56
      %p205 = pneg %p53
      %s206 = smul.u32 64, %s21
      %p207 = scmp.lt.s32.totalorder %s206, 127
      %s208 = scalar_select %p207, %s206, 127
      %p209 = scmp.lt.s32.totalorder %s20, 0
      %s210 = scalar_select %p209, %s20, 0
      %s211 = sadd.s32 %s210, %s208
      %s212 = smul.addr %s211, 4
      %s213 = scalar_lea.vmem %s1, %s212
      %p214 = pneg %p84
      %p215 = pneg %p81
      %p216 = scmp.lt.s32.totalorder %s20, 0
      %s217 = scalar_select %p216, %s20, 0
      %s218 = scalar_lea.vmem %s2, %s217
      %p219 = pneg %p110
      %p220 = pneg %p107
      %p221 = pneg %p138
      %p222 = pneg %p135
      %p223 = scmp.lt.s32.totalorder %s19, 0
      %s224 = scalar_select %p223, %s19, 0
      %p225 = scmp.lt.s32.totalorder %s20, 0
      %s226 = scalar_select %p225, %s20, 0
      %s227 = sadd.s32 %s226, %s224
      %s228 = smul.addr %s227, 8
      %s229 = scalar_lea.vmem %s3, %s228
      %s230 = smul.u32 4, %s21
      %p231 = scmp.lt.s32.totalorder %s19, 0
      %s232 = scalar_select %p231, %s19, 0
      %p233 = scmp.lt.s32.totalorder %s230, 7
      %s234 = scalar_select %p233, %s230, 7
      %s235 = smul.addr %s232, 8
      %s236 = sadd.s32 %s234, %s235
      %s237 = smul.addr %s236, 4
      %s238 = scalar_lea.vmem %s0, %s237
      %s239 = smul.u32 4, %s21
      %s240 = smul.u32 64, %s21
      %p241 = scmp.lt.s32.totalorder %s240, 127
      %s242 = scalar_select %p241, %s240, 127
      %p243 = scmp.lt.s32.totalorder %s20, 0
      %s244 = scalar_select %p243, %s20, 0
      %s245 = sadd.s32 %s244, %s242
      %s246 = smul.addr %s245, 4
      %s247 = scalar_lea.vmem %s1, %s246
      %s248 = smul.u32 64, %s21
      %p249 = scmp.lt.s32.totalorder %s20, 0
      %s250 = scalar_select %p249, %s20, 0
      %s251 = scalar_lea.vmem %s2, %s250
      %p252 = scmp.lt.s32.totalorder %s19, 0
      %s253 = scalar_select %p252, %s19, 0
      %p254 = scmp.lt.s32.totalorder %s20, 0
      %s255 = scalar_select %p254, %s20, 0
      %s256 = sadd.s32 %s255, %s253
      %s257 = smul.addr %s256, 8
      %s258 = scalar_lea.vmem %s3, %s257
      %p260 = scmp.eq.s32.totalorder %s21, 0
      // Predicated region
      $region33: #{nlayer_discriminator_forward.21} parent=31 // pred_check
        %p261 = pneg %p260
      $region34: #{nlayer_discriminator_forward.21} parent=31 // pred_check_branch
        %263 = sbr.rel (%p261) target = $region36
      $region35: #{nlayer_discriminator_forward.21} parent=31 // pred_region
        %264 = vst [vmem:[#allocation2] sm:$0xff] 0.0
      $region36: #{nlayer_discriminator_forward.21} parent=31 // pred_fallthru
        _
      %v265 = vld [vmem:[#allocation2] sm:$0xff]
      %v266 = vld [vmem:[%s238] sm:$0xff]
      %v267 = vld [vmem:[%s238 + $0x8] sm:$0xff]
      %v268 = vld [vmem:[%s247] sm:$0xf]
      %v269 = vld [vmem:[%s247 + $0x4] sm:$0xf]
      %v270 = vld [vmem:[%s247 + $0x8] sm:$0xf]
      %v271 = vld [vmem:[%s247 + $0xc] sm:$0xf]
      %v272 = vld [vmem:[%s247 + $0x10] sm:$0xf]
      %v273 = vld [vmem:[%s247 + $0x14] sm:$0xf]
      %v274 = vld [vmem:[%s247 + $0x18] sm:$0xf]
      %v275 = vld [vmem:[%s247 + $0x1c] sm:$0xf]
      %v276 = vld [vmem:[%s247 + $0x20] sm:$0xf]
      %v277 = vld [vmem:[%s247 + $0x24] sm:$0xf]
      %v278 = vld [vmem:[%s247 + $0x28] sm:$0xf]
      %v279 = vld [vmem:[%s247 + $0x2c] sm:$0xf]
      %v280 = vld [vmem:[%s247 + $0x30] sm:$0xf]
      %v281 = vld [vmem:[%s247 + $0x34] sm:$0xf]
      %v282 = vld [vmem:[%s247 + $0x38] sm:$0xf]
      %v283 = vld [vmem:[%s247 + $0x3c] sm:$0xf]
      %v284 = vld [vmem:[%s247 + $0x40] sm:$0xf]
      %v285 = vld [vmem:[%s247 + $0x44] sm:$0xf]
      %v286 = vld [vmem:[%s247 + $0x48] sm:$0xf]
      %v287 = vld [vmem:[%s247 + $0x4c] sm:$0xf]
      %v288 = vld [vmem:[%s247 + $0x50] sm:$0xf]
      %v289 = vld [vmem:[%s247 + $0x54] sm:$0xf]
      %v290 = vld [vmem:[%s247 + $0x58] sm:$0xf]
      %v291 = vld [vmem:[%s247 + $0x5c] sm:$0xf]
      %v292 = vld [vmem:[%s247 + $0x60] sm:$0xf]
      %v293 = vld [vmem:[%s247 + $0x64] sm:$0xf]
      %v294 = vld [vmem:[%s247 + $0x68] sm:$0xf]
      %v295 = vld [vmem:[%s247 + $0x6c] sm:$0xf]
      %v296 = vld [vmem:[%s247 + $0x70] sm:$0xf]
      %v297 = vld [vmem:[%s247 + $0x74] sm:$0xf]
      %v298 = vld [vmem:[%s247 + $0x78] sm:$0xf]
      %v299 = vld [vmem:[%s247 + $0x7c] sm:$0xf]
      %v300 = vld [vmem:[%s247 + $0x80] sm:$0xf]
      %v301 = vld [vmem:[%s247 + $0x84] sm:$0xf]
      %v302 = vld [vmem:[%s247 + $0x88] sm:$0xf]
      %v303 = vld [vmem:[%s247 + $0x8c] sm:$0xf]
      %v304 = vld [vmem:[%s247 + $0x90] sm:$0xf]
      %v305 = vld [vmem:[%s247 + $0x94] sm:$0xf]
      %v306 = vld [vmem:[%s247 + $0x98] sm:$0xf]
      %v307 = vld [vmem:[%s247 + $0x9c] sm:$0xf]
      %v308 = vld [vmem:[%s247 + $0xa0] sm:$0xf]
      %v309 = vld [vmem:[%s247 + $0xa4] sm:$0xf]
      %v310 = vld [vmem:[%s247 + $0xa8] sm:$0xf]
      %v311 = vld [vmem:[%s247 + $0xac] sm:$0xf]
      %v312 = vld [vmem:[%s247 + $0xb0] sm:$0xf]
      %v313 = vld [vmem:[%s247 + $0xb4] sm:$0xf]
      %v314 = vld [vmem:[%s247 + $0xb8] sm:$0xf]
      %v315 = vld [vmem:[%s247 + $0xbc] sm:$0xf]
      %v316 = vld [vmem:[%s247 + $0xc0] sm:$0xf]
      %v317 = vld [vmem:[%s247 + $0xc4] sm:$0xf]
      %v318 = vld [vmem:[%s247 + $0xc8] sm:$0xf]
      %v319 = vld [vmem:[%s247 + $0xcc] sm:$0xf]
      %v320 = vld [vmem:[%s247 + $0xd0] sm:$0xf]
      %v321 = vld [vmem:[%s247 + $0xd4] sm:$0xf]
      %v322 = vld [vmem:[%s247 + $0xd8] sm:$0xf]
      %v323 = vld [vmem:[%s247 + $0xdc] sm:$0xf]
      %v324 = vld [vmem:[%s247 + $0xe0] sm:$0xf]
      %v325 = vld [vmem:[%s247 + $0xe4] sm:$0xf]
      %v326 = vld [vmem:[%s247 + $0xe8] sm:$0xf]
      %v327 = vld [vmem:[%s247 + $0xec] sm:$0xf]
      %v328 = vld [vmem:[%s247 + $0xf0] sm:$0xf]
      %v329 = vld [vmem:[%s247 + $0xf4] sm:$0xf]
      %v330 = vld [vmem:[%s247 + $0xf8] sm:$0xf]
      %v331 = vld [vmem:[%s247 + $0xfc] sm:$0xf]
      %v334 = vunpack.c.l.b16 %v266
      %v335 = vunpack.c.h.b16 %v266
      %v336 = vunpack.c.l.b16 %v267
      %v337 = vunpack.c.h.b16 %v267
      %v338 = vpack.c.b16 %v334, %v334
      %v339 = vpack.c.b16 %v335, %v335
      %v340 = vpack.c.b16 %v336, %v336
      %v341 = vpack.c.b16 %v337, %v337
      %v410 = vunpack.c.l.b16 %v268
      %v411 = vunpack.c.l.b16 %v269
      %v412 = vunpack.c.l.b16 %v270
      %v413 = vunpack.c.l.b16 %v271
      %v414 = vunpack.c.l.b16 %v272
      %v415 = vunpack.c.l.b16 %v273
      %v416 = vunpack.c.l.b16 %v274
      %v417 = vunpack.c.l.b16 %v275
      %v418 = vunpack.c.l.b16 %v276
      %v419 = vunpack.c.l.b16 %v277
      %v420 = vunpack.c.l.b16 %v278
      %v421 = vunpack.c.l.b16 %v279
      %v422 = vunpack.c.l.b16 %v280
      %v423 = vunpack.c.l.b16 %v281
      %v424 = vunpack.c.l.b16 %v282
      %v425 = vunpack.c.l.b16 %v283
      %v426 = vunpack.c.l.b16 %v284
      %v427 = vunpack.c.l.b16 %v285
      %v428 = vunpack.c.l.b16 %v286
      %v429 = vunpack.c.l.b16 %v287
      %v430 = vunpack.c.l.b16 %v288
      %v431 = vunpack.c.l.b16 %v289
      %v432 = vunpack.c.l.b16 %v290
      %v433 = vunpack.c.l.b16 %v291
      %v434 = vunpack.c.l.b16 %v292
      %v435 = vunpack.c.l.b16 %v293
      %v436 = vunpack.c.l.b16 %v294
      %v437 = vunpack.c.l.b16 %v295
      %v438 = vunpack.c.l.b16 %v296
      %v439 = vunpack.c.l.b16 %v297
      %v440 = vunpack.c.l.b16 %v298
      %v441 = vunpack.c.l.b16 %v299
      %v442 = vunpack.c.l.b16 %v300
      %v443 = vunpack.c.l.b16 %v301
      %v444 = vunpack.c.l.b16 %v302
      %v445 = vunpack.c.l.b16 %v303
      %v446 = vunpack.c.l.b16 %v304
      %v447 = vunpack.c.l.b16 %v305
      %v448 = vunpack.c.l.b16 %v306
      %v449 = vunpack.c.l.b16 %v307
      %v450 = vunpack.c.l.b16 %v308
      %v451 = vunpack.c.l.b16 %v309
      %v452 = vunpack.c.l.b16 %v310
      %v453 = vunpack.c.l.b16 %v311
      %v454 = vunpack.c.l.b16 %v312
      %v455 = vunpack.c.l.b16 %v313
      %v456 = vunpack.c.l.b16 %v314
      %v457 = vunpack.c.l.b16 %v315
      %v458 = vunpack.c.l.b16 %v316
      %v459 = vunpack.c.l.b16 %v317
      %v460 = vunpack.c.l.b16 %v318
      %v461 = vunpack.c.l.b16 %v319
      %v462 = vunpack.c.l.b16 %v320
      %v463 = vunpack.c.l.b16 %v321
      %v464 = vunpack.c.l.b16 %v322
      %v465 = vunpack.c.l.b16 %v323
      %v466 = vunpack.c.l.b16 %v324
      %v467 = vunpack.c.l.b16 %v325
      %v468 = vunpack.c.l.b16 %v326
      %v469 = vunpack.c.l.b16 %v327
      %v470 = vunpack.c.l.b16 %v328
      %v471 = vunpack.c.l.b16 %v329
      %v472 = vunpack.c.l.b16 %v330
      %v473 = vunpack.c.l.b16 %v331
      %v474 = vpack.c.b16 %v411, %v410
      %v475 = vpack.c.b16 %v413, %v412
      %v476 = vpack.c.b16 %v415, %v414
      %v477 = vpack.c.b16 %v417, %v416
      %v478 = vpack.c.b16 %v419, %v418
      %v479 = vpack.c.b16 %v421, %v420
      %v480 = vpack.c.b16 %v423, %v422
      %v481 = vpack.c.b16 %v425, %v424
      %v482 = vpack.c.b16 %v427, %v426
      %v483 = vpack.c.b16 %v429, %v428
      %v484 = vpack.c.b16 %v431, %v430
      %v485 = vpack.c.b16 %v433, %v432
      %v486 = vpack.c.b16 %v435, %v434
      %v487 = vpack.c.b16 %v437, %v436
      %v488 = vpack.c.b16 %v439, %v438
      %v489 = vpack.c.b16 %v441, %v440
      %v490 = vpack.c.b16 %v443, %v442
      %v491 = vpack.c.b16 %v445, %v444
      %v492 = vpack.c.b16 %v447, %v446
      %v493 = vpack.c.b16 %v449, %v448
      %v494 = vpack.c.b16 %v451, %v450
      %v495 = vpack.c.b16 %v453, %v452
      %v496 = vpack.c.b16 %v455, %v454
      %v497 = vpack.c.b16 %v457, %v456
      %v498 = vpack.c.b16 %v459, %v458
      %v499 = vpack.c.b16 %v461, %v460
      %v500 = vpack.c.b16 %v463, %v462
      %v501 = vpack.c.b16 %v465, %v464
      %v502 = vpack.c.b16 %v467, %v466
      %v503 = vpack.c.b16 %v469, %v468
      %v504 = vpack.c.b16 %v471, %v470
      %v505 = vpack.c.b16 %v473, %v472
      %538 = vmatprep.subr.bf16.mxu0 0
      %539 = vmatpush1.bf16.msra.mxu0 %v474
      %540 = vmatprep.subr.bf16.mxu0 0
      %541 = vmatpush1.bf16.msra.mxu0 %v475
      %542 = vmatprep.subr.bf16.mxu0 0
      %543 = vmatpush1.bf16.msra.mxu0 %v476
      %544 = vmatprep.subr.bf16.mxu0 0
      %545 = vmatpush1.bf16.msra.mxu0 %v477
      %546 = vmatprep.subr.bf16.mxu0 0
      %547 = vmatpush1.bf16.msra.mxu0 %v478
      %548 = vmatprep.subr.bf16.mxu0 0
      %549 = vmatpush1.bf16.msra.mxu0 %v479
      %550 = vmatprep.subr.bf16.mxu0 0
      %551 = vmatpush1.bf16.msra.mxu0 %v480
      %552 = vmatprep.subr.bf16.mxu0 0
      %553 = vmatpush1.bf16.msra.mxu0 %v481
      %554 = vmatprep.subr.bf16.mxu0 0
      %555 = vmatpush1.bf16.msra.mxu0 %v482
      %556 = vmatprep.subr.bf16.mxu0 0
      %557 = vmatpush1.bf16.msra.mxu0 %v483
      %558 = vmatprep.subr.bf16.mxu0 0
      %559 = vmatpush1.bf16.msra.mxu0 %v484
      %560 = vmatprep.subr.bf16.mxu0 0
      %561 = vmatpush1.bf16.msra.mxu0 %v485
      %562 = vmatprep.subr.bf16.mxu0 0
      %563 = vmatpush1.bf16.msra.mxu0 %v486
      %564 = vmatprep.subr.bf16.mxu0 0
      %565 = vmatpush1.bf16.msra.mxu0 %v487
      %566 = vmatprep.subr.bf16.mxu0 0
      %567 = vmatpush1.bf16.msra.mxu0 %v488
      %568 = vmatprep.subr.bf16.mxu0 0
      %569 = vmatpush1.bf16.msra.mxu0 %v489
      %570 = vmatprep.mubr.bf16.mxu0 %v339
      %571 = vmatmul.mubr.bf16.gmra.mrb[0].mxu0 %v338
      %v572 = vpop.f32.mrb[0].mxu0
      %v573 = vadd.f32 0.0, %v572
      %v574 = vpop.f32.mrb[0].mxu0
      %v575 = vpop.f32.mrb[0].mxu0
      %v576 = vpop.f32.mrb[0].mxu0
      %577 = vdwg.mxu0
      %578 = vmatprep.subr.bf16.mxu0 0
      %579 = vmatpush1.bf16.msra.mxu0 %v490
      %580 = vmatprep.subr.bf16.mxu0 0
      %581 = vmatpush1.bf16.msra.mxu0 %v491
      %582 = vmatprep.subr.bf16.mxu0 0
      %583 = vmatpush1.bf16.msra.mxu0 %v492
      %584 = vmatprep.subr.bf16.mxu0 0
      %585 = vmatpush1.bf16.msra.mxu0 %v493
      %586 = vmatprep.subr.bf16.mxu0 0
      %587 = vmatpush1.bf16.msra.mxu0 %v494
      %588 = vmatprep.subr.bf16.mxu0 0
      %589 = vmatpush1.bf16.msra.mxu0 %v495
      %590 = vmatprep.subr.bf16.mxu0 0
      %591 = vmatpush1.bf16.msra.mxu0 %v496
      %592 = vmatprep.subr.bf16.mxu0 0
      %593 = vmatpush1.bf16.msra.mxu0 %v497
      %594 = vmatprep.subr.bf16.mxu0 0
      %595 = vmatpush1.bf16.msra.mxu0 %v498
      %596 = vmatprep.subr.bf16.mxu0 0
      %597 = vmatpush1.bf16.msra.mxu0 %v499
      %598 = vmatprep.subr.bf16.mxu0 0
      %599 = vmatpush1.bf16.msra.mxu0 %v500
      %600 = vmatprep.subr.bf16.mxu0 0
      %601 = vmatpush1.bf16.msra.mxu0 %v501
      %602 = vmatprep.subr.bf16.mxu0 0
      %603 = vmatpush1.bf16.msra.mxu0 %v502
      %604 = vmatprep.subr.bf16.mxu0 0
      %605 = vmatpush1.bf16.msra.mxu0 %v503
      %606 = vmatprep.subr.bf16.mxu0 0
      %607 = vmatpush1.bf16.msra.mxu0 %v504
      %608 = vmatprep.subr.bf16.mxu0 0
      %609 = vmatpush1.bf16.msra.mxu0 %v505
      %610 = vmatprep.mubr.bf16.mxu0 %v341
      %611 = vmatmul.mubr.bf16.gmra.mrb[0].mxu0 %v340
      %v612 = vpop.f32.mrb[0].mxu0
      %v613 = vadd.f32 %v573, %v612
      %v614 = vpop.f32.mrb[0].mxu0
      %v615 = vpop.f32.mrb[0].mxu0
      %v616 = vpop.f32.mrb[0].mxu0
      %617 = vdwg.mxu0
      %v618 = vadd.f32 %v265, %v613
      %619 = vst [vmem:[#allocation2] sm:$0xff] %v618
      %p620 = scmp.eq.s32.totalorder %s21, 1
      // Predicated region
      $region37: #{nlayer_discriminator_forward.21} parent=31 // pred_check
        %p621 = pneg %p620
      $region38: #{nlayer_discriminator_forward.21} parent=31 // pred_check_branch
        %623 = sbr.rel (%p621) target = $region40
      $region39: #{nlayer_discriminator_forward.21} parent=31 // pred_region
        %v624 = vld [vmem:[#allocation2] sm:$0xff]
        %v625 = vld [vmem:[%s251] sm:$0x1]
        %v627 = vlaneseq
        %v628 = vshrl.u32 %v627, 7
        %v629 = vsub.s32 0, %v628
        %v630 = vrot.slane %v625, %v629
        %v632 = vadd.f32 %v624, %v630
        %633 = vst [vmem:[%s258] sm:$0xff] %v632
      $region40: #{nlayer_discriminator_forward.21} parent=31 // pred_fallthru
        _
      %p634 = scmp.lt.s32.totalorder %s19, 0
      %s635 = scalar_select %p634, %s19, 0
      %p636 = scmp.lt.s32.totalorder %s20, 0
      %s637 = scalar_select %p636, %s20, 0
      %s638 = sadd.s32 %s637, %s635
      %s639 = smul.addr %s638, 8
      %s640 = scalar_lea.vmem %s3, %s639
      // Predicated region
      $region41: #{nlayer_discriminator_forward.21} parent=31 // pred_check
        %p641 = pneg %p135
      $region42: #{nlayer_discriminator_forward.21} parent=31 // pred_check_branch
        %643 = sbr.rel (%p641) target = $region44
      $region43: #{nlayer_discriminator_forward.21} parent=31 // pred_region
        _
      $region44: #{nlayer_discriminator_forward.21} parent=31 // pred_fallthru
        _
      // Predicated region
      $region45: #{nlayer_discriminator_forward.21} parent=31 // pred_check
        %p644 = pneg %p135
      $region46: #{nlayer_discriminator_forward.21} parent=31 // pred_check_branch
        %646 = sbr.rel (%p644) target = $region48
      $region47: #{nlayer_discriminator_forward.21} parent=31 // pred_region
        %p647 = scmp.lt.s32.totalorder %s19, 0
        %s648 = scalar_select %p647, %s19, 0
        %p649 = scmp.lt.s32.totalorder %s20, 0
        %s650 = scalar_select %p649, %s20, 0
        %s651 = sadd.s32 %s650, %s648
        %s652 = smul.addr %s651, 8
        %s653 = scalar_lea.vmem %s3, %s652
      $region48: #{nlayer_discriminator_forward.21} parent=31 // pred_fallthru
        _
    $region32: #{nlayer_discriminator_forward.21} parent=5 // pred_fallthru
      _
    %p654 = scmp.le.s32.totalorder 2, %s9
    // Predicated region
    $region49: #{nlayer_discriminator_forward.21} parent=5 // pred_check
      %p655 = pneg %p654
    $region50: #{nlayer_discriminator_forward.21} parent=5 // pred_check_branch
      %657 = sbr.rel (%p655) target = $region52
    $region51: #{nlayer_discriminator_forward.21} parent=5 // pred_region
      %s658 = ssub.s32 %s9, 2
    $region52: #{nlayer_discriminator_forward.21} parent=5 // pred_fallthru
      _
  $region6: #{nlayer_discriminator_forward.21} parent=0 // loop_footer
    %s13 = sadd.s32 1, %s9
  $region7: #{nlayer_discriminator_forward.21} parent=0 // loop_footer_branch
    %8 = sbr.rel target = $region3
  $region8: #{nlayer_discriminator_forward.21} parent=0 // loop_exit
    _

</llo_original>
